<compile_context>
chip_gen: v7x
topology: tpu7x:2x2x1
jax: 0.10.0
libtpu: 0.0.40
codegen_flags: <defaults>
</compile_context>

<pallas_src>
import functools

import jax
import jax.numpy as jnp
import numpy as np
from jax import lax
from jax.experimental import pallas as pl
from jax.experimental.pallas import tpu as pltpu


def _round_up(x, m):
    return (x + m - 1) // m * m


def _choose_tiling(B_pad, T, D, H_pad, w_itemsize, vmem_budget):
    """Pick (batch_block BB, time_chunk K) under a v7x-safe VMEM budget."""
    # Batch block: fill MXU rows, but keep >= 2 batch blocks whenever B_pad >= 16 so the
    # second TensorCore (v7x / megacore) gets an independent shard of the parallel axis.
    BB = min(B_pad, 256)
    if B_pad >= 16:
        BB = min(BB, _round_up(B_pad // 2, 8))
    while B_pad % BB != 0:
        BB -= 8
    # Time chunk: amortize ~0.35us/grid-step overhead (and the tiny x-slab DMA) over as many
    # timesteps as the VMEM budget allows, capped at 64.
    fixed = (D + H_pad) * 4 * H_pad * w_itemsize      # resident W_ih^T + W_hh^T
    fixed += 2 * 4 * H_pad * 4                        # bias
    fixed += 2 * BB * H_pad * 4                       # h, c scratch
    fixed += 2 * BB * H_pad * 4                       # output (double-buffered)
    per_k = BB * 4 * H_pad * 4                        # chunk gate pre-activation scratch
    per_k += 2 * BB * D * 4                           # x slab (double-buffered)
    K = int(max(1, min(T, 64, (vmem_budget - fixed) // per_k)))
    return BB, K


def _lstm_chunk_kernel(x_ref, wih_ref, bias_ref, whh_ref, hlast_ref,
                       gates_scr, h_scr, c_scr, *,
                       seq_len, chunk, batch_block, needs_mask, unroll):
    """One grid step: advance (h, c) over `chunk` timesteps for one batch block.

    x_ref     : (K*BB, D)            raw inputs, row k*BB + b is (timestep t0+k, batch row b)
    wih_ref   : (D, 4*H_pad)         gate-padded input weights (resident, const block index)
    bias_ref  : (1, 4*H_pad) f32     b_ih + b_hh, gate-padded
    whh_ref   : (H_pad, 4*H_pad)     gate-padded recurrent weights (resident)
    hlast_ref : (BB, H_pad)  f32     hidden state after the final timestep
    gates_scr : (K*BB, 4*H_pad) f32  chunk gate pre-activations (input part)
    h_scr/c_scr : (BB, H_pad) f32    recurrent state, persists across the time grid axis
    """
    tc = pl.program_id(1)
    K, BB = chunk, batch_block
    Hp = h_scr.shape[-1]

    @pl.when(tc == 0)
    def _():
        h_scr[...] = jnp.zeros_like(h_scr)
        c_scr[...] = jnp.zeros_like(c_scr)

    wih = wih_ref[...]
    whh = whh_ref[...]

    # Fused input projection for the whole chunk: one big MXU call, no serial dependency.
    xproj = jnp.dot(x_ref[...].astype(wih.dtype), wih,
                    preferred_element_type=jnp.float32)
    gates_scr[...] = xproj + bias_ref[...]

    t0 = tc * K

    def sig(z):
        # sigmoid(z) == 0.5*tanh(0.5*z)+0.5 : one EUP push instead of exp + reciprocal
        return 0.5 * jnp.tanh(0.5 * z) + 0.5

    def step(k, carry):
        h, c = carry
        row = pl.multiple_of(k * BB, BB)
        gates = gates_scr[pl.ds(row, BB), :] + jnp.dot(
            h.astype(whh.dtype), whh, preferred_element_type=jnp.float32)
        # Hp multiple of 128 -> each gate slice is a whole lane-aligned vreg tile.
        i_g = sig(gates[:, 0 * Hp:1 * Hp])
        f_g = sig(gates[:, 1 * Hp:2 * Hp])
        g_g = jnp.tanh(gates[:, 2 * Hp:3 * Hp])
        o_g = sig(gates[:, 3 * Hp:4 * Hp])
        c_new = f_g * c + i_g * g_g
        h_new = o_g * jnp.tanh(c_new)
        if needs_mask:  # trace-time constant: only the last chunk of a ragged T needs it
            valid = (t0 + k) < seq_len
            h_new = jnp.where(valid, h_new, h)
            c_new = jnp.where(valid, c_new, c)
        return h_new, c_new

    h, c = lax.fori_loop(0, K, step, (h_scr[...], c_scr[...]), unroll=unroll)
    h_scr[...] = h
    c_scr[...] = c

    @pl.when(tc == pl.num_programs(1) - 1)
    def _():
        hlast_ref[...] = h.astype(hlast_ref.dtype)


def lstm_classifier_forward(x, params, *, compute_dtype=jnp.bfloat16,
                            vmem_budget_bytes=44 * 2**20):
    """Forward of LSTMClassifier (eval mode). x: (B, T, D) float32, batch_first.

    compute_dtype is the MXU operand dtype for W_ih / W_hh / h (default bf16: halves resident
    weight VMEM and doubles MXU rate on every generation; accumulation and gate math stay f32).
    Pass jnp.float32 for a near-exact f32 recurrence.
    """
    w_ih, w_hh, b_ih, b_hh, w_fc, b_fc = (
        params["w_ih"], params["w_hh"], params["b_ih"],
        params["b_hh"], params["w_fc"], params["b_fc"])
    B, T, D = x.shape
    H = w_hh.shape[1]
    f32 = jnp.float32

    B_pad = _round_up(B, 8)       # f32 sublane width
    H_pad = _round_up(H, 128)     # lane width -> lane-aligned gate tiles

    w_itemsize = jnp.dtype(compute_dtype).itemsize
    BB, K = _choose_tiling(B_pad, T, D, H_pad, w_itemsize, vmem_budget_bytes)
    n_b = B_pad // BB
    n_t = pl.cdiv(T, K)
    T_pad = n_t * K
    needs_mask = (T_pad != T)
    unroll = int(min(K, 8 if BB >= 128 else 16))

    # ---- gate-padded weights / bias (column g*H_pad + h <-> PyTorch gate g in (i,f,g,o)) ----
    wih_t = jnp.pad(w_ih.T.reshape(D, 4, H), ((0, 0), (0, 0), (0, H_pad - H)))
    wih_t = wih_t.reshape(D, 4 * H_pad).astype(compute_dtype)
    whh_t = jnp.pad(w_hh.T.reshape(H, 4, H),
                    ((0, H_pad - H), (0, 0), (0, H_pad - H)))
    whh_t = whh_t.reshape(H_pad, 4 * H_pad).astype(compute_dtype)
    bias = jnp.pad((b_ih + b_hh).reshape(4, H), ((0, 0), (0, H_pad - H)))
    bias = bias.reshape(1, 4 * H_pad).astype(f32)

    # ---- x re-layout (small tensor, B*T*D): time-major, chunk/batch-blocked, zero-padded ----
    x_tm = jnp.transpose(x.astype(f32), (1, 0, 2))                    # (T, B, D)
    x_tm = jnp.pad(x_tm, ((0, T_pad - T), (0, B_pad - B), (0, 0)))    # (T_pad, B_pad, D)
    x_blk = x_tm.reshape(n_t, K, n_b, BB, D).transpose(0, 2, 1, 3, 4)
    x_blk = x_blk.reshape(n_t, n_b, K * BB, D)

    est_vmem = (2 * K * BB * D * 4
                + 2 * (D + H_pad) * 4 * H_pad * w_itemsize
                + K * BB * 4 * H_pad * 4
                + 4 * BB * H_pad * 4
                + 2 * 4 * H_pad * 4)
    vmem_limit = int(min(60 * 2**20, max(32 * 2**20, 2 * est_vmem)))

    kernel = functools.partial(
        _lstm_chunk_kernel, seq_len=T, chunk=K, batch_block=BB,
        needs_mask=needs_mask, unroll=unroll)

    def run(single_buffer_weights):
        def w_spec(shape):
            if single_buffer_weights:
                # Constant block index -> never re-fetched; one VMEM buffer is enough.
                return pl.BlockSpec(shape, lambda b, t: (0, 0),
                                    pipeline_mode=pl.Buffered(1))
            return pl.BlockSpec(shape, lambda b, t: (0, 0))

        grid_spec = pltpu.PrefetchScalarGridSpec(
            num_scalar_prefetch=0,
            grid=(n_b, n_t),                                   # (parallel batch, serial time)
            in_specs=[
                pl.BlockSpec((None, None, K * BB, D), lambda b, t: (t, b, 0, 0)),  # x slab
                w_spec((D, 4 * H_pad)),                        # W_ih^T (resident)
                pl.BlockSpec((1, 4 * H_pad), lambda b, t: (0, 0)),                 # bias
                w_spec((H_pad, 4 * H_pad)),                    # W_hh^T (resident)
            ],
            out_specs=pl.BlockSpec((BB, H_pad), lambda b, t: (b, 0)),
            scratch_shapes=[
                pltpu.VMEM((K * BB, 4 * H_pad), f32),          # chunk gate pre-activations
                pltpu.VMEM((BB, H_pad), f32),                  # h
                pltpu.VMEM((BB, H_pad), f32),                  # c
            ],
        )
        return pl.pallas_call(
            kernel,
            out_shape=jax.ShapeDtypeStruct((B_pad, H_pad), f32),
            grid_spec=grid_spec,
            compiler_params=pltpu.CompilerParams(
                dimension_semantics=("parallel", "arbitrary"),
                vmem_limit_bytes=vmem_limit),
        )(x_blk, wih_t, bias, whh_t)

    try:
        h_last = run(True)
    except Exception:
        # Portability fallback: JAX builds without BlockSpec(pipeline_mode=pl.Buffered(1)).
        h_last = run(False)

    # out[:, -1, :] -> Dropout (eval identity) -> fc ; tiny (num_class), XLA fuses it.
    # TODO(synk): training-mode dropout RNG not implemented (eval-mode identity only).
    h_last = h_last[:B, :H]
    return h_last @ w_fc.T.astype(f32) + b_fc.astype(f32)


def reference_forward(x, params):
    """Pure-JAX reference of the PyTorch forward (eval mode)."""
    w_ih, w_hh, b_ih, b_hh, w_fc, b_fc = (
        params["w_ih"], params["w_hh"], params["b_ih"],
        params["b_hh"], params["w_fc"], params["b_fc"])
    B, T, D = x.shape
    H = w_hh.shape[1]

    def step(carry, x_t):
        h, c = carry
        gates = x_t @ w_ih.T + h @ w_hh.T + b_ih + b_hh
        i = jax.nn.sigmoid(gates[:, 0:H])
        f = jax.nn.sigmoid(gates[:, H:2 * H])
        g = jnp.tanh(gates[:, 2 * H:3 * H])
        o = jax.nn.sigmoid(gates[:, 3 * H:4 * H])
        c = f * c + i * g
        h = o * jnp.tanh(c)
        return (h, c), h

    h0 = jnp.zeros((B, H), jnp.float32)
    c0 = jnp.zeros((B, H), jnp.float32)
    (h_last, _), _ = lax.scan(step, (h0, c0), jnp.transpose(x, (1, 0, 2)))
    return h_last @ w_fc.T + b_fc


def init_params(key, input_dim, hidden_dim, num_class):
    """Deterministic init matching PyTorch LSTM/Linear shapes (U(-1/sqrt(H), 1/sqrt(H)))."""
    ks = jax.random.split(key, 6)
    k_lstm = 1.0 / np.sqrt(hidden_dim)
    k_fc = 1.0 / np.sqrt(hidden_dim)
    u = lambda k, shape, scale: jax.random.uniform(
        k, shape, jnp.float32, minval=-scale, maxval=scale)
    return {
        "w_ih": u(ks[0], (4 * hidden_dim, input_dim), k_lstm),
        "w_hh": u(ks[1], (4 * hidden_dim, hidden_dim), k_lstm),
        "b_ih": u(ks[2], (4 * hidden_dim,), k_lstm),
        "b_hh": u(ks[3], (4 * hidden_dim,), k_lstm),
        "w_fc": u(ks[4], (num_class, hidden_dim), k_fc),
        "b_fc": u(ks[5], (num_class,), k_fc),
    }


if __name__ == "__main__":
    B, T, D, H, C = 2, 8, 16, 32, 4

    key = jax.random.PRNGKey(0)
    kx, kp = jax.random.split(key)
    x = jax.random.normal(kx, (B, T, D), jnp.float32)
    params = init_params(kp, D, H, C)

    # f32 recurrence for the strict reference check (bf16 weights are the production default).
    out = jax.block_until_ready(
        lstm_classifier_forward(x, params, compute_dtype=jnp.float32))
    ref = jax.block_until_ready(reference_forward(x, params))

    # Tolerance covers MXU multi-pass f32 vs XLA default-precision matmul differences;
    # any structural bug (gate order / layout / padding) is orders of magnitude larger.
    np.testing.assert_allclose(np.asarray(out), np.asarray(ref),
                               rtol=1e-2, atol=1e-2)
    print("KERNEL_OK")
</pallas_src>

<mosaic_0001>
module attributes {stable_mosaic.version = 11 : i64} {
  func.func @_lstm_chunk_kernel(%arg0: i32, %arg1: i32, %arg2: memref<1x1x64x16xf32, #tpu.memory_space<vmem>>, %arg3: memref<16x512xf32, #tpu.memory_space<vmem>>, %arg4: memref<1x512xf32, #tpu.memory_space<vmem>>, %arg5: memref<128x512xf32, #tpu.memory_space<vmem>>, %arg6: memref<8x128xf32, #tpu.memory_space<vmem>>, %arg7: memref<64x512xf32, #tpu.memory_space<vmem>>, %arg8: memref<8x128xf32, #tpu.memory_space<vmem>>, %arg9: memref<8x128xf32, #tpu.memory_space<vmem>>) attributes {dimension_semantics = [#tpu.dimension_semantics<parallel>, #tpu.dimension_semantics<arbitrary>], iteration_bounds = array<i64: 1, 1>, scalar_prefetch = 0 : i64, scratch_operands = 3 : i64, tpu.core_type = #tpu.core_type<tc>, window_params = [{transform_indices = @transform_0, window_bounds = array<i64: 1, 1, 64, 16>}, {pipeline_mode = #tpu.pipeline_mode<synchronous>, transform_indices = @transform_1, window_bounds = array<i64: 16, 512>}, {pipeline_mode = #tpu.pipeline_mode<synchronous>, transform_indices = @transform_2, window_bounds = array<i64: 1, 512>}, {pipeline_mode = #tpu.pipeline_mode<synchronous>, transform_indices = @transform_3, window_bounds = array<i64: 128, 512>}, {transform_indices = @transform_4, window_bounds = array<i64: 8, 128>}]} {
    %c0_i32 = arith.constant 0 : i32
    %0 = arith.cmpi eq, %arg1, %c0_i32 : i32
    %1 = arith.extui %0 : i1 to i32
    %c0_i32_0 = arith.constant 0 : i32
    %2 = arith.cmpi ne, %1, %c0_i32_0 : i32
    scf.if %2 {
      %cst_119 = arith.constant 0.000000e+00 : f32
      %315 = vector.broadcast %cst_119 : f32 to vector<8x128xf32>
      %c0_120 = arith.constant 0 : index
      %c0_121 = arith.constant 0 : index
      %316 = vector.load %arg8[%c0_120, %c0_121] : memref<8x128xf32, #tpu.memory_space<vmem>>, vector<8x128xf32>
      tpu.vector_store %arg8[%c0_120, %c0_121], %315 {strides = array<i32>} : memref<8x128xf32, #tpu.memory_space<vmem>>, vector<8x128xf32>,
      %cst_122 = arith.constant 0.000000e+00 : f32
      %317 = vector.broadcast %cst_122 : f32 to vector<8x128xf32>
      %c0_123 = arith.constant 0 : index
      %c0_124 = arith.constant 0 : index
      %318 = vector.load %arg9[%c0_123, %c0_124] : memref<8x128xf32, #tpu.memory_space<vmem>>, vector<8x128xf32>
      tpu.vector_store %arg9[%c0_123, %c0_124], %317 {strides = array<i32>} : memref<8x128xf32, #tpu.memory_space<vmem>>, vector<8x128xf32>,
    } else {
    }
    %c0 = arith.constant 0 : index
    %c0_1 = arith.constant 0 : index
    %3 = vector.load %arg3[%c0, %c0_1] : memref<16x512xf32, #tpu.memory_space<vmem>>, vector<16x512xf32>
    %c0_2 = arith.constant 0 : index
    %c0_3 = arith.constant 0 : index
    %4 = vector.load %arg5[%c0_2, %c0_3] : memref<128x512xf32, #tpu.memory_space<vmem>>, vector<128x512xf32>
    %c0_4 = arith.constant 0 : index
    %c0_5 = arith.constant 0 : index
    %c0_6 = arith.constant 0 : index
    %c0_7 = arith.constant 0 : index
    %5 = vector.load %arg2[%c0_4, %c0_5, %c0_6, %c0_7] : memref<1x1x64x16xf32, #tpu.memory_space<vmem>>, vector<1x1x64x16xf32>
    %6 = vector.shape_cast %5 : vector<1x1x64x16xf32> to vector<64x16xf32>
    %cst = arith.constant dense<0.000000e+00> : vector<64x512xf32>
    %7 = tpu.matmul %6, %3, %cst {dimension_numbers = #tpu.dot_dimension_numbers<[1], [0], [0], [1], [0, 0, 1, 1], [], []>} : vector<64x16xf32>, vector<16x512xf32>, vector<64x512xf32> -> vector<64x512xf32>
    %c0_8 = arith.constant 0 : index
    %c0_9 = arith.constant 0 : index
    %8 = vector.load %arg4[%c0_8, %c0_9] : memref<1x512xf32, #tpu.memory_space<vmem>>, vector<1x512xf32>
    %9 = vector.broadcast %8 : vector<1x512xf32> to vector<64x512xf32>
    %10 = arith.addf %7, %9 : vector<64x512xf32>
    %c0_10 = arith.constant 0 : index
    %c0_11 = arith.constant 0 : index
    %11 = vector.load %arg7[%c0_10, %c0_11] : memref<64x512xf32, #tpu.memory_space<vmem>>, vector<64x512xf32>
    tpu.vector_store %arg7[%c0_10, %c0_11], %10 {strides = array<i32>} : memref<64x512xf32, #tpu.memory_space<vmem>>, vector<64x512xf32>,
    %c0_12 = arith.constant 0 : index
    %c0_13 = arith.constant 0 : index
    %12 = vector.load %arg8[%c0_12, %c0_13] : memref<8x128xf32, #tpu.memory_space<vmem>>, vector<8x128xf32>
    %c0_14 = arith.constant 0 : index
    %c0_15 = arith.constant 0 : index
    %13 = vector.load %arg9[%c0_14, %c0_15] : memref<8x128xf32, #tpu.memory_space<vmem>>, vector<8x128xf32>
    %c0_i32_16 = arith.constant 0 : i32
    %c8_i32 = arith.constant 8 : i32
    %14 = arith.muli %c0_i32_16, %c8_i32 : i32
    %15 = tpu.assume_multiple %14, 8 : i32
    %16 = arith.index_cast %15 : i32 to index
    %c0_17 = arith.constant 0 : index
    %17 = vector.load %arg7[%16, %c0_17] : memref<64x512xf32, #tpu.memory_space<vmem>>, vector<8x512xf32>
    %cst_18 = arith.constant dense<0.000000e+00> : vector<8x512xf32>
    %18 = tpu.matmul %12, %4, %cst_18 {dimension_numbers = #tpu.dot_dimension_numbers<[1], [0], [0], [1], [0, 0, 1, 1], [], []>} : vector<8x128xf32>, vector<128x512xf32>, vector<8x512xf32> -> vector<8x512xf32>
    %19 = arith.addf %17, %18 : vector<8x512xf32>
    %20 = vector.extract_strided_slice %19 {offsets = [0, 0], sizes = [8, 128], strides = [1, 1]} : vector<8x512xf32> to vector<8x128xf32>
    %cst_19 = arith.constant 5.000000e-01 : f32
    %21 = vector.broadcast %cst_19 : f32 to vector<8x128xf32>
    %22 = arith.mulf %21, %20 : vector<8x128xf32>
    %23 = math.tanh %22 : vector<8x128xf32>
    %cst_20 = arith.constant 5.000000e-01 : f32
    %24 = vector.broadcast %cst_20 : f32 to vector<8x128xf32>
    %25 = arith.mulf %24, %23 : vector<8x128xf32>
    %cst_21 = arith.constant 5.000000e-01 : f32
    %26 = vector.broadcast %cst_21 : f32 to vector<8x128xf32>
    %27 = arith.addf %25, %26 : vector<8x128xf32>
    %28 = vector.extract_strided_slice %19 {offsets = [0, 128], sizes = [8, 128], strides = [1, 1]} : vector<8x512xf32> to vector<8x128xf32>
    %cst_22 = arith.constant 5.000000e-01 : f32
    %29 = vector.broadcast %cst_22 : f32 to vector<8x128xf32>
    %30 = arith.mulf %29, %28 : vector<8x128xf32>
    %31 = math.tanh %30 : vector<8x128xf32>
    %cst_23 = arith.constant 5.000000e-01 : f32
    %32 = vector.broadcast %cst_23 : f32 to vector<8x128xf32>
    %33 = arith.mulf %32, %31 : vector<8x128xf32>
    %cst_24 = arith.constant 5.000000e-01 : f32
    %34 = vector.broadcast %cst_24 : f32 to vector<8x128xf32>
    %35 = arith.addf %33, %34 : vector<8x128xf32>
    %36 = vector.extract_strided_slice %19 {offsets = [0, 256], sizes = [8, 128], strides = [1, 1]} : vector<8x512xf32> to vector<8x128xf32>
    %37 = math.tanh %36 : vector<8x128xf32>
    %38 = vector.extract_strided_slice %19 {offsets = [0, 384], sizes = [8, 128], strides = [1, 1]} : vector<8x512xf32> to vector<8x128xf32>
    %cst_25 = arith.constant 5.000000e-01 : f32
    %39 = vector.broadcast %cst_25 : f32 to vector<8x128xf32>
    %40 = arith.mulf %39, %38 : vector<8x128xf32>
    %41 = math.tanh %40 : vector<8x128xf32>
    %cst_26 = arith.constant 5.000000e-01 : f32
    %42 = vector.broadcast %cst_26 : f32 to vector<8x128xf32>
    %43 = arith.mulf %42, %41 : vector<8x128xf32>
    %cst_27 = arith.constant 5.000000e-01 : f32
    %44 = vector.broadcast %cst_27 : f32 to vector<8x128xf32>
    %45 = arith.addf %43, %44 : vector<8x128xf32>
    %46 = arith.mulf %35, %13 : vector<8x128xf32>
    %47 = arith.mulf %27, %37 : vector<8x128xf32>
    %48 = arith.addf %46, %47 : vector<8x128xf32>
    %49 = math.tanh %48 : vector<8x128xf32>
    %50 = arith.mulf %45, %49 : vector<8x128xf32>
    %c1_i32 = arith.constant 1 : i32
    %c8_i32_28 = arith.constant 8 : i32
    %51 = arith.muli %c1_i32, %c8_i32_28 : i32
    %52 = tpu.assume_multiple %51, 8 : i32
    %53 = arith.index_cast %52 : i32 to index
    %c0_29 = arith.constant 0 : index
    %54 = vector.load %arg7[%53, %c0_29] : memref<64x512xf32, #tpu.memory_space<vmem>>, vector<8x512xf32>
    %cst_30 = arith.constant dense<0.000000e+00> : vector<8x512xf32>
    %55 = tpu.matmul %50, %4, %cst_30 {dimension_numbers = #tpu.dot_dimension_numbers<[1], [0], [0], [1], [0, 0, 1, 1], [], []>} : vector<8x128xf32>, vector<128x512xf32>, vector<8x512xf32> -> vector<8x512xf32>
    %56 = arith.addf %54, %55 : vector<8x512xf32>
    %57 = vector.extract_strided_slice %56 {offsets = [0, 0], sizes = [8, 128], strides = [1, 1]} : vector<8x512xf32> to vector<8x128xf32>
    %cst_31 = arith.constant 5.000000e-01 : f32
    %58 = vector.broadcast %cst_31 : f32 to vector<8x128xf32>
    %59 = arith.mulf %58, %57 : vector<8x128xf32>
    %60 = math.tanh %59 : vector<8x128xf32>
    %cst_32 = arith.constant 5.000000e-01 : f32
    %61 = vector.broadcast %cst_32 : f32 to vector<8x128xf32>
    %62 = arith.mulf %61, %60 : vector<8x128xf32>
    %cst_33 = arith.constant 5.000000e-01 : f32
    %63 = vector.broadcast %cst_33 : f32 to vector<8x128xf32>
    %64 = arith.addf %62, %63 : vector<8x128xf32>
    %65 = vector.extract_strided_slice %56 {offsets = [0, 128], sizes = [8, 128], strides = [1, 1]} : vector<8x512xf32> to vector<8x128xf32>
    %cst_34 = arith.constant 5.000000e-01 : f32
    %66 = vector.broadcast %cst_34 : f32 to vector<8x128xf32>
    %67 = arith.mulf %66, %65 : vector<8x128xf32>
    %68 = math.tanh %67 : vector<8x128xf32>
    %cst_35 = arith.constant 5.000000e-01 : f32
    %69 = vector.broadcast %cst_35 : f32 to vector<8x128xf32>
    %70 = arith.mulf %69, %68 : vector<8x128xf32>
    %cst_36 = arith.constant 5.000000e-01 : f32
    %71 = vector.broadcast %cst_36 : f32 to vector<8x128xf32>
    %72 = arith.addf %70, %71 : vector<8x128xf32>
    %73 = vector.extract_strided_slice %56 {offsets = [0, 256], sizes = [8, 128], strides = [1, 1]} : vector<8x512xf32> to vector<8x128xf32>
    %74 = math.tanh %73 : vector<8x128xf32>
    %75 = vector.extract_strided_slice %56 {offsets = [0, 384], sizes = [8, 128], strides = [1, 1]} : vector<8x512xf32> to vector<8x128xf32>
    %cst_37 = arith.constant 5.000000e-01 : f32
    %76 = vector.broadcast %cst_37 : f32 to vector<8x128xf32>
    %77 = arith.mulf %76, %75 : vector<8x128xf32>
    %78 = math.tanh %77 : vector<8x128xf32>
    %cst_38 = arith.constant 5.000000e-01 : f32
    %79 = vector.broadcast %cst_38 : f32 to vector<8x128xf32>
    %80 = arith.mulf %79, %78 : vector<8x128xf32>
    %cst_39 = arith.constant 5.000000e-01 : f32
    %81 = vector.broadcast %cst_39 : f32 to vector<8x128xf32>
    %82 = arith.addf %80, %81 : vector<8x128xf32>
    %83 = arith.mulf %72, %48 : vector<8x128xf32>
    %84 = arith.mulf %64, %74 : vector<8x128xf32>
    %85 = arith.addf %83, %84 : vector<8x128xf32>
    %86 = math.tanh %85 : vector<8x128xf32>
    %87 = arith.mulf %82, %86 : vector<8x128xf32>
    %c2_i32 = arith.constant 2 : i32
    %c8_i32_40 = arith.constant 8 : i32
    %88 = arith.muli %c2_i32, %c8_i32_40 : i32
    %89 = tpu.assume_multiple %88, 8 : i32
    %90 = arith.index_cast %89 : i32 to index
    %c0_41 = arith.constant 0 : index
    %91 = vector.load %arg7[%90, %c0_41] : memref<64x512xf32, #tpu.memory_space<vmem>>, vector<8x512xf32>
    %cst_42 = arith.constant dense<0.000000e+00> : vector<8x512xf32>
    %92 = tpu.matmul %87, %4, %cst_42 {dimension_numbers = #tpu.dot_dimension_numbers<[1], [0], [0], [1], [0, 0, 1, 1], [], []>} : vector<8x128xf32>, vector<128x512xf32>, vector<8x512xf32> -> vector<8x512xf32>
    %93 = arith.addf %91, %92 : vector<8x512xf32>
    %94 = vector.extract_strided_slice %93 {offsets = [0, 0], sizes = [8, 128], strides = [1, 1]} : vector<8x512xf32> to vector<8x128xf32>
    %cst_43 = arith.constant 5.000000e-01 : f32
    %95 = vector.broadcast %cst_43 : f32 to vector<8x128xf32>
    %96 = arith.mulf %95, %94 : vector<8x128xf32>
    %97 = math.tanh %96 : vector<8x128xf32>
    %cst_44 = arith.constant 5.000000e-01 : f32
    %98 = vector.broadcast %cst_44 : f32 to vector<8x128xf32>
    %99 = arith.mulf %98, %97 : vector<8x128xf32>
    %cst_45 = arith.constant 5.000000e-01 : f32
    %100 = vector.broadcast %cst_45 : f32 to vector<8x128xf32>
    %101 = arith.addf %99, %100 : vector<8x128xf32>
    %102 = vector.extract_strided_slice %93 {offsets = [0, 128], sizes = [8, 128], strides = [1, 1]} : vector<8x512xf32> to vector<8x128xf32>
    %cst_46 = arith.constant 5.000000e-01 : f32
    %103 = vector.broadcast %cst_46 : f32 to vector<8x128xf32>
    %104 = arith.mulf %103, %102 : vector<8x128xf32>
    %105 = math.tanh %104 : vector<8x128xf32>
    %cst_47 = arith.constant 5.000000e-01 : f32
    %106 = vector.broadcast %cst_47 : f32 to vector<8x128xf32>
    %107 = arith.mulf %106, %105 : vector<8x128xf32>
    %cst_48 = arith.constant 5.000000e-01 : f32
    %108 = vector.broadcast %cst_48 : f32 to vector<8x128xf32>
    %109 = arith.addf %107, %108 : vector<8x128xf32>
    %110 = vector.extract_strided_slice %93 {offsets = [0, 256], sizes = [8, 128], strides = [1, 1]} : vector<8x512xf32> to vector<8x128xf32>
    %111 = math.tanh %110 : vector<8x128xf32>
    %112 = vector.extract_strided_slice %93 {offsets = [0, 384], sizes = [8, 128], strides = [1, 1]} : vector<8x512xf32> to vector<8x128xf32>
    %cst_49 = arith.constant 5.000000e-01 : f32
    %113 = vector.broadcast %cst_49 : f32 to vector<8x128xf32>
    %114 = arith.mulf %113, %112 : vector<8x128xf32>
    %115 = math.tanh %114 : vector<8x128xf32>
    %cst_50 = arith.constant 5.000000e-01 : f32
    %116 = vector.broadcast %cst_50 : f32 to vector<8x128xf32>
    %117 = arith.mulf %116, %115 : vector<8x128xf32>
    %cst_51 = arith.constant 5.000000e-01 : f32
    %118 = vector.broadcast %cst_51 : f32 to vector<8x128xf32>
    %119 = arith.addf %117, %118 : vector<8x128xf32>
    %120 = arith.mulf %109, %85 : vector<8x128xf32>
    %121 = arith.mulf %101, %111 : vector<8x128xf32>
    %122 = arith.addf %120, %121 : vector<8x128xf32>
    %123 = math.tanh %122 : vector<8x128xf32>
    %124 = arith.mulf %119, %123 : vector<8x128xf32>
    %c3_i32 = arith.constant 3 : i32
    %c8_i32_52 = arith.constant 8 : i32
    %125 = arith.muli %c3_i32, %c8_i32_52 : i32
    %126 = tpu.assume_multiple %125, 8 : i32
    %127 = arith.index_cast %126 : i32 to index
    %c0_53 = arith.constant 0 : index
    %128 = vector.load %arg7[%127, %c0_53] : memref<64x512xf32, #tpu.memory_space<vmem>>, vector<8x512xf32>
    %cst_54 = arith.constant dense<0.000000e+00> : vector<8x512xf32>
    %129 = tpu.matmul %124, %4, %cst_54 {dimension_numbers = #tpu.dot_dimension_numbers<[1], [0], [0], [1], [0, 0, 1, 1], [], []>} : vector<8x128xf32>, vector<128x512xf32>, vector<8x512xf32> -> vector<8x512xf32>
    %130 = arith.addf %128, %129 : vector<8x512xf32>
    %131 = vector.extract_strided_slice %130 {offsets = [0, 0], sizes = [8, 128], strides = [1, 1]} : vector<8x512xf32> to vector<8x128xf32>
    %cst_55 = arith.constant 5.000000e-01 : f32
    %132 = vector.broadcast %cst_55 : f32 to vector<8x128xf32>
    %133 = arith.mulf %132, %131 : vector<8x128xf32>
    %134 = math.tanh %133 : vector<8x128xf32>
    %cst_56 = arith.constant 5.000000e-01 : f32
    %135 = vector.broadcast %cst_56 : f32 to vector<8x128xf32>
    %136 = arith.mulf %135, %134 : vector<8x128xf32>
    %cst_57 = arith.constant 5.000000e-01 : f32
    %137 = vector.broadcast %cst_57 : f32 to vector<8x128xf32>
    %138 = arith.addf %136, %137 : vector<8x128xf32>
    %139 = vector.extract_strided_slice %130 {offsets = [0, 128], sizes = [8, 128], strides = [1, 1]} : vector<8x512xf32> to vector<8x128xf32>
    %cst_58 = arith.constant 5.000000e-01 : f32
    %140 = vector.broadcast %cst_58 : f32 to vector<8x128xf32>
    %141 = arith.mulf %140, %139 : vector<8x128xf32>
    %142 = math.tanh %141 : vector<8x128xf32>
    %cst_59 = arith.constant 5.000000e-01 : f32
    %143 = vector.broadcast %cst_59 : f32 to vector<8x128xf32>
    %144 = arith.mulf %143, %142 : vector<8x128xf32>
    %cst_60 = arith.constant 5.000000e-01 : f32
    %145 = vector.broadcast %cst_60 : f32 to vector<8x128xf32>
    %146 = arith.addf %144, %145 : vector<8x128xf32>
    %147 = vector.extract_strided_slice %130 {offsets = [0, 256], sizes = [8, 128], strides = [1, 1]} : vector<8x512xf32> to vector<8x128xf32>
    %148 = math.tanh %147 : vector<8x128xf32>
    %149 = vector.extract_strided_slice %130 {offsets = [0, 384], sizes = [8, 128], strides = [1, 1]} : vector<8x512xf32> to vector<8x128xf32>
    %cst_61 = arith.constant 5.000000e-01 : f32
    %150 = vector.broadcast %cst_61 : f32 to vector<8x128xf32>
    %151 = arith.mulf %150, %149 : vector<8x128xf32>
    %152 = math.tanh %151 : vector<8x128xf32>
    %cst_62 = arith.constant 5.000000e-01 : f32
    %153 = vector.broadcast %cst_62 : f32 to vector<8x128xf32>
    %154 = arith.mulf %153, %152 : vector<8x128xf32>
    %cst_63 = arith.constant 5.000000e-01 : f32
    %155 = vector.broadcast %cst_63 : f32 to vector<8x128xf32>
    %156 = arith.addf %154, %155 : vector<8x128xf32>
    %157 = arith.mulf %146, %122 : vector<8x128xf32>
    %158 = arith.mulf %138, %148 : vector<8x128xf32>
    %159 = arith.addf %157, %158 : vector<8x128xf32>
    %160 = math.tanh %159 : vector<8x128xf32>
    %161 = arith.mulf %156, %160 : vector<8x128xf32>
    %c4_i32 = arith.constant 4 : i32
    %c8_i32_64 = arith.constant 8 : i32
    %162 = arith.muli %c4_i32, %c8_i32_64 : i32
    %163 = tpu.assume_multiple %162, 8 : i32
    %164 = arith.index_cast %163 : i32 to index
    %c0_65 = arith.constant 0 : index
    %165 = vector.load %arg7[%164, %c0_65] : memref<64x512xf32, #tpu.memory_space<vmem>>, vector<8x512xf32>
    %cst_66 = arith.constant dense<0.000000e+00> : vector<8x512xf32>
    %166 = tpu.matmul %161, %4, %cst_66 {dimension_numbers = #tpu.dot_dimension_numbers<[1], [0], [0], [1], [0, 0, 1, 1], [], []>} : vector<8x128xf32>, vector<128x512xf32>, vector<8x512xf32> -> vector<8x512xf32>
    %167 = arith.addf %165, %166 : vector<8x512xf32>
    %168 = vector.extract_strided_slice %167 {offsets = [0, 0], sizes = [8, 128], strides = [1, 1]} : vector<8x512xf32> to vector<8x128xf32>
    %cst_67 = arith.constant 5.000000e-01 : f32
    %169 = vector.broadcast %cst_67 : f32 to vector<8x128xf32>
    %170 = arith.mulf %169, %168 : vector<8x128xf32>
    %171 = math.tanh %170 : vector<8x128xf32>
    %cst_68 = arith.constant 5.000000e-01 : f32
    %172 = vector.broadcast %cst_68 : f32 to vector<8x128xf32>
    %173 = arith.mulf %172, %171 : vector<8x128xf32>
    %cst_69 = arith.constant 5.000000e-01 : f32
    %174 = vector.broadcast %cst_69 : f32 to vector<8x128xf32>
    %175 = arith.addf %173, %174 : vector<8x128xf32>
    %176 = vector.extract_strided_slice %167 {offsets = [0, 128], sizes = [8, 128], strides = [1, 1]} : vector<8x512xf32> to vector<8x128xf32>
    %cst_70 = arith.constant 5.000000e-01 : f32
    %177 = vector.broadcast %cst_70 : f32 to vector<8x128xf32>
    %178 = arith.mulf %177, %176 : vector<8x128xf32>
    %179 = math.tanh %178 : vector<8x128xf32>
    %cst_71 = arith.constant 5.000000e-01 : f32
    %180 = vector.broadcast %cst_71 : f32 to vector<8x128xf32>
    %181 = arith.mulf %180, %179 : vector<8x128xf32>
    %cst_72 = arith.constant 5.000000e-01 : f32
    %182 = vector.broadcast %cst_72 : f32 to vector<8x128xf32>
    %183 = arith.addf %181, %182 : vector<8x128xf32>
    %184 = vector.extract_strided_slice %167 {offsets = [0, 256], sizes = [8, 128], strides = [1, 1]} : vector<8x512xf32> to vector<8x128xf32>
    %185 = math.tanh %184 : vector<8x128xf32>
    %186 = vector.extract_strided_slice %167 {offsets = [0, 384], sizes = [8, 128], strides = [1, 1]} : vector<8x512xf32> to vector<8x128xf32>
    %cst_73 = arith.constant 5.000000e-01 : f32
    %187 = vector.broadcast %cst_73 : f32 to vector<8x128xf32>
    %188 = arith.mulf %187, %186 : vector<8x128xf32>
    %189 = math.tanh %188 : vector<8x128xf32>
    %cst_74 = arith.constant 5.000000e-01 : f32
    %190 = vector.broadcast %cst_74 : f32 to vector<8x128xf32>
    %191 = arith.mulf %190, %189 : vector<8x128xf32>
    %cst_75 = arith.constant 5.000000e-01 : f32
    %192 = vector.broadcast %cst_75 : f32 to vector<8x128xf32>
    %193 = arith.addf %191, %192 : vector<8x128xf32>
    %194 = arith.mulf %183, %159 : vector<8x128xf32>
    %195 = arith.mulf %175, %185 : vector<8x128xf32>
    %196 = arith.addf %194, %195 : vector<8x128xf32>
    %197 = math.tanh %196 : vector<8x128xf32>
    %198 = arith.mulf %193, %197 : vector<8x128xf32>
    %c5_i32 = arith.constant 5 : i32
    %c8_i32_76 = arith.constant 8 : i32
    %199 = arith.muli %c5_i32, %c8_i32_76 : i32
    %200 = tpu.assume_multiple %199, 8 : i32
    %201 = arith.index_cast %200 : i32 to index
    %c0_77 = arith.constant 0 : index
    %202 = vector.load %arg7[%201, %c0_77] : memref<64x512xf32, #tpu.memory_space<vmem>>, vector<8x512xf32>
    %cst_78 = arith.constant dense<0.000000e+00> : vector<8x512xf32>
    %203 = tpu.matmul %198, %4, %cst_78 {dimension_numbers = #tpu.dot_dimension_numbers<[1], [0], [0], [1], [0, 0, 1, 1], [], []>} : vector<8x128xf32>, vector<128x512xf32>, vector<8x512xf32> -> vector<8x512xf32>
    %204 = arith.addf %202, %203 : vector<8x512xf32>
    %205 = vector.extract_strided_slice %204 {offsets = [0, 0], sizes = [8, 128], strides = [1, 1]} : vector<8x512xf32> to vector<8x128xf32>
    %cst_79 = arith.constant 5.000000e-01 : f32
    %206 = vector.broadcast %cst_79 : f32 to vector<8x128xf32>
    %207 = arith.mulf %206, %205 : vector<8x128xf32>
    %208 = math.tanh %207 : vector<8x128xf32>
    %cst_80 = arith.constant 5.000000e-01 : f32
    %209 = vector.broadcast %cst_80 : f32 to vector<8x128xf32>
    %210 = arith.mulf %209, %208 : vector<8x128xf32>
    %cst_81 = arith.constant 5.000000e-01 : f32
    %211 = vector.broadcast %cst_81 : f32 to vector<8x128xf32>
    %212 = arith.addf %210, %211 : vector<8x128xf32>
    %213 = vector.extract_strided_slice %204 {offsets = [0, 128], sizes = [8, 128], strides = [1, 1]} : vector<8x512xf32> to vector<8x128xf32>
    %cst_82 = arith.constant 5.000000e-01 : f32
    %214 = vector.broadcast %cst_82 : f32 to vector<8x128xf32>
    %215 = arith.mulf %214, %213 : vector<8x128xf32>
    %216 = math.tanh %215 : vector<8x128xf32>
    %cst_83 = arith.constant 5.000000e-01 : f32
    %217 = vector.broadcast %cst_83 : f32 to vector<8x128xf32>
    %218 = arith.mulf %217, %216 : vector<8x128xf32>
    %cst_84 = arith.constant 5.000000e-01 : f32
    %219 = vector.broadcast %cst_84 : f32 to vector<8x128xf32>
    %220 = arith.addf %218, %219 : vector<8x128xf32>
    %221 = vector.extract_strided_slice %204 {offsets = [0, 256], sizes = [8, 128], strides = [1, 1]} : vector<8x512xf32> to vector<8x128xf32>
    %222 = math.tanh %221 : vector<8x128xf32>
    %223 = vector.extract_strided_slice %204 {offsets = [0, 384], sizes = [8, 128], strides = [1, 1]} : vector<8x512xf32> to vector<8x128xf32>
    %cst_85 = arith.constant 5.000000e-01 : f32
    %224 = vector.broadcast %cst_85 : f32 to vector<8x128xf32>
    %225 = arith.mulf %224, %223 : vector<8x128xf32>
    %226 = math.tanh %225 : vector<8x128xf32>
    %cst_86 = arith.constant 5.000000e-01 : f32
    %227 = vector.broadcast %cst_86 : f32 to vector<8x128xf32>
    %228 = arith.mulf %227, %226 : vector<8x128xf32>
    %cst_87 = arith.constant 5.000000e-01 : f32
    %229 = vector.broadcast %cst_87 : f32 to vector<8x128xf32>
    %230 = arith.addf %228, %229 : vector<8x128xf32>
    %231 = arith.mulf %220, %196 : vector<8x128xf32>
    %232 = arith.mulf %212, %222 : vector<8x128xf32>
    %233 = arith.addf %231, %232 : vector<8x128xf32>
    %234 = math.tanh %233 : vector<8x128xf32>
    %235 = arith.mulf %230, %234 : vector<8x128xf32>
    %c6_i32 = arith.constant 6 : i32
    %c8_i32_88 = arith.constant 8 : i32
    %236 = arith.muli %c6_i32, %c8_i32_88 : i32
    %237 = tpu.assume_multiple %236, 8 : i32
    %238 = arith.index_cast %237 : i32 to index
    %c0_89 = arith.constant 0 : index
    %239 = vector.load %arg7[%238, %c0_89] : memref<64x512xf32, #tpu.memory_space<vmem>>, vector<8x512xf32>
    %cst_90 = arith.constant dense<0.000000e+00> : vector<8x512xf32>
    %240 = tpu.matmul %235, %4, %cst_90 {dimension_numbers = #tpu.dot_dimension_numbers<[1], [0], [0], [1], [0, 0, 1, 1], [], []>} : vector<8x128xf32>, vector<128x512xf32>, vector<8x512xf32> -> vector<8x512xf32>
    %241 = arith.addf %239, %240 : vector<8x512xf32>
    %242 = vector.extract_strided_slice %241 {offsets = [0, 0], sizes = [8, 128], strides = [1, 1]} : vector<8x512xf32> to vector<8x128xf32>
    %cst_91 = arith.constant 5.000000e-01 : f32
    %243 = vector.broadcast %cst_91 : f32 to vector<8x128xf32>
    %244 = arith.mulf %243, %242 : vector<8x128xf32>
    %245 = math.tanh %244 : vector<8x128xf32>
    %cst_92 = arith.constant 5.000000e-01 : f32
    %246 = vector.broadcast %cst_92 : f32 to vector<8x128xf32>
    %247 = arith.mulf %246, %245 : vector<8x128xf32>
    %cst_93 = arith.constant 5.000000e-01 : f32
    %248 = vector.broadcast %cst_93 : f32 to vector<8x128xf32>
    %249 = arith.addf %247, %248 : vector<8x128xf32>
    %250 = vector.extract_strided_slice %241 {offsets = [0, 128], sizes = [8, 128], strides = [1, 1]} : vector<8x512xf32> to vector<8x128xf32>
    %cst_94 = arith.constant 5.000000e-01 : f32
    %251 = vector.broadcast %cst_94 : f32 to vector<8x128xf32>
    %252 = arith.mulf %251, %250 : vector<8x128xf32>
    %253 = math.tanh %252 : vector<8x128xf32>
    %cst_95 = arith.constant 5.000000e-01 : f32
    %254 = vector.broadcast %cst_95 : f32 to vector<8x128xf32>
    %255 = arith.mulf %254, %253 : vector<8x128xf32>
    %cst_96 = arith.constant 5.000000e-01 : f32
    %256 = vector.broadcast %cst_96 : f32 to vector<8x128xf32>
    %257 = arith.addf %255, %256 : vector<8x128xf32>
    %258 = vector.extract_strided_slice %241 {offsets = [0, 256], sizes = [8, 128], strides = [1, 1]} : vector<8x512xf32> to vector<8x128xf32>
    %259 = math.tanh %258 : vector<8x128xf32>
    %260 = vector.extract_strided_slice %241 {offsets = [0, 384], sizes = [8, 128], strides = [1, 1]} : vector<8x512xf32> to vector<8x128xf32>
    %cst_97 = arith.constant 5.000000e-01 : f32
    %261 = vector.broadcast %cst_97 : f32 to vector<8x128xf32>
    %262 = arith.mulf %261, %260 : vector<8x128xf32>
    %263 = math.tanh %262 : vector<8x128xf32>
    %cst_98 = arith.constant 5.000000e-01 : f32
    %264 = vector.broadcast %cst_98 : f32 to vector<8x128xf32>
    %265 = arith.mulf %264, %263 : vector<8x128xf32>
    %cst_99 = arith.constant 5.000000e-01 : f32
    %266 = vector.broadcast %cst_99 : f32 to vector<8x128xf32>
    %267 = arith.addf %265, %266 : vector<8x128xf32>
    %268 = arith.mulf %257, %233 : vector<8x128xf32>
    %269 = arith.mulf %249, %259 : vector<8x128xf32>
    %270 = arith.addf %268, %269 : vector<8x128xf32>
    %271 = math.tanh %270 : vector<8x128xf32>
    %272 = arith.mulf %267, %271 : vector<8x128xf32>
    %c7_i32 = arith.constant 7 : i32
    %c8_i32_100 = arith.constant 8 : i32
    %273 = arith.muli %c7_i32, %c8_i32_100 : i32
    %274 = tpu.assume_multiple %273, 8 : i32
    %275 = arith.index_cast %274 : i32 to index
    %c0_101 = arith.constant 0 : index
    %276 = vector.load %arg7[%275, %c0_101] : memref<64x512xf32, #tpu.memory_space<vmem>>, vector<8x512xf32>
    %cst_102 = arith.constant dense<0.000000e+00> : vector<8x512xf32>
    %277 = tpu.matmul %272, %4, %cst_102 {dimension_numbers = #tpu.dot_dimension_numbers<[1], [0], [0], [1], [0, 0, 1, 1], [], []>} : vector<8x128xf32>, vector<128x512xf32>, vector<8x512xf32> -> vector<8x512xf32>
    %278 = arith.addf %276, %277 : vector<8x512xf32>
    %279 = vector.extract_strided_slice %278 {offsets = [0, 0], sizes = [8, 128], strides = [1, 1]} : vector<8x512xf32> to vector<8x128xf32>
    %cst_103 = arith.constant 5.000000e-01 : f32
    %280 = vector.broadcast %cst_103 : f32 to vector<8x128xf32>
    %281 = arith.mulf %280, %279 : vector<8x128xf32>
    %282 = math.tanh %281 : vector<8x128xf32>
    %cst_104 = arith.constant 5.000000e-01 : f32
    %283 = vector.broadcast %cst_104 : f32 to vector<8x128xf32>
    %284 = arith.mulf %283, %282 : vector<8x128xf32>
    %cst_105 = arith.constant 5.000000e-01 : f32
    %285 = vector.broadcast %cst_105 : f32 to vector<8x128xf32>
    %286 = arith.addf %284, %285 : vector<8x128xf32>
    %287 = vector.extract_strided_slice %278 {offsets = [0, 128], sizes = [8, 128], strides = [1, 1]} : vector<8x512xf32> to vector<8x128xf32>
    %cst_106 = arith.constant 5.000000e-01 : f32
    %288 = vector.broadcast %cst_106 : f32 to vector<8x128xf32>
    %289 = arith.mulf %288, %287 : vector<8x128xf32>
    %290 = math.tanh %289 : vector<8x128xf32>
    %cst_107 = arith.constant 5.000000e-01 : f32
    %291 = vector.broadcast %cst_107 : f32 to vector<8x128xf32>
    %292 = arith.mulf %291, %290 : vector<8x128xf32>
    %cst_108 = arith.constant 5.000000e-01 : f32
    %293 = vector.broadcast %cst_108 : f32 to vector<8x128xf32>
    %294 = arith.addf %292, %293 : vector<8x128xf32>
    %295 = vector.extract_strided_slice %278 {offsets = [0, 256], sizes = [8, 128], strides = [1, 1]} : vector<8x512xf32> to vector<8x128xf32>
    %296 = math.tanh %295 : vector<8x128xf32>
    %297 = vector.extract_strided_slice %278 {offsets = [0, 384], sizes = [8, 128], strides = [1, 1]} : vector<8x512xf32> to vector<8x128xf32>
    %cst_109 = arith.constant 5.000000e-01 : f32
    %298 = vector.broadcast %cst_109 : f32 to vector<8x128xf32>
    %299 = arith.mulf %298, %297 : vector<8x128xf32>
    %300 = math.tanh %299 : vector<8x128xf32>
    %cst_110 = arith.constant 5.000000e-01 : f32
    %301 = vector.broadcast %cst_110 : f32 to vector<8x128xf32>
    %302 = arith.mulf %301, %300 : vector<8x128xf32>
    %cst_111 = arith.constant 5.000000e-01 : f32
    %303 = vector.broadcast %cst_111 : f32 to vector<8x128xf32>
    %304 = arith.addf %302, %303 : vector<8x128xf32>
    %305 = arith.mulf %294, %270 : vector<8x128xf32>
    %306 = arith.mulf %286, %296 : vector<8x128xf32>
    %307 = arith.addf %305, %306 : vector<8x128xf32>
    %308 = math.tanh %307 : vector<8x128xf32>
    %309 = arith.mulf %304, %308 : vector<8x128xf32>
    %c8_i32_112 = arith.constant 8 : i32
    %c0_113 = arith.constant 0 : index
    %c0_114 = arith.constant 0 : index
    %310 = vector.load %arg8[%c0_113, %c0_114] : memref<8x128xf32, #tpu.memory_space<vmem>>, vector<8x128xf32>
    tpu.vector_store %arg8[%c0_113, %c0_114], %309 {strides = array<i32>} : memref<8x128xf32, #tpu.memory_space<vmem>>, vector<8x128xf32>,
    %c0_115 = arith.constant 0 : index
    %c0_116 = arith.constant 0 : index
    %311 = vector.load %arg9[%c0_115, %c0_116] : memref<8x128xf32, #tpu.memory_space<vmem>>, vector<8x128xf32>
    tpu.vector_store %arg9[%c0_115, %c0_116], %307 {strides = array<i32>} : memref<8x128xf32, #tpu.memory_space<vmem>>, vector<8x128xf32>,
    %c0_i32_117 = arith.constant 0 : i32
    %312 = arith.cmpi eq, %arg1, %c0_i32_117 : i32
    %313 = arith.extui %312 : i1 to i32
    %c0_i32_118 = arith.constant 0 : i32
    %314 = arith.cmpi ne, %313, %c0_i32_118 : i32
    scf.if %314 {
      %c0_119 = arith.constant 0 : index
      %c0_120 = arith.constant 0 : index
      %315 = vector.load %arg6[%c0_119, %c0_120] : memref<8x128xf32, #tpu.memory_space<vmem>>, vector<8x128xf32>
      tpu.vector_store %arg6[%c0_119, %c0_120], %309 {strides = array<i32>} : memref<8x128xf32, #tpu.memory_space<vmem>>, vector<8x128xf32>,
    } else {
    }
    return
  }
  func.func @transform_0(%arg0: i32, %arg1: i32) -> (i32, i32, i32, i32) {
    %c0_i32 = arith.constant 0 : i32
    %c0_i32_0 = arith.constant 0 : i32
    %c0_i32_1 = arith.constant 0 : i32
    return %arg1, %arg0, %c0_i32, %c0_i32_0 : i32, i32, i32, i32
  }
  func.func @transform_1(%arg0: i32, %arg1: i32) -> (i32, i32) {
    %c0_i32 = arith.constant 0 : i32
    %c0_i32_0 = arith.constant 0 : i32
    %c0_i32_1 = arith.constant 0 : i32
    return %c0_i32, %c0_i32_0 : i32, i32
  }
  func.func @transform_2(%arg0: i32, %arg1: i32) -> (i32, i32) {
    %c0_i32 = arith.constant 0 : i32
    %c0_i32_0 = arith.constant 0 : i32
    %c0_i32_1 = arith.constant 0 : i32
    return %c0_i32, %c0_i32_0 : i32, i32
  }
  func.func @transform_3(%arg0: i32, %arg1: i32) -> (i32, i32) {
    %c0_i32 = arith.constant 0 : i32
    %c0_i32_0 = arith.constant 0 : i32
    %c0_i32_1 = arith.constant 0 : i32
    return %c0_i32, %c0_i32_0 : i32, i32
  }
  func.func @transform_4(%arg0: i32, %arg1: i32) -> (i32, i32) {
    %c0_i32 = arith.constant 0 : i32
    %c0_i32_0 = arith.constant 0 : i32
    return %arg0, %c0_i32 : i32, i32
  }
}

module attributes {stable_mosaic.version = 11 : i64} {
  func.func @_lstm_chunk_kernel(%arg0: i32, %arg1: i32, %arg2: memref<1x1x64x16xf32, #tpu.memory_space<vmem>>, %arg3: memref<16x512xf32, #tpu.memory_space<vmem>>, %arg4: memref<1x512xf32, #tpu.memory_space<vmem>>, %arg5: memref<128x512xf32, #tpu.memory_space<vmem>>, %arg6: memref<8x128xf32, #tpu.memory_space<vmem>>, %arg7: memref<64x512xf32, #tpu.memory_space<vmem>>, %arg8: memref<8x128xf32, #tpu.memory_space<vmem>>, %arg9: memref<8x128xf32, #tpu.memory_space<vmem>>) attributes {dimension_semantics = [#tpu.dimension_semantics<parallel>, #tpu.dimension_semantics<arbitrary>], iteration_bounds = array<i64: 1, 1>, scalar_prefetch = 0 : i64, scratch_operands = 3 : i64, tpu.core_type = #tpu.core_type<tc>, window_params = [{transform_indices = @transform_0, window_bounds = array<i64: 1, 1, 64, 16>}, {pipeline_mode = #tpu.pipeline_mode<synchronous>, transform_indices = @transform_1, window_bounds = array<i64: 16, 512>}, {pipeline_mode = #tpu.pipeline_mode<synchronous>, transform_indices = @transform_2, window_bounds = array<i64: 1, 512>}, {pipeline_mode = #tpu.pipeline_mode<synchronous>, transform_indices = @transform_3, window_bounds = array<i64: 128, 512>}, {transform_indices = @transform_4, window_bounds = array<i64: 8, 128>}]} {
    %c0_i32 = arith.constant 0 : i32
    %0 = arith.cmpi eq, %arg1, %c0_i32 : i32
    %1 = arith.extui %0 : i1 to i32
    %c0_i32_0 = arith.constant 0 : i32
    %2 = arith.cmpi ne, %1, %c0_i32_0 : i32
    scf.if %2 {
      %cst_119 = arith.constant 0.000000e+00 : f32
      %315 = vector.broadcast %cst_119 : f32 to vector<8x128xf32>
      %c0_120 = arith.constant 0 : index
      %c0_121 = arith.constant 0 : index
      %316 = vector.load %arg8[%c0_120, %c0_121] : memref<8x128xf32, #tpu.memory_space<vmem>>, vector<8x128xf32>
      tpu.vector_store %arg8[%c0_120, %c0_121], %315 {strides = array<i32>} : memref<8x128xf32, #tpu.memory_space<vmem>>, vector<8x128xf32>,
      %cst_122 = arith.constant 0.000000e+00 : f32
      %317 = vector.broadcast %cst_122 : f32 to vector<8x128xf32>
      %c0_123 = arith.constant 0 : index
      %c0_124 = arith.constant 0 : index
      %318 = vector.load %arg9[%c0_123, %c0_124] : memref<8x128xf32, #tpu.memory_space<vmem>>, vector<8x128xf32>
      tpu.vector_store %arg9[%c0_123, %c0_124], %317 {strides = array<i32>} : memref<8x128xf32, #tpu.memory_space<vmem>>, vector<8x128xf32>,
    } else {
    }
    %c0 = arith.constant 0 : index
    %c0_1 = arith.constant 0 : index
    %3 = vector.load %arg3[%c0, %c0_1] : memref<16x512xf32, #tpu.memory_space<vmem>>, vector<16x512xf32>
    %c0_2 = arith.constant 0 : index
    %c0_3 = arith.constant 0 : index
    %4 = vector.load %arg5[%c0_2, %c0_3] : memref<128x512xf32, #tpu.memory_space<vmem>>, vector<128x512xf32>
    %c0_4 = arith.constant 0 : index
    %c0_5 = arith.constant 0 : index
    %c0_6 = arith.constant 0 : index
    %c0_7 = arith.constant 0 : index
    %5 = vector.load %arg2[%c0_4, %c0_5, %c0_6, %c0_7] : memref<1x1x64x16xf32, #tpu.memory_space<vmem>>, vector<1x1x64x16xf32>
    %6 = vector.shape_cast %5 : vector<1x1x64x16xf32> to vector<64x16xf32>
    %cst = arith.constant dense<0.000000e+00> : vector<64x512xf32>
    %7 = tpu.matmul %6, %3, %cst {dimension_numbers = #tpu.dot_dimension_numbers<[1], [0], [0], [1], [0, 0, 1, 1], [], []>} : vector<64x16xf32>, vector<16x512xf32>, vector<64x512xf32> -> vector<64x512xf32>
    %c0_8 = arith.constant 0 : index
    %c0_9 = arith.constant 0 : index
    %8 = vector.load %arg4[%c0_8, %c0_9] : memref<1x512xf32, #tpu.memory_space<vmem>>, vector<1x512xf32>
    %9 = vector.broadcast %8 : vector<1x512xf32> to vector<64x512xf32>
    %10 = arith.addf %7, %9 : vector<64x512xf32>
    %c0_10 = arith.constant 0 : index
    %c0_11 = arith.constant 0 : index
    %11 = vector.load %arg7[%c0_10, %c0_11] : memref<64x512xf32, #tpu.memory_space<vmem>>, vector<64x512xf32>
    tpu.vector_store %arg7[%c0_10, %c0_11], %10 {strides = array<i32>} : memref<64x512xf32, #tpu.memory_space<vmem>>, vector<64x512xf32>,
    %c0_12 = arith.constant 0 : index
    %c0_13 = arith.constant 0 : index
    %12 = vector.load %arg8[%c0_12, %c0_13] : memref<8x128xf32, #tpu.memory_space<vmem>>, vector<8x128xf32>
    %c0_14 = arith.constant 0 : index
    %c0_15 = arith.constant 0 : index
    %13 = vector.load %arg9[%c0_14, %c0_15] : memref<8x128xf32, #tpu.memory_space<vmem>>, vector<8x128xf32>
    %c0_i32_16 = arith.constant 0 : i32
    %c8_i32 = arith.constant 8 : i32
    %14 = arith.muli %c0_i32_16, %c8_i32 : i32
    %15 = tpu.assume_multiple %14, 8 : i32
    %16 = arith.index_cast %15 : i32 to index
    %c0_17 = arith.constant 0 : index
    %17 = vector.load %arg7[%16, %c0_17] : memref<64x512xf32, #tpu.memory_space<vmem>>, vector<8x512xf32>
    %cst_18 = arith.constant dense<0.000000e+00> : vector<8x512xf32>
    %18 = tpu.matmul %12, %4, %cst_18 {dimension_numbers = #tpu.dot_dimension_numbers<[1], [0], [0], [1], [0, 0, 1, 1], [], []>} : vector<8x128xf32>, vector<128x512xf32>, vector<8x512xf32> -> vector<8x512xf32>
    %19 = arith.addf %17, %18 : vector<8x512xf32>
    %20 = vector.extract_strided_slice %19 {offsets = [0, 0], sizes = [8, 128], strides = [1, 1]} : vector<8x512xf32> to vector<8x128xf32>
    %cst_19 = arith.constant 5.000000e-01 : f32
    %21 = vector.broadcast %cst_19 : f32 to vector<8x128xf32>
    %22 = arith.mulf %21, %20 : vector<8x128xf32>
    %23 = math.tanh %22 : vector<8x128xf32>
    %cst_20 = arith.constant 5.000000e-01 : f32
    %24 = vector.broadcast %cst_20 : f32 to vector<8x128xf32>
    %25 = arith.mulf %24, %23 : vector<8x128xf32>
    %cst_21 = arith.constant 5.000000e-01 : f32
    %26 = vector.broadcast %cst_21 : f32 to vector<8x128xf32>
    %27 = arith.addf %25, %26 : vector<8x128xf32>
    %28 = vector.extract_strided_slice %19 {offsets = [0, 128], sizes = [8, 128], strides = [1, 1]} : vector<8x512xf32> to vector<8x128xf32>
    %cst_22 = arith.constant 5.000000e-01 : f32
    %29 = vector.broadcast %cst_22 : f32 to vector<8x128xf32>
    %30 = arith.mulf %29, %28 : vector<8x128xf32>
    %31 = math.tanh %30 : vector<8x128xf32>
    %cst_23 = arith.constant 5.000000e-01 : f32
    %32 = vector.broadcast %cst_23 : f32 to vector<8x128xf32>
    %33 = arith.mulf %32, %31 : vector<8x128xf32>
    %cst_24 = arith.constant 5.000000e-01 : f32
    %34 = vector.broadcast %cst_24 : f32 to vector<8x128xf32>
    %35 = arith.addf %33, %34 : vector<8x128xf32>
    %36 = vector.extract_strided_slice %19 {offsets = [0, 256], sizes = [8, 128], strides = [1, 1]} : vector<8x512xf32> to vector<8x128xf32>
    %37 = math.tanh %36 : vector<8x128xf32>
    %38 = vector.extract_strided_slice %19 {offsets = [0, 384], sizes = [8, 128], strides = [1, 1]} : vector<8x512xf32> to vector<8x128xf32>
    %cst_25 = arith.constant 5.000000e-01 : f32
    %39 = vector.broadcast %cst_25 : f32 to vector<8x128xf32>
    %40 = arith.mulf %39, %38 : vector<8x128xf32>
    %41 = math.tanh %40 : vector<8x128xf32>
    %cst_26 = arith.constant 5.000000e-01 : f32
    %42 = vector.broadcast %cst_26 : f32 to vector<8x128xf32>
    %43 = arith.mulf %42, %41 : vector<8x128xf32>
    %cst_27 = arith.constant 5.000000e-01 : f32
    %44 = vector.broadcast %cst_27 : f32 to vector<8x128xf32>
    %45 = arith.addf %43, %44 : vector<8x128xf32>
    %46 = arith.mulf %35, %13 : vector<8x128xf32>
    %47 = arith.mulf %27, %37 : vector<8x128xf32>
    %48 = arith.addf %46, %47 : vector<8x128xf32>
    %49 = math.tanh %48 : vector<8x128xf32>
    %50 = arith.mulf %45, %49 : vector<8x128xf32>
    %c1_i32 = arith.constant 1 : i32
    %c8_i32_28 = arith.constant 8 : i32
    %51 = arith.muli %c1_i32, %c8_i32_28 : i32
    %52 = tpu.assume_multiple %51, 8 : i32
    %53 = arith.index_cast %52 : i32 to index
    %c0_29 = arith.constant 0 : index
    %54 = vector.load %arg7[%53, %c0_29] : memref<64x512xf32, #tpu.memory_space<vmem>>, vector<8x512xf32>
    %cst_30 = arith.constant dense<0.000000e+00> : vector<8x512xf32>
    %55 = tpu.matmul %50, %4, %cst_30 {dimension_numbers = #tpu.dot_dimension_numbers<[1], [0], [0], [1], [0, 0, 1, 1], [], []>} : vector<8x128xf32>, vector<128x512xf32>, vector<8x512xf32> -> vector<8x512xf32>
    %56 = arith.addf %54, %55 : vector<8x512xf32>
    %57 = vector.extract_strided_slice %56 {offsets = [0, 0], sizes = [8, 128], strides = [1, 1]} : vector<8x512xf32> to vector<8x128xf32>
    %cst_31 = arith.constant 5.000000e-01 : f32
    %58 = vector.broadcast %cst_31 : f32 to vector<8x128xf32>
    %59 = arith.mulf %58, %57 : vector<8x128xf32>
    %60 = math.tanh %59 : vector<8x128xf32>
    %cst_32 = arith.constant 5.000000e-01 : f32
    %61 = vector.broadcast %cst_32 : f32 to vector<8x128xf32>
    %62 = arith.mulf %61, %60 : vector<8x128xf32>
    %cst_33 = arith.constant 5.000000e-01 : f32
    %63 = vector.broadcast %cst_33 : f32 to vector<8x128xf32>
    %64 = arith.addf %62, %63 : vector<8x128xf32>
    %65 = vector.extract_strided_slice %56 {offsets = [0, 128], sizes = [8, 128], strides = [1, 1]} : vector<8x512xf32> to vector<8x128xf32>
    %cst_34 = arith.constant 5.000000e-01 : f32
    %66 = vector.broadcast %cst_34 : f32 to vector<8x128xf32>
    %67 = arith.mulf %66, %65 : vector<8x128xf32>
    %68 = math.tanh %67 : vector<8x128xf32>
    %cst_35 = arith.constant 5.000000e-01 : f32
    %69 = vector.broadcast %cst_35 : f32 to vector<8x128xf32>
    %70 = arith.mulf %69, %68 : vector<8x128xf32>
    %cst_36 = arith.constant 5.000000e-01 : f32
    %71 = vector.broadcast %cst_36 : f32 to vector<8x128xf32>
    %72 = arith.addf %70, %71 : vector<8x128xf32>
    %73 = vector.extract_strided_slice %56 {offsets = [0, 256], sizes = [8, 128], strides = [1, 1]} : vector<8x512xf32> to vector<8x128xf32>
    %74 = math.tanh %73 : vector<8x128xf32>
    %75 = vector.extract_strided_slice %56 {offsets = [0, 384], sizes = [8, 128], strides = [1, 1]} : vector<8x512xf32> to vector<8x128xf32>
    %cst_37 = arith.constant 5.000000e-01 : f32
    %76 = vector.broadcast %cst_37 : f32 to vector<8x128xf32>
    %77 = arith.mulf %76, %75 : vector<8x128xf32>
    %78 = math.tanh %77 : vector<8x128xf32>
    %cst_38 = arith.constant 5.000000e-01 : f32
    %79 = vector.broadcast %cst_38 : f32 to vector<8x128xf32>
    %80 = arith.mulf %79, %78 : vector<8x128xf32>
    %cst_39 = arith.constant 5.000000e-01 : f32
    %81 = vector.broadcast %cst_39 : f32 to vector<8x128xf32>
    %82 = arith.addf %80, %81 : vector<8x128xf32>
    %83 = arith.mulf %72, %48 : vector<8x128xf32>
    %84 = arith.mulf %64, %74 : vector<8x128xf32>
    %85 = arith.addf %83, %84 : vector<8x128xf32>
    %86 = math.tanh %85 : vector<8x128xf32>
    %87 = arith.mulf %82, %86 : vector<8x128xf32>
    %c2_i32 = arith.constant 2 : i32
    %c8_i32_40 = arith.constant 8 : i32
    %88 = arith.muli %c2_i32, %c8_i32_40 : i32
    %89 = tpu.assume_multiple %88, 8 : i32
    %90 = arith.index_cast %89 : i32 to index
    %c0_41 = arith.constant 0 : index
    %91 = vector.load %arg7[%90, %c0_41] : memref<64x512xf32, #tpu.memory_space<vmem>>, vector<8x512xf32>
    %cst_42 = arith.constant dense<0.000000e+00> : vector<8x512xf32>
    %92 = tpu.matmul %87, %4, %cst_42 {dimension_numbers = #tpu.dot_dimension_numbers<[1], [0], [0], [1], [0, 0, 1, 1], [], []>} : vector<8x128xf32>, vector<128x512xf32>, vector<8x512xf32> -> vector<8x512xf32>
    %93 = arith.addf %91, %92 : vector<8x512xf32>
    %94 = vector.extract_strided_slice %93 {offsets = [0, 0], sizes = [8, 128], strides = [1, 1]} : vector<8x512xf32> to vector<8x128xf32>
    %cst_43 = arith.constant 5.000000e-01 : f32
    %95 = vector.broadcast %cst_43 : f32 to vector<8x128xf32>
    %96 = arith.mulf %95, %94 : vector<8x128xf32>
    %97 = math.tanh %96 : vector<8x128xf32>
    %cst_44 = arith.constant 5.000000e-01 : f32
    %98 = vector.broadcast %cst_44 : f32 to vector<8x128xf32>
    %99 = arith.mulf %98, %97 : vector<8x128xf32>
    %cst_45 = arith.constant 5.000000e-01 : f32
    %100 = vector.broadcast %cst_45 : f32 to vector<8x128xf32>
    %101 = arith.addf %99, %100 : vector<8x128xf32>
    %102 = vector.extract_strided_slice %93 {offsets = [0, 128], sizes = [8, 128], strides = [1, 1]} : vector<8x512xf32> to vector<8x128xf32>
    %cst_46 = arith.constant 5.000000e-01 : f32
    %103 = vector.broadcast %cst_46 : f32 to vector<8x128xf32>
    %104 = arith.mulf %103, %102 : vector<8x128xf32>
    %105 = math.tanh %104 : vector<8x128xf32>
    %cst_47 = arith.constant 5.000000e-01 : f32
    %106 = vector.broadcast %cst_47 : f32 to vector<8x128xf32>
    %107 = arith.mulf %106, %105 : vector<8x128xf32>
    %cst_48 = arith.constant 5.000000e-01 : f32
    %108 = vector.broadcast %cst_48 : f32 to vector<8x128xf32>
    %109 = arith.addf %107, %108 : vector<8x128xf32>
    %110 = vector.extract_strided_slice %93 {offsets = [0, 256], sizes = [8, 128], strides = [1, 1]} : vector<8x512xf32> to vector<8x128xf32>
    %111 = math.tanh %110 : vector<8x128xf32>
    %112 = vector.extract_strided_slice %93 {offsets = [0, 384], sizes = [8, 128], strides = [1, 1]} : vector<8x512xf32> to vector<8x128xf32>
    %cst_49 = arith.constant 5.000000e-01 : f32
    %113 = vector.broadcast %cst_49 : f32 to vector<8x128xf32>
    %114 = arith.mulf %113, %112 : vector<8x128xf32>
    %115 = math.tanh %114 : vector<8x128xf32>
    %cst_50 = arith.constant 5.000000e-01 : f32
    %116 = vector.broadcast %cst_50 : f32 to vector<8x128xf32>
    %117 = arith.mulf %116, %115 : vector<8x128xf32>
    %cst_51 = arith.constant 5.000000e-01 : f32
    %118 = vector.broadcast %cst_51 : f32 to vector<8x128xf32>
    %119 = arith.addf %117, %118 : vector<8x128xf32>
    %120 = arith.mulf %109, %85 : vector<8x128xf32>
    %121 = arith.mulf %101, %111 : vector<8x128xf32>
    %122 = arith.addf %120, %121 : vector<8x128xf32>
    %123 = math.tanh %122 : vector<8x128xf32>
    %124 = arith.mulf %119, %123 : vector<8x128xf32>
    %c3_i32 = arith.constant 3 : i32
    %c8_i32_52 = arith.constant 8 : i32
    %125 = arith.muli %c3_i32, %c8_i32_52 : i32
    %126 = tpu.assume_multiple %125, 8 : i32
    %127 = arith.index_cast %126 : i32 to index
    %c0_53 = arith.constant 0 : index
    %128 = vector.load %arg7[%127, %c0_53] : memref<64x512xf32, #tpu.memory_space<vmem>>, vector<8x512xf32>
    %cst_54 = arith.constant dense<0.000000e+00> : vector<8x512xf32>
    %129 = tpu.matmul %124, %4, %cst_54 {dimension_numbers = #tpu.dot_dimension_numbers<[1], [0], [0], [1], [0, 0, 1, 1], [], []>} : vector<8x128xf32>, vector<128x512xf32>, vector<8x512xf32> -> vector<8x512xf32>
    %130 = arith.addf %128, %129 : vector<8x512xf32>
    %131 = vector.extract_strided_slice %130 {offsets = [0, 0], sizes = [8, 128], strides = [1, 1]} : vector<8x512xf32> to vector<8x128xf32>
    %cst_55 = arith.constant 5.000000e-01 : f32
    %132 = vector.broadcast %cst_55 : f32 to vector<8x128xf32>
    %133 = arith.mulf %132, %131 : vector<8x128xf32>
    %134 = math.tanh %133 : vector<8x128xf32>
    %cst_56 = arith.constant 5.000000e-01 : f32
    %135 = vector.broadcast %cst_56 : f32 to vector<8x128xf32>
    %136 = arith.mulf %135, %134 : vector<8x128xf32>
    %cst_57 = arith.constant 5.000000e-01 : f32
    %137 = vector.broadcast %cst_57 : f32 to vector<8x128xf32>
    %138 = arith.addf %136, %137 : vector<8x128xf32>
    %139 = vector.extract_strided_slice %130 {offsets = [0, 128], sizes = [8, 128], strides = [1, 1]} : vector<8x512xf32> to vector<8x128xf32>
    %cst_58 = arith.constant 5.000000e-01 : f32
    %140 = vector.broadcast %cst_58 : f32 to vector<8x128xf32>
    %141 = arith.mulf %140, %139 : vector<8x128xf32>
    %142 = math.tanh %141 : vector<8x128xf32>
    %cst_59 = arith.constant 5.000000e-01 : f32
    %143 = vector.broadcast %cst_59 : f32 to vector<8x128xf32>
    %144 = arith.mulf %143, %142 : vector<8x128xf32>
    %cst_60 = arith.constant 5.000000e-01 : f32
    %145 = vector.broadcast %cst_60 : f32 to vector<8x128xf32>
    %146 = arith.addf %144, %145 : vector<8x128xf32>
    %147 = vector.extract_strided_slice %130 {offsets = [0, 256], sizes = [8, 128], strides = [1, 1]} : vector<8x512xf32> to vector<8x128xf32>
    %148 = math.tanh %147 : vector<8x128xf32>
    %149 = vector.extract_strided_slice %130 {offsets = [0, 384], sizes = [8, 128], strides = [1, 1]} : vector<8x512xf32> to vector<8x128xf32>
    %cst_61 = arith.constant 5.000000e-01 : f32
    %150 = vector.broadcast %cst_61 : f32 to vector<8x128xf32>
    %151 = arith.mulf %150, %149 : vector<8x128xf32>
    %152 = math.tanh %151 : vector<8x128xf32>
    %cst_62 = arith.constant 5.000000e-01 : f32
    %153 = vector.broadcast %cst_62 : f32 to vector<8x128xf32>
    %154 = arith.mulf %153, %152 : vector<8x128xf32>
    %cst_63 = arith.constant 5.000000e-01 : f32
    %155 = vector.broadcast %cst_63 : f32 to vector<8x128xf32>
    %156 = arith.addf %154, %155 : vector<8x128xf32>
    %157 = arith.mulf %146, %122 : vector<8x128xf32>
    %158 = arith.mulf %138, %148 : vector<8x128xf32>
    %159 = arith.addf %157, %158 : vector<8x128xf32>
    %160 = math.tanh %159 : vector<8x128xf32>
    %161 = arith.mulf %156, %160 : vector<8x128xf32>
    %c4_i32 = arith.constant 4 : i32
    %c8_i32_64 = arith.constant 8 : i32
    %162 = arith.muli %c4_i32, %c8_i32_64 : i32
    %163 = tpu.assume_multiple %162, 8 : i32
    %164 = arith.index_cast %163 : i32 to index
    %c0_65 = arith.constant 0 : index
    %165 = vector.load %arg7[%164, %c0_65] : memref<64x512xf32, #tpu.memory_space<vmem>>, vector<8x512xf32>
    %cst_66 = arith.constant dense<0.000000e+00> : vector<8x512xf32>
    %166 = tpu.matmul %161, %4, %cst_66 {dimension_numbers = #tpu.dot_dimension_numbers<[1], [0], [0], [1], [0, 0, 1, 1], [], []>} : vector<8x128xf32>, vector<128x512xf32>, vector<8x512xf32> -> vector<8x512xf32>
    %167 = arith.addf %165, %166 : vector<8x512xf32>
    %168 = vector.extract_strided_slice %167 {offsets = [0, 0], sizes = [8, 128], strides = [1, 1]} : vector<8x512xf32> to vector<8x128xf32>
    %cst_67 = arith.constant 5.000000e-01 : f32
    %169 = vector.broadcast %cst_67 : f32 to vector<8x128xf32>
    %170 = arith.mulf %169, %168 : vector<8x128xf32>
    %171 = math.tanh %170 : vector<8x128xf32>
    %cst_68 = arith.constant 5.000000e-01 : f32
    %172 = vector.broadcast %cst_68 : f32 to vector<8x128xf32>
    %173 = arith.mulf %172, %171 : vector<8x128xf32>
    %cst_69 = arith.constant 5.000000e-01 : f32
    %174 = vector.broadcast %cst_69 : f32 to vector<8x128xf32>
    %175 = arith.addf %173, %174 : vector<8x128xf32>
    %176 = vector.extract_strided_slice %167 {offsets = [0, 128], sizes = [8, 128], strides = [1, 1]} : vector<8x512xf32> to vector<8x128xf32>
    %cst_70 = arith.constant 5.000000e-01 : f32
    %177 = vector.broadcast %cst_70 : f32 to vector<8x128xf32>
    %178 = arith.mulf %177, %176 : vector<8x128xf32>
    %179 = math.tanh %178 : vector<8x128xf32>
    %cst_71 = arith.constant 5.000000e-01 : f32
    %180 = vector.broadcast %cst_71 : f32 to vector<8x128xf32>
    %181 = arith.mulf %180, %179 : vector<8x128xf32>
    %cst_72 = arith.constant 5.000000e-01 : f32
    %182 = vector.broadcast %cst_72 : f32 to vector<8x128xf32>
    %183 = arith.addf %181, %182 : vector<8x128xf32>
    %184 = vector.extract_strided_slice %167 {offsets = [0, 256], sizes = [8, 128], strides = [1, 1]} : vector<8x512xf32> to vector<8x128xf32>
    %185 = math.tanh %184 : vector<8x128xf32>
    %186 = vector.extract_strided_slice %167 {offsets = [0, 384], sizes = [8, 128], strides = [1, 1]} : vector<8x512xf32> to vector<8x128xf32>
    %cst_73 = arith.constant 5.000000e-01 : f32
    %187 = vector.broadcast %cst_73 : f32 to vector<8x128xf32>
    %188 = arith.mulf %187, %186 : vector<8x128xf32>
    %189 = math.tanh %188 : vector<8x128xf32>
    %cst_74 = arith.constant 5.000000e-01 : f32
    %190 = vector.broadcast %cst_74 : f32 to vector<8x128xf32>
    %191 = arith.mulf %190, %189 : vector<8x128xf32>
    %cst_75 = arith.constant 5.000000e-01 : f32
    %192 = vector.broadcast %cst_75 : f32 to vector<8x128xf32>
    %193 = arith.addf %191, %192 : vector<8x128xf32>
    %194 = arith.mulf %183, %159 : vector<8x128xf32>
    %195 = arith.mulf %175, %185 : vector<8x128xf32>
    %196 = arith.addf %194, %195 : vector<8x128xf32>
    %197 = math.tanh %196 : vector<8x128xf32>
    %198 = arith.mulf %193, %197 : vector<8x128xf32>
    %c5_i32 = arith.constant 5 : i32
    %c8_i32_76 = arith.constant 8 : i32
    %199 = arith.muli %c5_i32, %c8_i32_76 : i32
    %200 = tpu.assume_multiple %199, 8 : i32
    %201 = arith.index_cast %200 : i32 to index
    %c0_77 = arith.constant 0 : index
    %202 = vector.load %arg7[%201, %c0_77] : memref<64x512xf32, #tpu.memory_space<vmem>>, vector<8x512xf32>
    %cst_78 = arith.constant dense<0.000000e+00> : vector<8x512xf32>
    %203 = tpu.matmul %198, %4, %cst_78 {dimension_numbers = #tpu.dot_dimension_numbers<[1], [0], [0], [1], [0, 0, 1, 1], [], []>} : vector<8x128xf32>, vector<128x512xf32>, vector<8x512xf32> -> vector<8x512xf32>
    %204 = arith.addf %202, %203 : vector<8x512xf32>
    %205 = vector.extract_strided_slice %204 {offsets = [0, 0], sizes = [8, 128], strides = [1, 1]} : vector<8x512xf32> to vector<8x128xf32>
    %cst_79 = arith.constant 5.000000e-01 : f32
    %206 = vector.broadcast %cst_79 : f32 to vector<8x128xf32>
    %207 = arith.mulf %206, %205 : vector<8x128xf32>
    %208 = math.tanh %207 : vector<8x128xf32>
    %cst_80 = arith.constant 5.000000e-01 : f32
    %209 = vector.broadcast %cst_80 : f32 to vector<8x128xf32>
    %210 = arith.mulf %209, %208 : vector<8x128xf32>
    %cst_81 = arith.constant 5.000000e-01 : f32
    %211 = vector.broadcast %cst_81 : f32 to vector<8x128xf32>
    %212 = arith.addf %210, %211 : vector<8x128xf32>
    %213 = vector.extract_strided_slice %204 {offsets = [0, 128], sizes = [8, 128], strides = [1, 1]} : vector<8x512xf32> to vector<8x128xf32>
    %cst_82 = arith.constant 5.000000e-01 : f32
    %214 = vector.broadcast %cst_82 : f32 to vector<8x128xf32>
    %215 = arith.mulf %214, %213 : vector<8x128xf32>
    %216 = math.tanh %215 : vector<8x128xf32>
    %cst_83 = arith.constant 5.000000e-01 : f32
    %217 = vector.broadcast %cst_83 : f32 to vector<8x128xf32>
    %218 = arith.mulf %217, %216 : vector<8x128xf32>
    %cst_84 = arith.constant 5.000000e-01 : f32
    %219 = vector.broadcast %cst_84 : f32 to vector<8x128xf32>
    %220 = arith.addf %218, %219 : vector<8x128xf32>
    %221 = vector.extract_strided_slice %204 {offsets = [0, 256], sizes = [8, 128], strides = [1, 1]} : vector<8x512xf32> to vector<8x128xf32>
    %222 = math.tanh %221 : vector<8x128xf32>
    %223 = vector.extract_strided_slice %204 {offsets = [0, 384], sizes = [8, 128], strides = [1, 1]} : vector<8x512xf32> to vector<8x128xf32>
    %cst_85 = arith.constant 5.000000e-01 : f32
    %224 = vector.broadcast %cst_85 : f32 to vector<8x128xf32>
    %225 = arith.mulf %224, %223 : vector<8x128xf32>
    %226 = math.tanh %225 : vector<8x128xf32>
    %cst_86 = arith.constant 5.000000e-01 : f32
    %227 = vector.broadcast %cst_86 : f32 to vector<8x128xf32>
    %228 = arith.mulf %227, %226 : vector<8x128xf32>
    %cst_87 = arith.constant 5.000000e-01 : f32
    %229 = vector.broadcast %cst_87 : f32 to vector<8x128xf32>
    %230 = arith.addf %228, %229 : vector<8x128xf32>
    %231 = arith.mulf %220, %196 : vector<8x128xf32>
    %232 = arith.mulf %212, %222 : vector<8x128xf32>
    %233 = arith.addf %231, %232 : vector<8x128xf32>
    %234 = math.tanh %233 : vector<8x128xf32>
    %235 = arith.mulf %230, %234 : vector<8x128xf32>
    %c6_i32 = arith.constant 6 : i32
    %c8_i32_88 = arith.constant 8 : i32
    %236 = arith.muli %c6_i32, %c8_i32_88 : i32
    %237 = tpu.assume_multiple %236, 8 : i32
    %238 = arith.index_cast %237 : i32 to index
    %c0_89 = arith.constant 0 : index
    %239 = vector.load %arg7[%238, %c0_89] : memref<64x512xf32, #tpu.memory_space<vmem>>, vector<8x512xf32>
    %cst_90 = arith.constant dense<0.000000e+00> : vector<8x512xf32>
    %240 = tpu.matmul %235, %4, %cst_90 {dimension_numbers = #tpu.dot_dimension_numbers<[1], [0], [0], [1], [0, 0, 1, 1], [], []>} : vector<8x128xf32>, vector<128x512xf32>, vector<8x512xf32> -> vector<8x512xf32>
    %241 = arith.addf %239, %240 : vector<8x512xf32>
    %242 = vector.extract_strided_slice %241 {offsets = [0, 0], sizes = [8, 128], strides = [1, 1]} : vector<8x512xf32> to vector<8x128xf32>
    %cst_91 = arith.constant 5.000000e-01 : f32
    %243 = vector.broadcast %cst_91 : f32 to vector<8x128xf32>
    %244 = arith.mulf %243, %242 : vector<8x128xf32>
    %245 = math.tanh %244 : vector<8x128xf32>
    %cst_92 = arith.constant 5.000000e-01 : f32
    %246 = vector.broadcast %cst_92 : f32 to vector<8x128xf32>
    %247 = arith.mulf %246, %245 : vector<8x128xf32>
    %cst_93 = arith.constant 5.000000e-01 : f32
    %248 = vector.broadcast %cst_93 : f32 to vector<8x128xf32>
    %249 = arith.addf %247, %248 : vector<8x128xf32>
    %250 = vector.extract_strided_slice %241 {offsets = [0, 128], sizes = [8, 128], strides = [1, 1]} : vector<8x512xf32> to vector<8x128xf32>
    %cst_94 = arith.constant 5.000000e-01 : f32
    %251 = vector.broadcast %cst_94 : f32 to vector<8x128xf32>
    %252 = arith.mulf %251, %250 : vector<8x128xf32>
    %253 = math.tanh %252 : vector<8x128xf32>
    %cst_95 = arith.constant 5.000000e-01 : f32
    %254 = vector.broadcast %cst_95 : f32 to vector<8x128xf32>
    %255 = arith.mulf %254, %253 : vector<8x128xf32>
    %cst_96 = arith.constant 5.000000e-01 : f32
    %256 = vector.broadcast %cst_96 : f32 to vector<8x128xf32>
    %257 = arith.addf %255, %256 : vector<8x128xf32>
    %258 = vector.extract_strided_slice %241 {offsets = [0, 256], sizes = [8, 128], strides = [1, 1]} : vector<8x512xf32> to vector<8x128xf32>
    %259 = math.tanh %258 : vector<8x128xf32>
    %260 = vector.extract_strided_slice %241 {offsets = [0, 384], sizes = [8, 128], strides = [1, 1]} : vector<8x512xf32> to vector<8x128xf32>
    %cst_97 = arith.constant 5.000000e-01 : f32
    %261 = vector.broadcast %cst_97 : f32 to vector<8x128xf32>
    %262 = arith.mulf %261, %260 : vector<8x128xf32>
    %263 = math.tanh %262 : vector<8x128xf32>
    %cst_98 = arith.constant 5.000000e-01 : f32
    %264 = vector.broadcast %cst_98 : f32 to vector<8x128xf32>
    %265 = arith.mulf %264, %263 : vector<8x128xf32>
    %cst_99 = arith.constant 5.000000e-01 : f32
    %266 = vector.broadcast %cst_99 : f32 to vector<8x128xf32>
    %267 = arith.addf %265, %266 : vector<8x128xf32>
    %268 = arith.mulf %257, %233 : vector<8x128xf32>
    %269 = arith.mulf %249, %259 : vector<8x128xf32>
    %270 = arith.addf %268, %269 : vector<8x128xf32>
    %271 = math.tanh %270 : vector<8x128xf32>
    %272 = arith.mulf %267, %271 : vector<8x128xf32>
    %c7_i32 = arith.constant 7 : i32
    %c8_i32_100 = arith.constant 8 : i32
    %273 = arith.muli %c7_i32, %c8_i32_100 : i32
    %274 = tpu.assume_multiple %273, 8 : i32
    %275 = arith.index_cast %274 : i32 to index
    %c0_101 = arith.constant 0 : index
    %276 = vector.load %arg7[%275, %c0_101] : memref<64x512xf32, #tpu.memory_space<vmem>>, vector<8x512xf32>
    %cst_102 = arith.constant dense<0.000000e+00> : vector<8x512xf32>
    %277 = tpu.matmul %272, %4, %cst_102 {dimension_numbers = #tpu.dot_dimension_numbers<[1], [0], [0], [1], [0, 0, 1, 1], [], []>} : vector<8x128xf32>, vector<128x512xf32>, vector<8x512xf32> -> vector<8x512xf32>
    %278 = arith.addf %276, %277 : vector<8x512xf32>
    %279 = vector.extract_strided_slice %278 {offsets = [0, 0], sizes = [8, 128], strides = [1, 1]} : vector<8x512xf32> to vector<8x128xf32>
    %cst_103 = arith.constant 5.000000e-01 : f32
    %280 = vector.broadcast %cst_103 : f32 to vector<8x128xf32>
    %281 = arith.mulf %280, %279 : vector<8x128xf32>
    %282 = math.tanh %281 : vector<8x128xf32>
    %cst_104 = arith.constant 5.000000e-01 : f32
    %283 = vector.broadcast %cst_104 : f32 to vector<8x128xf32>
    %284 = arith.mulf %283, %282 : vector<8x128xf32>
    %cst_105 = arith.constant 5.000000e-01 : f32
    %285 = vector.broadcast %cst_105 : f32 to vector<8x128xf32>
    %286 = arith.addf %284, %285 : vector<8x128xf32>
    %287 = vector.extract_strided_slice %278 {offsets = [0, 128], sizes = [8, 128], strides = [1, 1]} : vector<8x512xf32> to vector<8x128xf32>
    %cst_106 = arith.constant 5.000000e-01 : f32
    %288 = vector.broadcast %cst_106 : f32 to vector<8x128xf32>
    %289 = arith.mulf %288, %287 : vector<8x128xf32>
    %290 = math.tanh %289 : vector<8x128xf32>
    %cst_107 = arith.constant 5.000000e-01 : f32
    %291 = vector.broadcast %cst_107 : f32 to vector<8x128xf32>
    %292 = arith.mulf %291, %290 : vector<8x128xf32>
    %cst_108 = arith.constant 5.000000e-01 : f32
    %293 = vector.broadcast %cst_108 : f32 to vector<8x128xf32>
    %294 = arith.addf %292, %293 : vector<8x128xf32>
    %295 = vector.extract_strided_slice %278 {offsets = [0, 256], sizes = [8, 128], strides = [1, 1]} : vector<8x512xf32> to vector<8x128xf32>
    %296 = math.tanh %295 : vector<8x128xf32>
    %297 = vector.extract_strided_slice %278 {offsets = [0, 384], sizes = [8, 128], strides = [1, 1]} : vector<8x512xf32> to vector<8x128xf32>
    %cst_109 = arith.constant 5.000000e-01 : f32
    %298 = vector.broadcast %cst_109 : f32 to vector<8x128xf32>
    %299 = arith.mulf %298, %297 : vector<8x128xf32>
    %300 = math.tanh %299 : vector<8x128xf32>
    %cst_110 = arith.constant 5.000000e-01 : f32
    %301 = vector.broadcast %cst_110 : f32 to vector<8x128xf32>
    %302 = arith.mulf %301, %300 : vector<8x128xf32>
    %cst_111 = arith.constant 5.000000e-01 : f32
    %303 = vector.broadcast %cst_111 : f32 to vector<8x128xf32>
    %304 = arith.addf %302, %303 : vector<8x128xf32>
    %305 = arith.mulf %294, %270 : vector<8x128xf32>
    %306 = arith.mulf %286, %296 : vector<8x128xf32>
    %307 = arith.addf %305, %306 : vector<8x128xf32>
    %308 = math.tanh %307 : vector<8x128xf32>
    %309 = arith.mulf %304, %308 : vector<8x128xf32>
    %c8_i32_112 = arith.constant 8 : i32
    %c0_113 = arith.constant 0 : index
    %c0_114 = arith.constant 0 : index
    %310 = vector.load %arg8[%c0_113, %c0_114] : memref<8x128xf32, #tpu.memory_space<vmem>>, vector<8x128xf32>
    tpu.vector_store %arg8[%c0_113, %c0_114], %309 {strides = array<i32>} : memref<8x128xf32, #tpu.memory_space<vmem>>, vector<8x128xf32>,
    %c0_115 = arith.constant 0 : index
    %c0_116 = arith.constant 0 : index
    %311 = vector.load %arg9[%c0_115, %c0_116] : memref<8x128xf32, #tpu.memory_space<vmem>>, vector<8x128xf32>
    tpu.vector_store %arg9[%c0_115, %c0_116], %307 {strides = array<i32>} : memref<8x128xf32, #tpu.memory_space<vmem>>, vector<8x128xf32>,
    %c0_i32_117 = arith.constant 0 : i32
    %312 = arith.cmpi eq, %arg1, %c0_i32_117 : i32
    %313 = arith.extui %312 : i1 to i32
    %c0_i32_118 = arith.constant 0 : i32
    %314 = arith.cmpi ne, %313, %c0_i32_118 : i32
    scf.if %314 {
      %c0_119 = arith.constant 0 : index
      %c0_120 = arith.constant 0 : index
      %315 = vector.load %arg6[%c0_119, %c0_120] : memref<8x128xf32, #tpu.memory_space<vmem>>, vector<8x128xf32>
      tpu.vector_store %arg6[%c0_119, %c0_120], %309 {strides = array<i32>} : memref<8x128xf32, #tpu.memory_space<vmem>>, vector<8x128xf32>,
    } else {
    }
    return
  }
  func.func @transform_0(%arg0: i32, %arg1: i32) -> (i32, i32, i32, i32) {
    %c0_i32 = arith.constant 0 : i32
    %c0_i32_0 = arith.constant 0 : i32
    %c0_i32_1 = arith.constant 0 : i32
    return %arg1, %arg0, %c0_i32, %c0_i32_0 : i32, i32, i32, i32
  }
  func.func @transform_1(%arg0: i32, %arg1: i32) -> (i32, i32) {
    %c0_i32 = arith.constant 0 : i32
    %c0_i32_0 = arith.constant 0 : i32
    %c0_i32_1 = arith.constant 0 : i32
    return %c0_i32, %c0_i32_0 : i32, i32
  }
  func.func @transform_2(%arg0: i32, %arg1: i32) -> (i32, i32) {
    %c0_i32 = arith.constant 0 : i32
    %c0_i32_0 = arith.constant 0 : i32
    %c0_i32_1 = arith.constant 0 : i32
    return %c0_i32, %c0_i32_0 : i32, i32
  }
  func.func @transform_3(%arg0: i32, %arg1: i32) -> (i32, i32) {
    %c0_i32 = arith.constant 0 : i32
    %c0_i32_0 = arith.constant 0 : i32
    %c0_i32_1 = arith.constant 0 : i32
    return %c0_i32, %c0_i32_0 : i32, i32
  }
  func.func @transform_4(%arg0: i32, %arg1: i32) -> (i32, i32) {
    %c0_i32 = arith.constant 0 : i32
    %c0_i32_0 = arith.constant 0 : i32
    return %arg0, %c0_i32 : i32, i32
  }
}

</mosaic_0001>

<llo_original>
// kernel: tpu_custom_call.1
$region0: #{tpu_custom_call.1}
  #allocation0 [shape = 'u32[]', space=smem, size = 0x4, offset = 0x4, fixed_abs, tag = 'smem constant byte address 0x4 - core index']
  #allocation1 [shape = 'u32[144,128]{1,0:T(1,128)}', space=vmem, size = 0x12000, scoped, tag = 'internal scratch']
  #allocation2 [shape = 'f32[64,512]{1,0:T(8,128)}', space=vmem, size = 0x20000, scoped, tag = 'scratch operand']
  #allocation3 [shape = 'f32[8,128]{1,0:T(8,128)}', space=vmem, size = 0x1000, scoped, tag = 'scratch operand']
  #allocation4 [shape = 'f32[8,128]{1,0:T(8,128)}', space=vmem, size = 0x1000, scoped, tag = 'scratch operand']
  %s0 = inlined_call_operand.vmem [shape: f32[1,1,64,16], index: 0, kind: input, shape index: {}]
  %s1 = inlined_call_operand.vmem [shape: f32[16,512], index: 1, kind: input, shape index: {}]
  %s2 = inlined_call_operand.vmem [shape: f32[1,512], index: 2, kind: input, shape index: {}]
  %s3 = inlined_call_operand.hbm [shape: f32[128,512], index: 3, kind: input, shape index: {}]
  %s4 = inlined_call_operand.hbm [shape: f32[8,128], index: 4, kind: output, shape index: {}]
  %s5 = sld [smem:[#allocation0]]
  $region38: #{tpu_custom_call.1} parent=0
    _
  %s7 = ssub.s32 1, %s5
  %s8 = scalar_select 0, %s7, %s5
  $region1: #{tpu_custom_call.1} parent=0
    #allocation5 [shape = 'u8[262144]{0}', space=vmem, size = 0x40000, scoped, tag = 'input window, operand 3, single buffered']
    #allocation6 [shape = 's32[1]{0}', space=sflag, size = 0x4, scoped, tag = 'scoped memory for tpu_custom_call.1']
    #allocation7 [shape = 's32[1]{0}', space=sflag, size = 0x4, scoped, tag = 'scoped memory for tpu_custom_call.1']
    #allocation8 [shape = 'u8[4096]{0}', space=vmem, size = 0x1000, scoped, tag = 'output window, operand 0, single buffered']
    %9 = vsyncpa [#allocation6], 0
    %10 = vsyncpa [#allocation7], 0
    // Predicated region
    $region2: #{tpu_custom_call.1} parent=1 // pred_check
      _
    $region3: #{tpu_custom_call.1} parent=1 // pred_check_branch
      %12 = sbr.rel (0) target = $region5
    $region4: #{tpu_custom_call.1} parent=1 // pred_region
      _
    $region5: #{tpu_custom_call.1} parent=1 // pred_fallthru
      _
    // Predicated region
    $region6: #{tpu_custom_call.1} parent=1 // pred_check
      _
    $region7: #{tpu_custom_call.1} parent=1 // pred_check_branch
      %14 = sbr.rel (0) target = $region9
    $region8: #{tpu_custom_call.1} parent=1 // pred_region
      _
    $region9: #{tpu_custom_call.1} parent=1 // pred_fallthru
      _
    // Predicated region
    $region10: #{tpu_custom_call.1} parent=1 // pred_check
      _
    $region11: #{tpu_custom_call.1} parent=1 // pred_check_branch
      %16 = sbr.rel (0) target = $region13
    $region12: #{tpu_custom_call.1} parent=1 // pred_region
      _
    $region13: #{tpu_custom_call.1} parent=1 // pred_fallthru
      _
    // Predicated region
    $region14: #{tpu_custom_call.1} parent=1 // pred_check
      _
    $region15: #{tpu_custom_call.1} parent=1 // pred_check_branch
      %18 = sbr.rel (0) target = $region17
    $region16: #{tpu_custom_call.1} parent=1 // pred_region
      %s20 = ssub.s32 8192, 8192
      %21 = vsyncadd [#allocation6], %s20
      %s22 = sshll.u32 [#allocation5], 4
      %s23 = int_to_ptr.vmem [resolvable:$true] %s22
      %28 = dma.hbm_to_vmem [thread:$0]  %s3, 8192, %s23, [#allocation6], 512, 512, 32
    $region17: #{tpu_custom_call.1} parent=1 // pred_fallthru
      _
    // Predicated region
    $region18: #{tpu_custom_call.1} parent=1 // pred_check
      _
    $region19: #{tpu_custom_call.1} parent=1 // pred_check_branch
      %30 = sbr.rel (0) target = $region21
    $region20: #{tpu_custom_call.1} parent=1 // pred_region
      %31 = dma.done [#allocation6], 8192
    $region21: #{tpu_custom_call.1} parent=1 // pred_fallthru
      _
    %p32 = scmp.eq.s32.totalorder 0, 0
    // Predicated region
    $region22: #{tpu_custom_call.1} parent=1 // pred_check
      %p33 = pneg %p32
    $region23: #{tpu_custom_call.1} parent=1 // pred_check_branch
      %35 = sbr.rel (%p33) target = $region25
    $region24: #{tpu_custom_call.1} parent=1 // pred_region
      %36 = vst [vmem:[#allocation3] sm:$0xff] 0.0
      %37 = vst [vmem:[#allocation4] sm:$0xff] 0.0
    $region25: #{tpu_custom_call.1} parent=1 // pred_fallthru
      _
    %v38 = vld [vmem:[%s1] sm:$0xff]
    %v39 = vld [vmem:[%s1 + $0x8] sm:$0xff]
    %v40 = vld [vmem:[%s1 + $0x10] sm:$0xff]
    %v41 = vld [vmem:[%s1 + $0x18] sm:$0xff]
    %v42 = vld [vmem:[%s1 + $0x20] sm:$0xff]
    %v43 = vld [vmem:[%s1 + $0x28] sm:$0xff]
    %v44 = vld [vmem:[%s1 + $0x30] sm:$0xff]
    %v45 = vld [vmem:[%s1 + $0x38] sm:$0xff]
    %v46 = vld [vmem:[#allocation5] sm:$0xff]
    %v47 = vld [vmem:[#allocation5 + $0x8] sm:$0xff]
    %v48 = vld [vmem:[#allocation5 + $0x10] sm:$0xff]
    %v49 = vld [vmem:[#allocation5 + $0x18] sm:$0xff]
    %v50 = vld [vmem:[#allocation5 + $0x20] sm:$0xff]
    %v51 = vld [vmem:[#allocation5 + $0x28] sm:$0xff]
    %v52 = vld [vmem:[#allocation5 + $0x30] sm:$0xff]
    %v53 = vld [vmem:[#allocation5 + $0x38] sm:$0xff]
    %v54 = vld [vmem:[#allocation5 + $0x40] sm:$0xff]
    %v55 = vld [vmem:[#allocation5 + $0x48] sm:$0xff]
    %v56 = vld [vmem:[#allocation5 + $0x50] sm:$0xff]
    %v57 = vld [vmem:[#allocation5 + $0x58] sm:$0xff]
    %v58 = vld [vmem:[#allocation5 + $0x60] sm:$0xff]
    %v59 = vld [vmem:[#allocation5 + $0x68] sm:$0xff]
    %v60 = vld [vmem:[#allocation5 + $0x70] sm:$0xff]
    %v61 = vld [vmem:[#allocation5 + $0x78] sm:$0xff]
    %v62 = vld [vmem:[#allocation5 + $0x80] sm:$0xff]
    %v63 = vld [vmem:[#allocation5 + $0x88] sm:$0xff]
    %v64 = vld [vmem:[#allocation5 + $0x90] sm:$0xff]
    %v65 = vld [vmem:[#allocation5 + $0x98] sm:$0xff]
    %v66 = vld [vmem:[#allocation5 + $0xa0] sm:$0xff]
    %v67 = vld [vmem:[#allocation5 + $0xa8] sm:$0xff]
    %v68 = vld [vmem:[#allocation5 + $0xb0] sm:$0xff]
    %v69 = vld [vmem:[#allocation5 + $0xb8] sm:$0xff]
    %v70 = vld [vmem:[#allocation5 + $0xc0] sm:$0xff]
    %v71 = vld [vmem:[#allocation5 + $0xc8] sm:$0xff]
    %v72 = vld [vmem:[#allocation5 + $0xd0] sm:$0xff]
    %v73 = vld [vmem:[#allocation5 + $0xd8] sm:$0xff]
    %v74 = vld [vmem:[#allocation5 + $0xe0] sm:$0xff]
    %v75 = vld [vmem:[#allocation5 + $0xe8] sm:$0xff]
    %v76 = vld [vmem:[#allocation5 + $0xf0] sm:$0xff]
    %v77 = vld [vmem:[#allocation5 + $0xf8] sm:$0xff]
    %v78 = vld [vmem:[#allocation5 + $0x100] sm:$0xff]
    %v79 = vld [vmem:[#allocation5 + $0x108] sm:$0xff]
    %v80 = vld [vmem:[#allocation5 + $0x110] sm:$0xff]
    %v81 = vld [vmem:[#allocation5 + $0x118] sm:$0xff]
    %v82 = vld [vmem:[#allocation5 + $0x120] sm:$0xff]
    %v83 = vld [vmem:[#allocation5 + $0x128] sm:$0xff]
    %v84 = vld [vmem:[#allocation5 + $0x130] sm:$0xff]
    %v85 = vld [vmem:[#allocation5 + $0x138] sm:$0xff]
    %v86 = vld [vmem:[#allocation5 + $0x140] sm:$0xff]
    %v87 = vld [vmem:[#allocation5 + $0x148] sm:$0xff]
    %v88 = vld [vmem:[#allocation5 + $0x150] sm:$0xff]
    %v89 = vld [vmem:[#allocation5 + $0x158] sm:$0xff]
    %v90 = vld [vmem:[#allocation5 + $0x160] sm:$0xff]
    %v91 = vld [vmem:[#allocation5 + $0x168] sm:$0xff]
    %v92 = vld [vmem:[#allocation5 + $0x170] sm:$0xff]
    %v93 = vld [vmem:[#allocation5 + $0x178] sm:$0xff]
    %v94 = vld [vmem:[#allocation5 + $0x180] sm:$0xff]
    %v95 = vld [vmem:[#allocation5 + $0x188] sm:$0xff]
    %v96 = vld [vmem:[#allocation5 + $0x190] sm:$0xff]
    %v97 = vld [vmem:[#allocation5 + $0x198] sm:$0xff]
    %v98 = vld [vmem:[#allocation5 + $0x1a0] sm:$0xff]
    %v99 = vld [vmem:[#allocation5 + $0x1a8] sm:$0xff]
    %v100 = vld [vmem:[#allocation5 + $0x1b0] sm:$0xff]
    %v101 = vld [vmem:[#allocation5 + $0x1b8] sm:$0xff]
    %v102 = vld [vmem:[#allocation5 + $0x1c0] sm:$0xff]
    %v103 = vld [vmem:[#allocation5 + $0x1c8] sm:$0xff]
    %v104 = vld [vmem:[#allocation5 + $0x1d0] sm:$0xff]
    %v105 = vld [vmem:[#allocation5 + $0x1d8] sm:$0xff]
    %v106 = vld [vmem:[#allocation5 + $0x1e0] sm:$0xff]
    %v107 = vld [vmem:[#allocation5 + $0x1e8] sm:$0xff]
    %v108 = vld [vmem:[#allocation5 + $0x1f0] sm:$0xff]
    %v109 = vld [vmem:[#allocation5 + $0x1f8] sm:$0xff]
    %v110 = vld [vmem:[%s0] sm:$0xff]
    %v111 = vld [vmem:[%s0 + $0x8] sm:$0xff]
    %v112 = vld [vmem:[%s0 + $0x10] sm:$0xff]
    %v113 = vld [vmem:[%s0 + $0x18] sm:$0xff]
    %v114 = vld [vmem:[%s0 + $0x20] sm:$0xff]
    %v115 = vld [vmem:[%s0 + $0x28] sm:$0xff]
    %v116 = vld [vmem:[%s0 + $0x30] sm:$0xff]
    %v117 = vld [vmem:[%s0 + $0x38] sm:$0xff]
    %v118 = vld [vmem:[%s2] sm:$0xf]
    %v120 = vlaneseq
    %v121 = vshrl.u32 %v120, 7
    %v122 = vsub.s32 0, %v121
    %v123 = vrot.slane %v118, %v122
    %v124 = vlaneseq
    %v125 = vshrl.u32 %v124, 7
    %v126 = vsub.s32 1, %v125
    %v127 = vrot.slane %v118, %v126
    %v128 = vlaneseq
    %v129 = vshrl.u32 %v128, 7
    %v130 = vsub.s32 2, %v129
    %v131 = vrot.slane %v118, %v130
    %v132 = vlaneseq
    %v133 = vshrl.u32 %v132, 7
    %v134 = vsub.s32 3, %v133
    %v135 = vrot.slane %v118, %v134
    %vm140 = vcmask 130048
    %v142 = vsel %vm140, %v110, 0
    %v145 = vsel %vm140, %v111, 0
    %v148 = vsel %vm140, %v112, 0
    %v151 = vsel %vm140, %v113, 0
    %v154 = vsel %vm140, %v114, 0
    %v157 = vsel %vm140, %v115, 0
    %v160 = vsel %vm140, %v116, 0
    %v163 = vsel %vm140, %v117, 0
    %165 = vmatprep.subr.mxu0 %v39
    %166 = vmatpush1.msra.mxu0 %v38
    %167 = vmatprep.subr.mxu0 %v43
    %168 = vmatpush1.msra.mxu0 %v42
    %169 = vmatprep.subr.mxu0 0.0
    %170 = vmatpush1.msra.mxu0 0.0
    %171 = vmatprep.subr.mxu0 0.0
    %172 = vmatpush1.msra.mxu0 0.0
    %173 = vmatprep.subr.mxu0 0.0
    %174 = vmatpush1.msra.mxu0 0.0
    %175 = vmatprep.subr.mxu0 0.0
    %176 = vmatpush1.msra.mxu0 0.0
    %177 = vmatprep.subr.mxu0 0.0
    %178 = vmatpush1.msra.mxu0 0.0
    %179 = vmatprep.subr.mxu0 0.0
    %180 = vmatpush1.msra.mxu0 0.0
    %181 = vmatprep.subr.mxu0 0.0
    %182 = vmatpush1.msra.mxu0 0.0
    %183 = vmatprep.subr.mxu0 0.0
    %184 = vmatpush1.msra.mxu0 0.0
    %185 = vmatprep.subr.mxu0 0.0
    %186 = vmatpush1.msra.mxu0 0.0
    %187 = vmatprep.subr.mxu0 0.0
    %188 = vmatpush1.msra.mxu0 0.0
    %189 = vmatprep.subr.mxu0 0.0
    %190 = vmatpush1.msra.mxu0 0.0
    %191 = vmatprep.subr.mxu0 0.0
    %192 = vmatpush1.msra.mxu0 0.0
    %193 = vmatprep.subr.mxu0 0.0
    %194 = vmatpush1.msra.mxu0 0.0
    %195 = vmatprep.subr.mxu0 0.0
    %196 = vmatpush1.msra.mxu0 0.0
    %197 = vmatprep.subr.mxu0 0.0
    %198 = vmatpush1.msra.mxu0 0.0
    %199 = vmatprep.subr.mxu0 0.0
    %200 = vmatpush1.msra.mxu0 0.0
    %201 = vmatprep.subr.mxu0 0.0
    %202 = vmatpush1.msra.mxu0 0.0
    %203 = vmatprep.subr.mxu0 0.0
    %204 = vmatpush1.msra.mxu0 0.0
    %205 = vmatprep.subr.mxu0 0.0
    %206 = vmatpush1.msra.mxu0 0.0
    %207 = vmatprep.subr.mxu0 0.0
    %208 = vmatpush1.msra.mxu0 0.0
    %209 = vmatprep.subr.mxu0 0.0
    %210 = vmatpush1.msra.mxu0 0.0
    %211 = vmatprep.subr.mxu0 0.0
    %212 = vmatpush1.msra.mxu0 0.0
    %213 = vmatprep.subr.mxu0 0.0
    %214 = vmatpush1.msra.mxu0 0.0
    %215 = vmatprep.subr.mxu0 0.0
    %216 = vmatpush1.msra.mxu0 0.0
    %217 = vmatprep.subr.mxu0 0.0
    %218 = vmatpush1.msra.mxu0 0.0
    %219 = vmatprep.subr.mxu0 0.0
    %220 = vmatpush1.msra.mxu0 0.0
    %221 = vmatprep.subr.mxu0 0.0
    %222 = vmatpush1.msra.mxu0 0.0
    %223 = vmatprep.subr.mxu0 0.0
    %224 = vmatpush1.msra.mxu0 0.0
    %225 = vmatprep.subr.mxu0 0.0
    %226 = vmatpush1.msra.mxu0 0.0
    %227 = vmatprep.subr.mxu0 0.0
    %228 = vmatpush1.msra.mxu0 0.0
    %229 = vmatprep.mubr.f32.mxu0 0.0
    %230 = vmatmul.mubr.f32.gmra.mrb[0].mxu0 %v142
    %v231 = vpop.f32.mrb[0].mxu0
    %v232 = vadd.f32 %v123, %v231
    %v233 = vpop.f32.mrb[0].mxu0
    %v234 = vadd.f32 %v127, %v233
    %235 = vmatprep.mubr.f32.mxu0 0.0
    %236 = vmatmul.mubr.f32.gmra.mrb[0].mxu0 %v145
    %v237 = vpop.f32.mrb[0].mxu0
    %v238 = vadd.f32 %v123, %v237
    %v239 = vpop.f32.mrb[0].mxu0
    %v240 = vadd.f32 %v127, %v239
    %241 = vmatprep.mubr.f32.mxu0 0.0
    %242 = vmatmul.mubr.f32.gmra.mrb[0].mxu0 %v148
    %v243 = vpop.f32.mrb[0].mxu0
    %v244 = vadd.f32 %v123, %v243
    %v245 = vpop.f32.mrb[0].mxu0
    %v246 = vadd.f32 %v127, %v245
    %247 = vmatprep.mubr.f32.mxu0 0.0
    %248 = vmatmul.mubr.f32.gmra.mrb[0].mxu0 %v151
    %v249 = vpop.f32.mrb[0].mxu0
    %v250 = vadd.f32 %v123, %v249
    %v251 = vpop.f32.mrb[0].mxu0
    %v252 = vadd.f32 %v127, %v251
    %253 = vmatprep.mubr.f32.mxu0 0.0
    %254 = vmatmul.mubr.f32.gmra.mrb[0].mxu0 %v154
    %v255 = vpop.f32.mrb[0].mxu0
    %v256 = vadd.f32 %v123, %v255
    %v257 = vpop.f32.mrb[0].mxu0
    %v258 = vadd.f32 %v127, %v257
    %259 = vmatprep.mubr.f32.mxu0 0.0
    %260 = vmatmul.mubr.f32.gmra.mrb[0].mxu0 %v157
    %v261 = vpop.f32.mrb[0].mxu0
    %v262 = vadd.f32 %v123, %v261
    %v263 = vpop.f32.mrb[0].mxu0
    %v264 = vadd.f32 %v127, %v263
    %265 = vmatprep.mubr.f32.mxu0 0.0
    %266 = vmatmul.mubr.f32.gmra.mrb[0].mxu0 %v160
    %v267 = vpop.f32.mrb[0].mxu0
    %v268 = vadd.f32 %v123, %v267
    %v269 = vpop.f32.mrb[0].mxu0
    %v270 = vadd.f32 %v127, %v269
    %271 = vmatprep.mubr.f32.mxu0 0.0
    %272 = vmatmul.mubr.f32.gmra.mrb[0].mxu0 %v163
    %v273 = vpop.f32.mrb[0].mxu0
    %v274 = vadd.f32 %v123, %v273
    %v275 = vpop.f32.mrb[0].mxu0
    %v276 = vadd.f32 %v127, %v275
    %277 = vdwg.mxu0
    %278 = vmatprep.subr.mxu0 %v41
    %279 = vmatpush1.msra.mxu0 %v40
    %280 = vmatprep.subr.mxu0 %v45
    %281 = vmatpush1.msra.mxu0 %v44
    %282 = vmatprep.subr.mxu0 0.0
    %283 = vmatpush1.msra.mxu0 0.0
    %284 = vmatprep.subr.mxu0 0.0
    %285 = vmatpush1.msra.mxu0 0.0
    %286 = vmatprep.subr.mxu0 0.0
    %287 = vmatpush1.msra.mxu0 0.0
    %288 = vmatprep.subr.mxu0 0.0
    %289 = vmatpush1.msra.mxu0 0.0
    %290 = vmatprep.subr.mxu0 0.0
    %291 = vmatpush1.msra.mxu0 0.0
    %292 = vmatprep.subr.mxu0 0.0
    %293 = vmatpush1.msra.mxu0 0.0
    %294 = vmatprep.subr.mxu0 0.0
    %295 = vmatpush1.msra.mxu0 0.0
    %296 = vmatprep.subr.mxu0 0.0
    %297 = vmatpush1.msra.mxu0 0.0
    %298 = vmatprep.subr.mxu0 0.0
    %299 = vmatpush1.msra.mxu0 0.0
    %300 = vmatprep.subr.mxu0 0.0
    %301 = vmatpush1.msra.mxu0 0.0
    %302 = vmatprep.subr.mxu0 0.0
    %303 = vmatpush1.msra.mxu0 0.0
    %304 = vmatprep.subr.mxu0 0.0
    %305 = vmatpush1.msra.mxu0 0.0
    %306 = vmatprep.subr.mxu0 0.0
    %307 = vmatpush1.msra.mxu0 0.0
    %308 = vmatprep.subr.mxu0 0.0
    %309 = vmatpush1.msra.mxu0 0.0
    %310 = vmatprep.subr.mxu0 0.0
    %311 = vmatpush1.msra.mxu0 0.0
    %312 = vmatprep.subr.mxu0 0.0
    %313 = vmatpush1.msra.mxu0 0.0
    %314 = vmatprep.subr.mxu0 0.0
    %315 = vmatpush1.msra.mxu0 0.0
    %316 = vmatprep.subr.mxu0 0.0
    %317 = vmatpush1.msra.mxu0 0.0
    %318 = vmatprep.subr.mxu0 0.0
    %319 = vmatpush1.msra.mxu0 0.0
    %320 = vmatprep.subr.mxu0 0.0
    %321 = vmatpush1.msra.mxu0 0.0
    %322 = vmatprep.subr.mxu0 0.0
    %323 = vmatpush1.msra.mxu0 0.0
    %324 = vmatprep.subr.mxu0 0.0
    %325 = vmatpush1.msra.mxu0 0.0
    %326 = vmatprep.subr.mxu0 0.0
    %327 = vmatpush1.msra.mxu0 0.0
    %328 = vmatprep.subr.mxu0 0.0
    %329 = vmatpush1.msra.mxu0 0.0
    %330 = vmatprep.subr.mxu0 0.0
    %331 = vmatpush1.msra.mxu0 0.0
    %332 = vmatprep.subr.mxu0 0.0
    %333 = vmatpush1.msra.mxu0 0.0
    %334 = vmatprep.subr.mxu0 0.0
    %335 = vmatpush1.msra.mxu0 0.0
    %336 = vmatprep.subr.mxu0 0.0
    %337 = vmatpush1.msra.mxu0 0.0
    %338 = vmatprep.subr.mxu0 0.0
    %339 = vmatpush1.msra.mxu0 0.0
    %340 = vmatprep.subr.mxu0 0.0
    %341 = vmatpush1.msra.mxu0 0.0
    %342 = vmatprep.mubr.f32.mxu0 0.0
    %343 = vmatmul.mubr.f32.gmra.mrb[0].mxu0 %v142
    %v344 = vpop.f32.mrb[0].mxu0
    %v345 = vadd.f32 %v131, %v344
    %v346 = vpop.f32.mrb[0].mxu0
    %v347 = vadd.f32 %v135, %v346
    %348 = vmatprep.mubr.f32.mxu0 0.0
    %349 = vmatmul.mubr.f32.gmra.mrb[0].mxu0 %v145
    %v350 = vpop.f32.mrb[0].mxu0
    %v351 = vadd.f32 %v131, %v350
    %v352 = vpop.f32.mrb[0].mxu0
    %v353 = vadd.f32 %v135, %v352
    %354 = vmatprep.mubr.f32.mxu0 0.0
    %355 = vmatmul.mubr.f32.gmra.mrb[0].mxu0 %v148
    %v356 = vpop.f32.mrb[0].mxu0
    %v357 = vadd.f32 %v131, %v356
    %v358 = vpop.f32.mrb[0].mxu0
    %v359 = vadd.f32 %v135, %v358
    %360 = vmatprep.mubr.f32.mxu0 0.0
    %361 = vmatmul.mubr.f32.gmra.mrb[0].mxu0 %v151
    %v362 = vpop.f32.mrb[0].mxu0
    %v363 = vadd.f32 %v131, %v362
    %v364 = vpop.f32.mrb[0].mxu0
    %v365 = vadd.f32 %v135, %v364
    %366 = vmatprep.mubr.f32.mxu0 0.0
    %367 = vmatmul.mubr.f32.gmra.mrb[0].mxu0 %v154
    %v368 = vpop.f32.mrb[0].mxu0
    %v369 = vadd.f32 %v131, %v368
    %v370 = vpop.f32.mrb[0].mxu0
    %v371 = vadd.f32 %v135, %v370
    %372 = vmatprep.mubr.f32.mxu0 0.0
    %373 = vmatmul.mubr.f32.gmra.mrb[0].mxu0 %v157
    %v374 = vpop.f32.mrb[0].mxu0
    %v375 = vadd.f32 %v131, %v374
    %v376 = vpop.f32.mrb[0].mxu0
    %v377 = vadd.f32 %v135, %v376
    %378 = vmatprep.mubr.f32.mxu0 0.0
    %379 = vmatmul.mubr.f32.gmra.mrb[0].mxu0 %v160
    %v380 = vpop.f32.mrb[0].mxu0
    %v381 = vadd.f32 %v131, %v380
    %v382 = vpop.f32.mrb[0].mxu0
    %v383 = vadd.f32 %v135, %v382
    %384 = vmatprep.mubr.f32.mxu0 0.0
    %385 = vmatmul.mubr.f32.gmra.mrb[0].mxu0 %v163
    %v386 = vpop.f32.mrb[0].mxu0
    %v387 = vadd.f32 %v131, %v386
    %v388 = vpop.f32.mrb[0].mxu0
    %v389 = vadd.f32 %v135, %v388
    %390 = vdwg.mxu0
    %391 = vst [vmem:[#allocation2] sm:$0xff] %v232
    %392 = vst [vmem:[#allocation2 + $0x8] sm:$0xff] %v234
    %393 = vst [vmem:[#allocation2 + $0x10] sm:$0xff] %v345
    %394 = vst [vmem:[#allocation2 + $0x18] sm:$0xff] %v347
    %395 = vst [vmem:[#allocation2 + $0x20] sm:$0xff] %v238
    %396 = vst [vmem:[#allocation2 + $0x28] sm:$0xff] %v240
    %397 = vst [vmem:[#allocation2 + $0x30] sm:$0xff] %v351
    %398 = vst [vmem:[#allocation2 + $0x38] sm:$0xff] %v353
    %399 = vst [vmem:[#allocation2 + $0x40] sm:$0xff] %v244
    %400 = vst [vmem:[#allocation2 + $0x48] sm:$0xff] %v246
    %401 = vst [vmem:[#allocation2 + $0x50] sm:$0xff] %v357
    %402 = vst [vmem:[#allocation2 + $0x58] sm:$0xff] %v359
    %403 = vst [vmem:[#allocation2 + $0x60] sm:$0xff] %v250
    %404 = vst [vmem:[#allocation2 + $0x68] sm:$0xff] %v252
    %405 = vst [vmem:[#allocation2 + $0x70] sm:$0xff] %v363
    %406 = vst [vmem:[#allocation2 + $0x78] sm:$0xff] %v365
    %407 = vst [vmem:[#allocation2 + $0x80] sm:$0xff] %v256
    %408 = vst [vmem:[#allocation2 + $0x88] sm:$0xff] %v258
    %409 = vst [vmem:[#allocation2 + $0x90] sm:$0xff] %v369
    %410 = vst [vmem:[#allocation2 + $0x98] sm:$0xff] %v371
    %411 = vst [vmem:[#allocation2 + $0xa0] sm:$0xff] %v262
    %412 = vst [vmem:[#allocation2 + $0xa8] sm:$0xff] %v264
    %413 = vst [vmem:[#allocation2 + $0xb0] sm:$0xff] %v375
    %414 = vst [vmem:[#allocation2 + $0xb8] sm:$0xff] %v377
    %415 = vst [vmem:[#allocation2 + $0xc0] sm:$0xff] %v268
    %416 = vst [vmem:[#allocation2 + $0xc8] sm:$0xff] %v270
    %417 = vst [vmem:[#allocation2 + $0xd0] sm:$0xff] %v381
    %418 = vst [vmem:[#allocation2 + $0xd8] sm:$0xff] %v383
    %419 = vst [vmem:[#allocation2 + $0xe0] sm:$0xff] %v274
    %420 = vst [vmem:[#allocation2 + $0xe8] sm:$0xff] %v276
    %421 = vst [vmem:[#allocation2 + $0xf0] sm:$0xff] %v387
    %422 = vst [vmem:[#allocation2 + $0xf8] sm:$0xff] %v389
    %v423 = vld [vmem:[#allocation3] sm:$0xff]
    %v424 = vld [vmem:[#allocation4] sm:$0xff]
    %s425 = smul.u32 0, 4
    %s426 = smul.addr %s425, 8
    %s427 = scalar_lea.vmem [#allocation2], %s426
    %v428 = vld [vmem:[%s427] sm:$0xff]
    %v429 = vld [vmem:[%s427 + $0x8] sm:$0xff]
    %v430 = vld [vmem:[%s427 + $0x10] sm:$0xff]
    %v431 = vld [vmem:[%s427 + $0x18] sm:$0xff]
    %432 = vmatprep.subr.mxu0 %v47
    %433 = vmatpush1.msra.mxu0 %v46
    %434 = vmatprep.subr.mxu0 %v51
    %435 = vmatpush1.msra.mxu0 %v50
    %436 = vmatprep.subr.mxu0 %v55
    %437 = vmatpush1.msra.mxu0 %v54
    %438 = vmatprep.subr.mxu0 %v59
    %439 = vmatpush1.msra.mxu0 %v58
    %440 = vmatprep.subr.mxu0 %v63
    %441 = vmatpush1.msra.mxu0 %v62
    %442 = vmatprep.subr.mxu0 %v67
    %443 = vmatpush1.msra.mxu0 %v66
    %444 = vmatprep.subr.mxu0 %v71
    %445 = vmatpush1.msra.mxu0 %v70
    %446 = vmatprep.subr.mxu0 %v75
    %447 = vmatpush1.msra.mxu0 %v74
    %448 = vmatprep.subr.mxu0 %v79
    %449 = vmatpush1.msra.mxu0 %v78
    %450 = vmatprep.subr.mxu0 %v83
    %451 = vmatpush1.msra.mxu0 %v82
    %452 = vmatprep.subr.mxu0 %v87
    %453 = vmatpush1.msra.mxu0 %v86
    %454 = vmatprep.subr.mxu0 %v91
    %455 = vmatpush1.msra.mxu0 %v90
    %456 = vmatprep.subr.mxu0 %v95
    %457 = vmatpush1.msra.mxu0 %v94
    %458 = vmatprep.subr.mxu0 %v99
    %459 = vmatpush1.msra.mxu0 %v98
    %460 = vmatprep.subr.mxu0 %v103
    %461 = vmatpush1.msra.mxu0 %v102
    %462 = vmatprep.subr.mxu0 %v107
    %463 = vmatpush1.msra.mxu0 %v106
    %464 = vmatprep.subr.mxu0 0.0
    %465 = vmatpush1.msra.mxu0 0.0
    %466 = vmatprep.subr.mxu0 0.0
    %467 = vmatpush1.msra.mxu0 0.0
    %468 = vmatprep.subr.mxu0 0.0
    %469 = vmatpush1.msra.mxu0 0.0
    %470 = vmatprep.subr.mxu0 0.0
    %471 = vmatpush1.msra.mxu0 0.0
    %472 = vmatprep.subr.mxu0 0.0
    %473 = vmatpush1.msra.mxu0 0.0
    %474 = vmatprep.subr.mxu0 0.0
    %475 = vmatpush1.msra.mxu0 0.0
    %476 = vmatprep.subr.mxu0 0.0
    %477 = vmatpush1.msra.mxu0 0.0
    %478 = vmatprep.subr.mxu0 0.0
    %479 = vmatpush1.msra.mxu0 0.0
    %480 = vmatprep.subr.mxu0 0.0
    %481 = vmatpush1.msra.mxu0 0.0
    %482 = vmatprep.subr.mxu0 0.0
    %483 = vmatpush1.msra.mxu0 0.0
    %484 = vmatprep.subr.mxu0 0.0
    %485 = vmatpush1.msra.mxu0 0.0
    %486 = vmatprep.subr.mxu0 0.0
    %487 = vmatpush1.msra.mxu0 0.0
    %488 = vmatprep.subr.mxu0 0.0
    %489 = vmatpush1.msra.mxu0 0.0
    %490 = vmatprep.subr.mxu0 0.0
    %491 = vmatpush1.msra.mxu0 0.0
    %492 = vmatprep.subr.mxu0 0.0
    %493 = vmatpush1.msra.mxu0 0.0
    %494 = vmatprep.subr.mxu0 0.0
    %495 = vmatpush1.msra.mxu0 0.0
    %496 = vmatprep.mubr.f32.mxu0 0.0
    %497 = vmatmul.mubr.f32.gmra.mrb[0].mxu0 %v423
    %v498 = vpop.f32.mrb[0].mxu0
    %v499 = vadd.f32 0.0, %v498
    %v500 = vpop.f32.mrb[0].mxu0
    %v501 = vadd.f32 0.0, %v500
    %502 = vdwg.mxu0
    %503 = vmatprep.subr.mxu0 %v49
    %504 = vmatpush1.msra.mxu0 %v48
    %505 = vmatprep.subr.mxu0 %v53
    %506 = vmatpush1.msra.mxu0 %v52
    %507 = vmatprep.subr.mxu0 %v57
    %508 = vmatpush1.msra.mxu0 %v56
    %509 = vmatprep.subr.mxu0 %v61
    %510 = vmatpush1.msra.mxu0 %v60
    %511 = vmatprep.subr.mxu0 %v65
    %512 = vmatpush1.msra.mxu0 %v64
    %513 = vmatprep.subr.mxu0 %v69
    %514 = vmatpush1.msra.mxu0 %v68
    %515 = vmatprep.subr.mxu0 %v73
    %516 = vmatpush1.msra.mxu0 %v72
    %517 = vmatprep.subr.mxu0 %v77
    %518 = vmatpush1.msra.mxu0 %v76
    %519 = vmatprep.subr.mxu0 %v81
    %520 = vmatpush1.msra.mxu0 %v80
    %521 = vmatprep.subr.mxu0 %v85
    %522 = vmatpush1.msra.mxu0 %v84
    %523 = vmatprep.subr.mxu0 %v89
    %524 = vmatpush1.msra.mxu0 %v88
    %525 = vmatprep.subr.mxu0 %v93
    %526 = vmatpush1.msra.mxu0 %v92
    %527 = vmatprep.subr.mxu0 %v97
    %528 = vmatpush1.msra.mxu0 %v96
    %529 = vmatprep.subr.mxu0 %v101
    %530 = vmatpush1.msra.mxu0 %v100
    %531 = vmatprep.subr.mxu0 %v105
    %532 = vmatpush1.msra.mxu0 %v104
    %533 = vmatprep.subr.mxu0 %v109
    %534 = vmatpush1.msra.mxu0 %v108
    %535 = vmatprep.subr.mxu0 0.0
    %536 = vmatpush1.msra.mxu0 0.0
    %537 = vmatprep.subr.mxu0 0.0
    %538 = vmatpush1.msra.mxu0 0.0
    %539 = vmatprep.subr.mxu0 0.0
    %540 = vmatpush1.msra.mxu0 0.0
    %541 = vmatprep.subr.mxu0 0.0
    %542 = vmatpush1.msra.mxu0 0.0
    %543 = vmatprep.subr.mxu0 0.0
    %544 = vmatpush1.msra.mxu0 0.0
    %545 = vmatprep.subr.mxu0 0.0
    %546 = vmatpush1.msra.mxu0 0.0
    %547 = vmatprep.subr.mxu0 0.0
    %548 = vmatpush1.msra.mxu0 0.0
    %549 = vmatprep.subr.mxu0 0.0
    %550 = vmatpush1.msra.mxu0 0.0
    %551 = vmatprep.subr.mxu0 0.0
    %552 = vmatpush1.msra.mxu0 0.0
    %553 = vmatprep.subr.mxu0 0.0
    %554 = vmatpush1.msra.mxu0 0.0
    %555 = vmatprep.subr.mxu0 0.0
    %556 = vmatpush1.msra.mxu0 0.0
    %557 = vmatprep.subr.mxu0 0.0
    %558 = vmatpush1.msra.mxu0 0.0
    %559 = vmatprep.subr.mxu0 0.0
    %560 = vmatpush1.msra.mxu0 0.0
    %561 = vmatprep.subr.mxu0 0.0
    %562 = vmatpush1.msra.mxu0 0.0
    %563 = vmatprep.subr.mxu0 0.0
    %564 = vmatpush1.msra.mxu0 0.0
    %565 = vmatprep.subr.mxu0 0.0
    %566 = vmatpush1.msra.mxu0 0.0
    %567 = vmatprep.mubr.f32.mxu0 0.0
    %568 = vmatmul.mubr.f32.gmra.mrb[0].mxu0 %v423
    %v569 = vpop.f32.mrb[0].mxu0
    %v570 = vadd.f32 0.0, %v569
    %v571 = vpop.f32.mrb[0].mxu0
    %v572 = vadd.f32 0.0, %v571
    %573 = vdwg.mxu0
    %v574 = vadd.f32 %v428, %v499
    %v575 = vadd.f32 %v429, %v501
    %v576 = vadd.f32 %v430, %v570
    %v577 = vadd.f32 %v431, %v572
    %v578 = vmul.f32 %v574, 0.5
    %v579 = vtanh.pop %v578
    %v580 = vmul.f32 %v579, 0.5
    %v581 = vadd.f32 %v580, 0.5
    %v582 = vmul.f32 %v575, 0.5
    %v583 = vtanh.pop %v582
    %v584 = vmul.f32 %v583, 0.5
    %v585 = vadd.f32 %v584, 0.5
    %v586 = vtanh.pop %v576
    %v587 = vmul.f32 %v577, 0.5
    %v588 = vtanh.pop %v587
    %v589 = vmul.f32 %v588, 0.5
    %v590 = vadd.f32 %v589, 0.5
    %v591 = vmul.f32 %v585, %v424
    %v592 = vmul.f32 %v581, %v586
    %v593 = vadd.f32 %v591, %v592
    %v594 = vtanh.pop %v593
    %v595 = vmul.f32 %v590, %v594
    %s596 = smul.u32 1, 4
    %s597 = smul.addr %s596, 8
    %s598 = scalar_lea.vmem [#allocation2], %s597
    %v599 = vld [vmem:[%s598] sm:$0xff]
    %v600 = vld [vmem:[%s598 + $0x8] sm:$0xff]
    %v601 = vld [vmem:[%s598 + $0x10] sm:$0xff]
    %v602 = vld [vmem:[%s598 + $0x18] sm:$0xff]
    %603 = vmatprep.subr.mxu0 %v47
    %604 = vmatpush1.msra.mxu0 %v46
    %605 = vmatprep.subr.mxu0 %v51
    %606 = vmatpush1.msra.mxu0 %v50
    %607 = vmatprep.subr.mxu0 %v55
    %608 = vmatpush1.msra.mxu0 %v54
    %609 = vmatprep.subr.mxu0 %v59
    %610 = vmatpush1.msra.mxu0 %v58
    %611 = vmatprep.subr.mxu0 %v63
    %612 = vmatpush1.msra.mxu0 %v62
    %613 = vmatprep.subr.mxu0 %v67
    %614 = vmatpush1.msra.mxu0 %v66
    %615 = vmatprep.subr.mxu0 %v71
    %616 = vmatpush1.msra.mxu0 %v70
    %617 = vmatprep.subr.mxu0 %v75
    %618 = vmatpush1.msra.mxu0 %v74
    %619 = vmatprep.subr.mxu0 %v79
    %620 = vmatpush1.msra.mxu0 %v78
    %621 = vmatprep.subr.mxu0 %v83
    %622 = vmatpush1.msra.mxu0 %v82
    %623 = vmatprep.subr.mxu0 %v87
    %624 = vmatpush1.msra.mxu0 %v86
    %625 = vmatprep.subr.mxu0 %v91
    %626 = vmatpush1.msra.mxu0 %v90
    %627 = vmatprep.subr.mxu0 %v95
    %628 = vmatpush1.msra.mxu0 %v94
    %629 = vmatprep.subr.mxu0 %v99
    %630 = vmatpush1.msra.mxu0 %v98
    %631 = vmatprep.subr.mxu0 %v103
    %632 = vmatpush1.msra.mxu0 %v102
    %633 = vmatprep.subr.mxu0 %v107
    %634 = vmatpush1.msra.mxu0 %v106
    %635 = vmatprep.subr.mxu0 0.0
    %636 = vmatpush1.msra.mxu0 0.0
    %637 = vmatprep.subr.mxu0 0.0
    %638 = vmatpush1.msra.mxu0 0.0
    %639 = vmatprep.subr.mxu0 0.0
    %640 = vmatpush1.msra.mxu0 0.0
    %641 = vmatprep.subr.mxu0 0.0
    %642 = vmatpush1.msra.mxu0 0.0
    %643 = vmatprep.subr.mxu0 0.0
    %644 = vmatpush1.msra.mxu0 0.0
    %645 = vmatprep.subr.mxu0 0.0
    %646 = vmatpush1.msra.mxu0 0.0
    %647 = vmatprep.subr.mxu0 0.0
    %648 = vmatpush1.msra.mxu0 0.0
    %649 = vmatprep.subr.mxu0 0.0
    %650 = vmatpush1.msra.mxu0 0.0
    %651 = vmatprep.subr.mxu0 0.0
    %652 = vmatpush1.msra.mxu0 0.0
    %653 = vmatprep.subr.mxu0 0.0
    %654 = vmatpush1.msra.mxu0 0.0
    %655 = vmatprep.subr.mxu0 0.0
    %656 = vmatpush1.msra.mxu0 0.0
    %657 = vmatprep.subr.mxu0 0.0
    %658 = vmatpush1.msra.mxu0 0.0
    %659 = vmatprep.subr.mxu0 0.0
    %660 = vmatpush1.msra.mxu0 0.0
    %661 = vmatprep.subr.mxu0 0.0
    %662 = vmatpush1.msra.mxu0 0.0
    %663 = vmatprep.subr.mxu0 0.0
    %664 = vmatpush1.msra.mxu0 0.0
    %665 = vmatprep.subr.mxu0 0.0
    %666 = vmatpush1.msra.mxu0 0.0
    %667 = vmatprep.mubr.f32.mxu0 0.0
    %668 = vmatmul.mubr.f32.gmra.mrb[0].mxu0 %v595
    %v669 = vpop.f32.mrb[0].mxu0
    %v670 = vadd.f32 0.0, %v669
    %v671 = vpop.f32.mrb[0].mxu0
    %v672 = vadd.f32 0.0, %v671
    %673 = vdwg.mxu0
    %674 = vmatprep.subr.mxu0 %v49
    %675 = vmatpush1.msra.mxu0 %v48
    %676 = vmatprep.subr.mxu0 %v53
    %677 = vmatpush1.msra.mxu0 %v52
    %678 = vmatprep.subr.mxu0 %v57
    %679 = vmatpush1.msra.mxu0 %v56
    %680 = vmatprep.subr.mxu0 %v61
    %681 = vmatpush1.msra.mxu0 %v60
    %682 = vmatprep.subr.mxu0 %v65
    %683 = vmatpush1.msra.mxu0 %v64
    %684 = vmatprep.subr.mxu0 %v69
    %685 = vmatpush1.msra.mxu0 %v68
    %686 = vmatprep.subr.mxu0 %v73
    %687 = vmatpush1.msra.mxu0 %v72
    %688 = vmatprep.subr.mxu0 %v77
    %689 = vmatpush1.msra.mxu0 %v76
    %690 = vmatprep.subr.mxu0 %v81
    %691 = vmatpush1.msra.mxu0 %v80
    %692 = vmatprep.subr.mxu0 %v85
    %693 = vmatpush1.msra.mxu0 %v84
    %694 = vmatprep.subr.mxu0 %v89
    %695 = vmatpush1.msra.mxu0 %v88
    %696 = vmatprep.subr.mxu0 %v93
    %697 = vmatpush1.msra.mxu0 %v92
    %698 = vmatprep.subr.mxu0 %v97
    %699 = vmatpush1.msra.mxu0 %v96
    %700 = vmatprep.subr.mxu0 %v101
    %701 = vmatpush1.msra.mxu0 %v100
    %702 = vmatprep.subr.mxu0 %v105
    %703 = vmatpush1.msra.mxu0 %v104
    %704 = vmatprep.subr.mxu0 %v109
    %705 = vmatpush1.msra.mxu0 %v108
    %706 = vmatprep.subr.mxu0 0.0
    %707 = vmatpush1.msra.mxu0 0.0
    %708 = vmatprep.subr.mxu0 0.0
    %709 = vmatpush1.msra.mxu0 0.0
    %710 = vmatprep.subr.mxu0 0.0
    %711 = vmatpush1.msra.mxu0 0.0
    %712 = vmatprep.subr.mxu0 0.0
    %713 = vmatpush1.msra.mxu0 0.0
    %714 = vmatprep.subr.mxu0 0.0
    %715 = vmatpush1.msra.mxu0 0.0
    %716 = vmatprep.subr.mxu0 0.0
    %717 = vmatpush1.msra.mxu0 0.0
    %718 = vmatprep.subr.mxu0 0.0
    %719 = vmatpush1.msra.mxu0 0.0
    %720 = vmatprep.subr.mxu0 0.0
    %721 = vmatpush1.msra.mxu0 0.0
    %722 = vmatprep.subr.mxu0 0.0
    %723 = vmatpush1.msra.mxu0 0.0
    %724 = vmatprep.subr.mxu0 0.0
    %725 = vmatpush1.msra.mxu0 0.0
    %726 = vmatprep.subr.mxu0 0.0
    %727 = vmatpush1.msra.mxu0 0.0
    %728 = vmatprep.subr.mxu0 0.0
    %729 = vmatpush1.msra.mxu0 0.0
    %730 = vmatprep.subr.mxu0 0.0
    %731 = vmatpush1.msra.mxu0 0.0
    %732 = vmatprep.subr.mxu0 0.0
    %733 = vmatpush1.msra.mxu0 0.0
    %734 = vmatprep.subr.mxu0 0.0
    %735 = vmatpush1.msra.mxu0 0.0
    %736 = vmatprep.subr.mxu0 0.0
    %737 = vmatpush1.msra.mxu0 0.0
    %738 = vmatprep.mubr.f32.mxu0 0.0
    %739 = vmatmul.mubr.f32.gmra.mrb[0].mxu0 %v595
    %v740 = vpop.f32.mrb[0].mxu0
    %v741 = vadd.f32 0.0, %v740
    %v742 = vpop.f32.mrb[0].mxu0
    %v743 = vadd.f32 0.0, %v742
    %744 = vdwg.mxu0
    %v745 = vadd.f32 %v599, %v670
    %v746 = vadd.f32 %v600, %v672
    %v747 = vadd.f32 %v601, %v741
    %v748 = vadd.f32 %v602, %v743
    %v749 = vmul.f32 %v745, 0.5
    %v750 = vtanh.pop %v749
    %v751 = vmul.f32 %v750, 0.5
    %v752 = vadd.f32 %v751, 0.5
    %v753 = vmul.f32 %v746, 0.5
    %v754 = vtanh.pop %v753
    %v755 = vmul.f32 %v754, 0.5
    %v756 = vadd.f32 %v755, 0.5
    %v757 = vtanh.pop %v747
    %v758 = vmul.f32 %v748, 0.5
    %v759 = vtanh.pop %v758
    %v760 = vmul.f32 %v759, 0.5
    %v761 = vadd.f32 %v760, 0.5
    %v762 = vmul.f32 %v756, %v593
    %v763 = vmul.f32 %v752, %v757
    %v764 = vadd.f32 %v762, %v763
    %v765 = vtanh.pop %v764
    %v766 = vmul.f32 %v761, %v765
    %s767 = smul.u32 2, 4
    %s768 = smul.addr %s767, 8
    %s769 = scalar_lea.vmem [#allocation2], %s768
    %v770 = vld [vmem:[%s769] sm:$0xff]
    %v771 = vld [vmem:[%s769 + $0x8] sm:$0xff]
    %v772 = vld [vmem:[%s769 + $0x10] sm:$0xff]
    %v773 = vld [vmem:[%s769 + $0x18] sm:$0xff]
    %774 = vmatprep.subr.mxu0 %v47
    %775 = vmatpush1.msra.mxu0 %v46
    %776 = vmatprep.subr.mxu0 %v51
    %777 = vmatpush1.msra.mxu0 %v50
    %778 = vmatprep.subr.mxu0 %v55
    %779 = vmatpush1.msra.mxu0 %v54
    %780 = vmatprep.subr.mxu0 %v59
    %781 = vmatpush1.msra.mxu0 %v58
    %782 = vmatprep.subr.mxu0 %v63
    %783 = vmatpush1.msra.mxu0 %v62
    %784 = vmatprep.subr.mxu0 %v67
    %785 = vmatpush1.msra.mxu0 %v66
    %786 = vmatprep.subr.mxu0 %v71
    %787 = vmatpush1.msra.mxu0 %v70
    %788 = vmatprep.subr.mxu0 %v75
    %789 = vmatpush1.msra.mxu0 %v74
    %790 = vmatprep.subr.mxu0 %v79
    %791 = vmatpush1.msra.mxu0 %v78
    %792 = vmatprep.subr.mxu0 %v83
    %793 = vmatpush1.msra.mxu0 %v82
    %794 = vmatprep.subr.mxu0 %v87
    %795 = vmatpush1.msra.mxu0 %v86
    %796 = vmatprep.subr.mxu0 %v91
    %797 = vmatpush1.msra.mxu0 %v90
    %798 = vmatprep.subr.mxu0 %v95
    %799 = vmatpush1.msra.mxu0 %v94
    %800 = vmatprep.subr.mxu0 %v99
    %801 = vmatpush1.msra.mxu0 %v98
    %802 = vmatprep.subr.mxu0 %v103
    %803 = vmatpush1.msra.mxu0 %v102
    %804 = vmatprep.subr.mxu0 %v107
    %805 = vmatpush1.msra.mxu0 %v106
    %806 = vmatprep.subr.mxu0 0.0
    %807 = vmatpush1.msra.mxu0 0.0
    %808 = vmatprep.subr.mxu0 0.0
    %809 = vmatpush1.msra.mxu0 0.0
    %810 = vmatprep.subr.mxu0 0.0
    %811 = vmatpush1.msra.mxu0 0.0
    %812 = vmatprep.subr.mxu0 0.0
    %813 = vmatpush1.msra.mxu0 0.0
    %814 = vmatprep.subr.mxu0 0.0
    %815 = vmatpush1.msra.mxu0 0.0
    %816 = vmatprep.subr.mxu0 0.0
    %817 = vmatpush1.msra.mxu0 0.0
    %818 = vmatprep.subr.mxu0 0.0
    %819 = vmatpush1.msra.mxu0 0.0
    %820 = vmatprep.subr.mxu0 0.0
    %821 = vmatpush1.msra.mxu0 0.0
    %822 = vmatprep.subr.mxu0 0.0
    %823 = vmatpush1.msra.mxu0 0.0
    %824 = vmatprep.subr.mxu0 0.0
    %825 = vmatpush1.msra.mxu0 0.0
    %826 = vmatprep.subr.mxu0 0.0
    %827 = vmatpush1.msra.mxu0 0.0
    %828 = vmatprep.subr.mxu0 0.0
    %829 = vmatpush1.msra.mxu0 0.0
    %830 = vmatprep.subr.mxu0 0.0
    %831 = vmatpush1.msra.mxu0 0.0
    %832 = vmatprep.subr.mxu0 0.0
    %833 = vmatpush1.msra.mxu0 0.0
    %834 = vmatprep.subr.mxu0 0.0
    %835 = vmatpush1.msra.mxu0 0.0
    %836 = vmatprep.subr.mxu0 0.0
    %837 = vmatpush1.msra.mxu0 0.0
    %838 = vmatprep.mubr.f32.mxu0 0.0
    %839 = vmatmul.mubr.f32.gmra.mrb[0].mxu0 %v766
    %v840 = vpop.f32.mrb[0].mxu0
    %v841 = vadd.f32 0.0, %v840
    %v842 = vpop.f32.mrb[0].mxu0
    %v843 = vadd.f32 0.0, %v842
    %844 = vdwg.mxu0
    %845 = vmatprep.subr.mxu0 %v49
    %846 = vmatpush1.msra.mxu0 %v48
    %847 = vmatprep.subr.mxu0 %v53
    %848 = vmatpush1.msra.mxu0 %v52
    %849 = vmatprep.subr.mxu0 %v57
    %850 = vmatpush1.msra.mxu0 %v56
    %851 = vmatprep.subr.mxu0 %v61
    %852 = vmatpush1.msra.mxu0 %v60
    %853 = vmatprep.subr.mxu0 %v65
    %854 = vmatpush1.msra.mxu0 %v64
    %855 = vmatprep.subr.mxu0 %v69
    %856 = vmatpush1.msra.mxu0 %v68
    %857 = vmatprep.subr.mxu0 %v73
    %858 = vmatpush1.msra.mxu0 %v72
    %859 = vmatprep.subr.mxu0 %v77
    %860 = vmatpush1.msra.mxu0 %v76
    %861 = vmatprep.subr.mxu0 %v81
    %862 = vmatpush1.msra.mxu0 %v80
    %863 = vmatprep.subr.mxu0 %v85
    %864 = vmatpush1.msra.mxu0 %v84
    %865 = vmatprep.subr.mxu0 %v89
    %866 = vmatpush1.msra.mxu0 %v88
    %867 = vmatprep.subr.mxu0 %v93
    %868 = vmatpush1.msra.mxu0 %v92
    %869 = vmatprep.subr.mxu0 %v97
    %870 = vmatpush1.msra.mxu0 %v96
    %871 = vmatprep.subr.mxu0 %v101
    %872 = vmatpush1.msra.mxu0 %v100
    %873 = vmatprep.subr.mxu0 %v105
    %874 = vmatpush1.msra.mxu0 %v104
    %875 = vmatprep.subr.mxu0 %v109
    %876 = vmatpush1.msra.mxu0 %v108
    %877 = vmatprep.subr.mxu0 0.0
    %878 = vmatpush1.msra.mxu0 0.0
    %879 = vmatprep.subr.mxu0 0.0
    %880 = vmatpush1.msra.mxu0 0.0
    %881 = vmatprep.subr.mxu0 0.0
    %882 = vmatpush1.msra.mxu0 0.0
    %883 = vmatprep.subr.mxu0 0.0
    %884 = vmatpush1.msra.mxu0 0.0
    %885 = vmatprep.subr.mxu0 0.0
    %886 = vmatpush1.msra.mxu0 0.0
    %887 = vmatprep.subr.mxu0 0.0
    %888 = vmatpush1.msra.mxu0 0.0
    %889 = vmatprep.subr.mxu0 0.0
    %890 = vmatpush1.msra.mxu0 0.0
    %891 = vmatprep.subr.mxu0 0.0
    %892 = vmatpush1.msra.mxu0 0.0
    %893 = vmatprep.subr.mxu0 0.0
    %894 = vmatpush1.msra.mxu0 0.0
    %895 = vmatprep.subr.mxu0 0.0
    %896 = vmatpush1.msra.mxu0 0.0
    %897 = vmatprep.subr.mxu0 0.0
    %898 = vmatpush1.msra.mxu0 0.0
    %899 = vmatprep.subr.mxu0 0.0
    %900 = vmatpush1.msra.mxu0 0.0
    %901 = vmatprep.subr.mxu0 0.0
    %902 = vmatpush1.msra.mxu0 0.0
    %903 = vmatprep.subr.mxu0 0.0
    %904 = vmatpush1.msra.mxu0 0.0
    %905 = vmatprep.subr.mxu0 0.0
    %906 = vmatpush1.msra.mxu0 0.0
    %907 = vmatprep.subr.mxu0 0.0
    %908 = vmatpush1.msra.mxu0 0.0
    %909 = vmatprep.mubr.f32.mxu0 0.0
    %910 = vmatmul.mubr.f32.gmra.mrb[0].mxu0 %v766
    %v911 = vpop.f32.mrb[0].mxu0
    %v912 = vadd.f32 0.0, %v911
    %v913 = vpop.f32.mrb[0].mxu0
    %v914 = vadd.f32 0.0, %v913
    %915 = vdwg.mxu0
    %v916 = vadd.f32 %v770, %v841
    %v917 = vadd.f32 %v771, %v843
    %v918 = vadd.f32 %v772, %v912
    %v919 = vadd.f32 %v773, %v914
    %v920 = vmul.f32 %v916, 0.5
    %v921 = vtanh.pop %v920
    %v922 = vmul.f32 %v921, 0.5
    %v923 = vadd.f32 %v922, 0.5
    %v924 = vmul.f32 %v917, 0.5
    %v925 = vtanh.pop %v924
    %v926 = vmul.f32 %v925, 0.5
    %v927 = vadd.f32 %v926, 0.5
    %v928 = vtanh.pop %v918
    %v929 = vmul.f32 %v919, 0.5
    %v930 = vtanh.pop %v929
    %v931 = vmul.f32 %v930, 0.5
    %v932 = vadd.f32 %v931, 0.5
    %v933 = vmul.f32 %v927, %v764
    %v934 = vmul.f32 %v923, %v928
    %v935 = vadd.f32 %v933, %v934
    %v936 = vtanh.pop %v935
    %v937 = vmul.f32 %v932, %v936
    %s938 = smul.u32 3, 4
    %s939 = smul.addr %s938, 8
    %s940 = scalar_lea.vmem [#allocation2], %s939
    %v941 = vld [vmem:[%s940] sm:$0xff]
    %v942 = vld [vmem:[%s940 + $0x8] sm:$0xff]
    %v943 = vld [vmem:[%s940 + $0x10] sm:$0xff]
    %v944 = vld [vmem:[%s940 + $0x18] sm:$0xff]
    %945 = vmatprep.subr.mxu0 %v47
    %946 = vmatpush1.msra.mxu0 %v46
    %947 = vmatprep.subr.mxu0 %v51
    %948 = vmatpush1.msra.mxu0 %v50
    %949 = vmatprep.subr.mxu0 %v55
    %950 = vmatpush1.msra.mxu0 %v54
    %951 = vmatprep.subr.mxu0 %v59
    %952 = vmatpush1.msra.mxu0 %v58
    %953 = vmatprep.subr.mxu0 %v63
    %954 = vmatpush1.msra.mxu0 %v62
    %955 = vmatprep.subr.mxu0 %v67
    %956 = vmatpush1.msra.mxu0 %v66
    %957 = vmatprep.subr.mxu0 %v71
    %958 = vmatpush1.msra.mxu0 %v70
    %959 = vmatprep.subr.mxu0 %v75
    %960 = vmatpush1.msra.mxu0 %v74
    %961 = vmatprep.subr.mxu0 %v79
    %962 = vmatpush1.msra.mxu0 %v78
    %963 = vmatprep.subr.mxu0 %v83
    %964 = vmatpush1.msra.mxu0 %v82
    %965 = vmatprep.subr.mxu0 %v87
    %966 = vmatpush1.msra.mxu0 %v86
    %967 = vmatprep.subr.mxu0 %v91
    %968 = vmatpush1.msra.mxu0 %v90
    %969 = vmatprep.subr.mxu0 %v95
    %970 = vmatpush1.msra.mxu0 %v94
    %971 = vmatprep.subr.mxu0 %v99
    %972 = vmatpush1.msra.mxu0 %v98
    %973 = vmatprep.subr.mxu0 %v103
    %974 = vmatpush1.msra.mxu0 %v102
    %975 = vmatprep.subr.mxu0 %v107
    %976 = vmatpush1.msra.mxu0 %v106
    %977 = vmatprep.subr.mxu0 0.0
    %978 = vmatpush1.msra.mxu0 0.0
    %979 = vmatprep.subr.mxu0 0.0
    %980 = vmatpush1.msra.mxu0 0.0
    %981 = vmatprep.subr.mxu0 0.0
    %982 = vmatpush1.msra.mxu0 0.0
    %983 = vmatprep.subr.mxu0 0.0
    %984 = vmatpush1.msra.mxu0 0.0
    %985 = vmatprep.subr.mxu0 0.0
    %986 = vmatpush1.msra.mxu0 0.0
    %987 = vmatprep.subr.mxu0 0.0
    %988 = vmatpush1.msra.mxu0 0.0
    %989 = vmatprep.subr.mxu0 0.0
    %990 = vmatpush1.msra.mxu0 0.0
    %991 = vmatprep.subr.mxu0 0.0
    %992 = vmatpush1.msra.mxu0 0.0
    %993 = vmatprep.subr.mxu0 0.0
    %994 = vmatpush1.msra.mxu0 0.0
    %995 = vmatprep.subr.mxu0 0.0
    %996 = vmatpush1.msra.mxu0 0.0
    %997 = vmatprep.subr.mxu0 0.0
    %998 = vmatpush1.msra.mxu0 0.0
    %999 = vmatprep.subr.mxu0 0.0
    %1000 = vmatpush1.msra.mxu0 0.0
    %1001 = vmatprep.subr.mxu0 0.0
    %1002 = vmatpush1.msra.mxu0 0.0
    %1003 = vmatprep.subr.mxu0 0.0
    %1004 = vmatpush1.msra.mxu0 0.0
    %1005 = vmatprep.subr.mxu0 0.0
    %1006 = vmatpush1.msra.mxu0 0.0
    %1007 = vmatprep.subr.mxu0 0.0
    %1008 = vmatpush1.msra.mxu0 0.0
    %1009 = vmatprep.mubr.f32.mxu0 0.0
    %1010 = vmatmul.mubr.f32.gmra.mrb[0].mxu0 %v937
    %v1011 = vpop.f32.mrb[0].mxu0
    %v1012 = vadd.f32 0.0, %v1011
    %v1013 = vpop.f32.mrb[0].mxu0
    %v1014 = vadd.f32 0.0, %v1013
    %1015 = vdwg.mxu0
    %1016 = vmatprep.subr.mxu0 %v49
    %1017 = vmatpush1.msra.mxu0 %v48
    %1018 = vmatprep.subr.mxu0 %v53
    %1019 = vmatpush1.msra.mxu0 %v52
    %1020 = vmatprep.subr.mxu0 %v57
    %1021 = vmatpush1.msra.mxu0 %v56
    %1022 = vmatprep.subr.mxu0 %v61
    %1023 = vmatpush1.msra.mxu0 %v60
    %1024 = vmatprep.subr.mxu0 %v65
    %1025 = vmatpush1.msra.mxu0 %v64
    %1026 = vmatprep.subr.mxu0 %v69
    %1027 = vmatpush1.msra.mxu0 %v68
    %1028 = vmatprep.subr.mxu0 %v73
    %1029 = vmatpush1.msra.mxu0 %v72
    %1030 = vmatprep.subr.mxu0 %v77
    %1031 = vmatpush1.msra.mxu0 %v76
    %1032 = vmatprep.subr.mxu0 %v81
    %1033 = vmatpush1.msra.mxu0 %v80
    %1034 = vmatprep.subr.mxu0 %v85
    %1035 = vmatpush1.msra.mxu0 %v84
    %1036 = vmatprep.subr.mxu0 %v89
    %1037 = vmatpush1.msra.mxu0 %v88
    %1038 = vmatprep.subr.mxu0 %v93
    %1039 = vmatpush1.msra.mxu0 %v92
    %1040 = vmatprep.subr.mxu0 %v97
    %1041 = vmatpush1.msra.mxu0 %v96
    %1042 = vmatprep.subr.mxu0 %v101
    %1043 = vmatpush1.msra.mxu0 %v100
    %1044 = vmatprep.subr.mxu0 %v105
    %1045 = vmatpush1.msra.mxu0 %v104
    %1046 = vmatprep.subr.mxu0 %v109
    %1047 = vmatpush1.msra.mxu0 %v108
    %1048 = vmatprep.subr.mxu0 0.0
    %1049 = vmatpush1.msra.mxu0 0.0
    %1050 = vmatprep.subr.mxu0 0.0
    %1051 = vmatpush1.msra.mxu0 0.0
    %1052 = vmatprep.subr.mxu0 0.0
    %1053 = vmatpush1.msra.mxu0 0.0
    %1054 = vmatprep.subr.mxu0 0.0
    %1055 = vmatpush1.msra.mxu0 0.0
    %1056 = vmatprep.subr.mxu0 0.0
    %1057 = vmatpush1.msra.mxu0 0.0
    %1058 = vmatprep.subr.mxu0 0.0
    %1059 = vmatpush1.msra.mxu0 0.0
    %1060 = vmatprep.subr.mxu0 0.0
    %1061 = vmatpush1.msra.mxu0 0.0
    %1062 = vmatprep.subr.mxu0 0.0
    %1063 = vmatpush1.msra.mxu0 0.0
    %1064 = vmatprep.subr.mxu0 0.0
    %1065 = vmatpush1.msra.mxu0 0.0
    %1066 = vmatprep.subr.mxu0 0.0
    %1067 = vmatpush1.msra.mxu0 0.0
    %1068 = vmatprep.subr.mxu0 0.0
    %1069 = vmatpush1.msra.mxu0 0.0
    %1070 = vmatprep.subr.mxu0 0.0
    %1071 = vmatpush1.msra.mxu0 0.0
    %1072 = vmatprep.subr.mxu0 0.0
    %1073 = vmatpush1.msra.mxu0 0.0
    %1074 = vmatprep.subr.mxu0 0.0
    %1075 = vmatpush1.msra.mxu0 0.0
    %1076 = vmatprep.subr.mxu0 0.0
    %1077 = vmatpush1.msra.mxu0 0.0
    %1078 = vmatprep.subr.mxu0 0.0
    %1079 = vmatpush1.msra.mxu0 0.0
    %1080 = vmatprep.mubr.f32.mxu0 0.0
    %1081 = vmatmul.mubr.f32.gmra.mrb[0].mxu0 %v937
    %v1082 = vpop.f32.mrb[0].mxu0
    %v1083 = vadd.f32 0.0, %v1082
    %v1084 = vpop.f32.mrb[0].mxu0
    %v1085 = vadd.f32 0.0, %v1084
    %1086 = vdwg.mxu0
    %v1087 = vadd.f32 %v941, %v1012
    %v1088 = vadd.f32 %v942, %v1014
    %v1089 = vadd.f32 %v943, %v1083
    %v1090 = vadd.f32 %v944, %v1085
    %v1091 = vmul.f32 %v1087, 0.5
    %v1092 = vtanh.pop %v1091
    %v1093 = vmul.f32 %v1092, 0.5
    %v1094 = vadd.f32 %v1093, 0.5
    %v1095 = vmul.f32 %v1088, 0.5
    %v1096 = vtanh.pop %v1095
    %v1097 = vmul.f32 %v1096, 0.5
    %v1098 = vadd.f32 %v1097, 0.5
    %v1099 = vtanh.pop %v1089
    %v1100 = vmul.f32 %v1090, 0.5
    %v1101 = vtanh.pop %v1100
    %v1102 = vmul.f32 %v1101, 0.5
    %v1103 = vadd.f32 %v1102, 0.5
    %v1104 = vmul.f32 %v1098, %v935
    %v1105 = vmul.f32 %v1094, %v1099
    %v1106 = vadd.f32 %v1104, %v1105
    %v1107 = vtanh.pop %v1106
    %v1108 = vmul.f32 %v1103, %v1107
    %s1109 = smul.u32 4, 4
    %s1110 = smul.addr %s1109, 8
    %s1111 = scalar_lea.vmem [#allocation2], %s1110
    %v1112 = vld [vmem:[%s1111] sm:$0xff]
    %v1113 = vld [vmem:[%s1111 + $0x8] sm:$0xff]
    %v1114 = vld [vmem:[%s1111 + $0x10] sm:$0xff]
    %v1115 = vld [vmem:[%s1111 + $0x18] sm:$0xff]
    %1116 = vmatprep.subr.mxu0 %v47
    %1117 = vmatpush1.msra.mxu0 %v46
    %1118 = vmatprep.subr.mxu0 %v51
    %1119 = vmatpush1.msra.mxu0 %v50
    %1120 = vmatprep.subr.mxu0 %v55
    %1121 = vmatpush1.msra.mxu0 %v54
    %1122 = vmatprep.subr.mxu0 %v59
    %1123 = vmatpush1.msra.mxu0 %v58
    %1124 = vmatprep.subr.mxu0 %v63
    %1125 = vmatpush1.msra.mxu0 %v62
    %1126 = vmatprep.subr.mxu0 %v67
    %1127 = vmatpush1.msra.mxu0 %v66
    %1128 = vmatprep.subr.mxu0 %v71
    %1129 = vmatpush1.msra.mxu0 %v70
    %1130 = vmatprep.subr.mxu0 %v75
    %1131 = vmatpush1.msra.mxu0 %v74
    %1132 = vmatprep.subr.mxu0 %v79
    %1133 = vmatpush1.msra.mxu0 %v78
    %1134 = vmatprep.subr.mxu0 %v83
    %1135 = vmatpush1.msra.mxu0 %v82
    %1136 = vmatprep.subr.mxu0 %v87
    %1137 = vmatpush1.msra.mxu0 %v86
    %1138 = vmatprep.subr.mxu0 %v91
    %1139 = vmatpush1.msra.mxu0 %v90
    %1140 = vmatprep.subr.mxu0 %v95
    %1141 = vmatpush1.msra.mxu0 %v94
    %1142 = vmatprep.subr.mxu0 %v99
    %1143 = vmatpush1.msra.mxu0 %v98
    %1144 = vmatprep.subr.mxu0 %v103
    %1145 = vmatpush1.msra.mxu0 %v102
    %1146 = vmatprep.subr.mxu0 %v107
    %1147 = vmatpush1.msra.mxu0 %v106
    %1148 = vmatprep.subr.mxu0 0.0
    %1149 = vmatpush1.msra.mxu0 0.0
    %1150 = vmatprep.subr.mxu0 0.0
    %1151 = vmatpush1.msra.mxu0 0.0
    %1152 = vmatprep.subr.mxu0 0.0
    %1153 = vmatpush1.msra.mxu0 0.0
    %1154 = vmatprep.subr.mxu0 0.0
    %1155 = vmatpush1.msra.mxu0 0.0
    %1156 = vmatprep.subr.mxu0 0.0
    %1157 = vmatpush1.msra.mxu0 0.0
    %1158 = vmatprep.subr.mxu0 0.0
    %1159 = vmatpush1.msra.mxu0 0.0
    %1160 = vmatprep.subr.mxu0 0.0
    %1161 = vmatpush1.msra.mxu0 0.0
    %1162 = vmatprep.subr.mxu0 0.0
    %1163 = vmatpush1.msra.mxu0 0.0
    %1164 = vmatprep.subr.mxu0 0.0
    %1165 = vmatpush1.msra.mxu0 0.0
    %1166 = vmatprep.subr.mxu0 0.0
    %1167 = vmatpush1.msra.mxu0 0.0
    %1168 = vmatprep.subr.mxu0 0.0
    %1169 = vmatpush1.msra.mxu0 0.0
    %1170 = vmatprep.subr.mxu0 0.0
    %1171 = vmatpush1.msra.mxu0 0.0
    %1172 = vmatprep.subr.mxu0 0.0
    %1173 = vmatpush1.msra.mxu0 0.0
    %1174 = vmatprep.subr.mxu0 0.0
    %1175 = vmatpush1.msra.mxu0 0.0
    %1176 = vmatprep.subr.mxu0 0.0
    %1177 = vmatpush1.msra.mxu0 0.0
    %1178 = vmatprep.subr.mxu0 0.0
    %1179 = vmatpush1.msra.mxu0 0.0
    %1180 = vmatprep.mubr.f32.mxu0 0.0
    %1181 = vmatmul.mubr.f32.gmra.mrb[0].mxu0 %v1108
    %v1182 = vpop.f32.mrb[0].mxu0
    %v1183 = vadd.f32 0.0, %v1182
    %v1184 = vpop.f32.mrb[0].mxu0
    %v1185 = vadd.f32 0.0, %v1184
    %1186 = vdwg.mxu0
    %1187 = vmatprep.subr.mxu0 %v49
    %1188 = vmatpush1.msra.mxu0 %v48
    %1189 = vmatprep.subr.mxu0 %v53
    %1190 = vmatpush1.msra.mxu0 %v52
    %1191 = vmatprep.subr.mxu0 %v57
    %1192 = vmatpush1.msra.mxu0 %v56
    %1193 = vmatprep.subr.mxu0 %v61
    %1194 = vmatpush1.msra.mxu0 %v60
    %1195 = vmatprep.subr.mxu0 %v65
    %1196 = vmatpush1.msra.mxu0 %v64
    %1197 = vmatprep.subr.mxu0 %v69
    %1198 = vmatpush1.msra.mxu0 %v68
    %1199 = vmatprep.subr.mxu0 %v73
    %1200 = vmatpush1.msra.mxu0 %v72
    %1201 = vmatprep.subr.mxu0 %v77
    %1202 = vmatpush1.msra.mxu0 %v76
    %1203 = vmatprep.subr.mxu0 %v81
    %1204 = vmatpush1.msra.mxu0 %v80
    %1205 = vmatprep.subr.mxu0 %v85
    %1206 = vmatpush1.msra.mxu0 %v84
    %1207 = vmatprep.subr.mxu0 %v89
    %1208 = vmatpush1.msra.mxu0 %v88
    %1209 = vmatprep.subr.mxu0 %v93
    %1210 = vmatpush1.msra.mxu0 %v92
    %1211 = vmatprep.subr.mxu0 %v97
    %1212 = vmatpush1.msra.mxu0 %v96
    %1213 = vmatprep.subr.mxu0 %v101
    %1214 = vmatpush1.msra.mxu0 %v100
    %1215 = vmatprep.subr.mxu0 %v105
    %1216 = vmatpush1.msra.mxu0 %v104
    %1217 = vmatprep.subr.mxu0 %v109
    %1218 = vmatpush1.msra.mxu0 %v108
    %1219 = vmatprep.subr.mxu0 0.0
    %1220 = vmatpush1.msra.mxu0 0.0
    %1221 = vmatprep.subr.mxu0 0.0
    %1222 = vmatpush1.msra.mxu0 0.0
    %1223 = vmatprep.subr.mxu0 0.0
    %1224 = vmatpush1.msra.mxu0 0.0
    %1225 = vmatprep.subr.mxu0 0.0
    %1226 = vmatpush1.msra.mxu0 0.0
    %1227 = vmatprep.subr.mxu0 0.0
    %1228 = vmatpush1.msra.mxu0 0.0
    %1229 = vmatprep.subr.mxu0 0.0
    %1230 = vmatpush1.msra.mxu0 0.0
    %1231 = vmatprep.subr.mxu0 0.0
    %1232 = vmatpush1.msra.mxu0 0.0
    %1233 = vmatprep.subr.mxu0 0.0
    %1234 = vmatpush1.msra.mxu0 0.0
    %1235 = vmatprep.subr.mxu0 0.0
    %1236 = vmatpush1.msra.mxu0 0.0
    %1237 = vmatprep.subr.mxu0 0.0
    %1238 = vmatpush1.msra.mxu0 0.0
    %1239 = vmatprep.subr.mxu0 0.0
    %1240 = vmatpush1.msra.mxu0 0.0
    %1241 = vmatprep.subr.mxu0 0.0
    %1242 = vmatpush1.msra.mxu0 0.0
    %1243 = vmatprep.subr.mxu0 0.0
    %1244 = vmatpush1.msra.mxu0 0.0
    %1245 = vmatprep.subr.mxu0 0.0
    %1246 = vmatpush1.msra.mxu0 0.0
    %1247 = vmatprep.subr.mxu0 0.0
    %1248 = vmatpush1.msra.mxu0 0.0
    %1249 = vmatprep.subr.mxu0 0.0
    %1250 = vmatpush1.msra.mxu0 0.0
    %1251 = vmatprep.mubr.f32.mxu0 0.0
    %1252 = vmatmul.mubr.f32.gmra.mrb[0].mxu0 %v1108
    %v1253 = vpop.f32.mrb[0].mxu0
    %v1254 = vadd.f32 0.0, %v1253
    %v1255 = vpop.f32.mrb[0].mxu0
    %v1256 = vadd.f32 0.0, %v1255
    %1257 = vdwg.mxu0
    %v1258 = vadd.f32 %v1112, %v1183
    %v1259 = vadd.f32 %v1113, %v1185
    %v1260 = vadd.f32 %v1114, %v1254
    %v1261 = vadd.f32 %v1115, %v1256
    %v1262 = vmul.f32 %v1258, 0.5
    %v1263 = vtanh.pop %v1262
    %v1264 = vmul.f32 %v1263, 0.5
    %v1265 = vadd.f32 %v1264, 0.5
    %v1266 = vmul.f32 %v1259, 0.5
    %v1267 = vtanh.pop %v1266
    %v1268 = vmul.f32 %v1267, 0.5
    %v1269 = vadd.f32 %v1268, 0.5
    %v1270 = vtanh.pop %v1260
    %v1271 = vmul.f32 %v1261, 0.5
    %v1272 = vtanh.pop %v1271
    %v1273 = vmul.f32 %v1272, 0.5
    %v1274 = vadd.f32 %v1273, 0.5
    %v1275 = vmul.f32 %v1269, %v1106
    %v1276 = vmul.f32 %v1265, %v1270
    %v1277 = vadd.f32 %v1275, %v1276
    %v1278 = vtanh.pop %v1277
    %v1279 = vmul.f32 %v1274, %v1278
    %s1280 = smul.u32 5, 4
    %s1281 = smul.addr %s1280, 8
    %s1282 = scalar_lea.vmem [#allocation2], %s1281
    %v1283 = vld [vmem:[%s1282] sm:$0xff]
    %v1284 = vld [vmem:[%s1282 + $0x8] sm:$0xff]
    %v1285 = vld [vmem:[%s1282 + $0x10] sm:$0xff]
    %v1286 = vld [vmem:[%s1282 + $0x18] sm:$0xff]
    %1287 = vmatprep.subr.mxu0 %v47
    %1288 = vmatpush1.msra.mxu0 %v46
    %1289 = vmatprep.subr.mxu0 %v51
    %1290 = vmatpush1.msra.mxu0 %v50
    %1291 = vmatprep.subr.mxu0 %v55
    %1292 = vmatpush1.msra.mxu0 %v54
    %1293 = vmatprep.subr.mxu0 %v59
    %1294 = vmatpush1.msra.mxu0 %v58
    %1295 = vmatprep.subr.mxu0 %v63
    %1296 = vmatpush1.msra.mxu0 %v62
    %1297 = vmatprep.subr.mxu0 %v67
    %1298 = vmatpush1.msra.mxu0 %v66
    %1299 = vmatprep.subr.mxu0 %v71
    %1300 = vmatpush1.msra.mxu0 %v70
    %1301 = vmatprep.subr.mxu0 %v75
    %1302 = vmatpush1.msra.mxu0 %v74
    %1303 = vmatprep.subr.mxu0 %v79
    %1304 = vmatpush1.msra.mxu0 %v78
    %1305 = vmatprep.subr.mxu0 %v83
    %1306 = vmatpush1.msra.mxu0 %v82
    %1307 = vmatprep.subr.mxu0 %v87
    %1308 = vmatpush1.msra.mxu0 %v86
    %1309 = vmatprep.subr.mxu0 %v91
    %1310 = vmatpush1.msra.mxu0 %v90
    %1311 = vmatprep.subr.mxu0 %v95
    %1312 = vmatpush1.msra.mxu0 %v94
    %1313 = vmatprep.subr.mxu0 %v99
    %1314 = vmatpush1.msra.mxu0 %v98
    %1315 = vmatprep.subr.mxu0 %v103
    %1316 = vmatpush1.msra.mxu0 %v102
    %1317 = vmatprep.subr.mxu0 %v107
    %1318 = vmatpush1.msra.mxu0 %v106
    %1319 = vmatprep.subr.mxu0 0.0
    %1320 = vmatpush1.msra.mxu0 0.0
    %1321 = vmatprep.subr.mxu0 0.0
    %1322 = vmatpush1.msra.mxu0 0.0
    %1323 = vmatprep.subr.mxu0 0.0
    %1324 = vmatpush1.msra.mxu0 0.0
    %1325 = vmatprep.subr.mxu0 0.0
    %1326 = vmatpush1.msra.mxu0 0.0
    %1327 = vmatprep.subr.mxu0 0.0
    %1328 = vmatpush1.msra.mxu0 0.0
    %1329 = vmatprep.subr.mxu0 0.0
    %1330 = vmatpush1.msra.mxu0 0.0
    %1331 = vmatprep.subr.mxu0 0.0
    %1332 = vmatpush1.msra.mxu0 0.0
    %1333 = vmatprep.subr.mxu0 0.0
    %1334 = vmatpush1.msra.mxu0 0.0
    %1335 = vmatprep.subr.mxu0 0.0
    %1336 = vmatpush1.msra.mxu0 0.0
    %1337 = vmatprep.subr.mxu0 0.0
    %1338 = vmatpush1.msra.mxu0 0.0
    %1339 = vmatprep.subr.mxu0 0.0
    %1340 = vmatpush1.msra.mxu0 0.0
    %1341 = vmatprep.subr.mxu0 0.0
    %1342 = vmatpush1.msra.mxu0 0.0
    %1343 = vmatprep.subr.mxu0 0.0
    %1344 = vmatpush1.msra.mxu0 0.0
    %1345 = vmatprep.subr.mxu0 0.0
    %1346 = vmatpush1.msra.mxu0 0.0
    %1347 = vmatprep.subr.mxu0 0.0
    %1348 = vmatpush1.msra.mxu0 0.0
    %1349 = vmatprep.subr.mxu0 0.0
    %1350 = vmatpush1.msra.mxu0 0.0
    %1351 = vmatprep.mubr.f32.mxu0 0.0
    %1352 = vmatmul.mubr.f32.gmra.mrb[0].mxu0 %v1279
    %v1353 = vpop.f32.mrb[0].mxu0
    %v1354 = vadd.f32 0.0, %v1353
    %v1355 = vpop.f32.mrb[0].mxu0
    %v1356 = vadd.f32 0.0, %v1355
    %1357 = vdwg.mxu0
    %1358 = vmatprep.subr.mxu0 %v49
    %1359 = vmatpush1.msra.mxu0 %v48
    %1360 = vmatprep.subr.mxu0 %v53
    %1361 = vmatpush1.msra.mxu0 %v52
    %1362 = vmatprep.subr.mxu0 %v57
    %1363 = vmatpush1.msra.mxu0 %v56
    %1364 = vmatprep.subr.mxu0 %v61
    %1365 = vmatpush1.msra.mxu0 %v60
    %1366 = vmatprep.subr.mxu0 %v65
    %1367 = vmatpush1.msra.mxu0 %v64
    %1368 = vmatprep.subr.mxu0 %v69
    %1369 = vmatpush1.msra.mxu0 %v68
    %1370 = vmatprep.subr.mxu0 %v73
    %1371 = vmatpush1.msra.mxu0 %v72
    %1372 = vmatprep.subr.mxu0 %v77
    %1373 = vmatpush1.msra.mxu0 %v76
    %1374 = vmatprep.subr.mxu0 %v81
    %1375 = vmatpush1.msra.mxu0 %v80
    %1376 = vmatprep.subr.mxu0 %v85
    %1377 = vmatpush1.msra.mxu0 %v84
    %1378 = vmatprep.subr.mxu0 %v89
    %1379 = vmatpush1.msra.mxu0 %v88
    %1380 = vmatprep.subr.mxu0 %v93
    %1381 = vmatpush1.msra.mxu0 %v92
    %1382 = vmatprep.subr.mxu0 %v97
    %1383 = vmatpush1.msra.mxu0 %v96
    %1384 = vmatprep.subr.mxu0 %v101
    %1385 = vmatpush1.msra.mxu0 %v100
    %1386 = vmatprep.subr.mxu0 %v105
    %1387 = vmatpush1.msra.mxu0 %v104
    %1388 = vmatprep.subr.mxu0 %v109
    %1389 = vmatpush1.msra.mxu0 %v108
    %1390 = vmatprep.subr.mxu0 0.0
    %1391 = vmatpush1.msra.mxu0 0.0
    %1392 = vmatprep.subr.mxu0 0.0
    %1393 = vmatpush1.msra.mxu0 0.0
    %1394 = vmatprep.subr.mxu0 0.0
    %1395 = vmatpush1.msra.mxu0 0.0
    %1396 = vmatprep.subr.mxu0 0.0
    %1397 = vmatpush1.msra.mxu0 0.0
    %1398 = vmatprep.subr.mxu0 0.0
    %1399 = vmatpush1.msra.mxu0 0.0
    %1400 = vmatprep.subr.mxu0 0.0
    %1401 = vmatpush1.msra.mxu0 0.0
    %1402 = vmatprep.subr.mxu0 0.0
    %1403 = vmatpush1.msra.mxu0 0.0
    %1404 = vmatprep.subr.mxu0 0.0
    %1405 = vmatpush1.msra.mxu0 0.0
    %1406 = vmatprep.subr.mxu0 0.0
    %1407 = vmatpush1.msra.mxu0 0.0
    %1408 = vmatprep.subr.mxu0 0.0
    %1409 = vmatpush1.msra.mxu0 0.0
    %1410 = vmatprep.subr.mxu0 0.0
    %1411 = vmatpush1.msra.mxu0 0.0
    %1412 = vmatprep.subr.mxu0 0.0
    %1413 = vmatpush1.msra.mxu0 0.0
    %1414 = vmatprep.subr.mxu0 0.0
    %1415 = vmatpush1.msra.mxu0 0.0
    %1416 = vmatprep.subr.mxu0 0.0
    %1417 = vmatpush1.msra.mxu0 0.0
    %1418 = vmatprep.subr.mxu0 0.0
    %1419 = vmatpush1.msra.mxu0 0.0
    %1420 = vmatprep.subr.mxu0 0.0
    %1421 = vmatpush1.msra.mxu0 0.0
    %1422 = vmatprep.mubr.f32.mxu0 0.0
    %1423 = vmatmul.mubr.f32.gmra.mrb[0].mxu0 %v1279
    %v1424 = vpop.f32.mrb[0].mxu0
    %v1425 = vadd.f32 0.0, %v1424
    %v1426 = vpop.f32.mrb[0].mxu0
    %v1427 = vadd.f32 0.0, %v1426
    %1428 = vdwg.mxu0
    %v1429 = vadd.f32 %v1283, %v1354
    %v1430 = vadd.f32 %v1284, %v1356
    %v1431 = vadd.f32 %v1285, %v1425
    %v1432 = vadd.f32 %v1286, %v1427
    %v1433 = vmul.f32 %v1429, 0.5
    %v1434 = vtanh.pop %v1433
    %v1435 = vmul.f32 %v1434, 0.5
    %v1436 = vadd.f32 %v1435, 0.5
    %v1437 = vmul.f32 %v1430, 0.5
    %v1438 = vtanh.pop %v1437
    %v1439 = vmul.f32 %v1438, 0.5
    %v1440 = vadd.f32 %v1439, 0.5
    %v1441 = vtanh.pop %v1431
    %v1442 = vmul.f32 %v1432, 0.5
    %v1443 = vtanh.pop %v1442
    %v1444 = vmul.f32 %v1443, 0.5
    %v1445 = vadd.f32 %v1444, 0.5
    %v1446 = vmul.f32 %v1440, %v1277
    %v1447 = vmul.f32 %v1436, %v1441
    %v1448 = vadd.f32 %v1446, %v1447
    %v1449 = vtanh.pop %v1448
    %v1450 = vmul.f32 %v1445, %v1449
    %s1451 = smul.u32 6, 4
    %s1452 = smul.addr %s1451, 8
    %s1453 = scalar_lea.vmem [#allocation2], %s1452
    %v1454 = vld [vmem:[%s1453] sm:$0xff]
    %v1455 = vld [vmem:[%s1453 + $0x8] sm:$0xff]
    %v1456 = vld [vmem:[%s1453 + $0x10] sm:$0xff]
    %v1457 = vld [vmem:[%s1453 + $0x18] sm:$0xff]
    %1458 = vmatprep.subr.mxu0 %v47
    %1459 = vmatpush1.msra.mxu0 %v46
    %1460 = vmatprep.subr.mxu0 %v51
    %1461 = vmatpush1.msra.mxu0 %v50
    %1462 = vmatprep.subr.mxu0 %v55
    %1463 = vmatpush1.msra.mxu0 %v54
    %1464 = vmatprep.subr.mxu0 %v59
    %1465 = vmatpush1.msra.mxu0 %v58
    %1466 = vmatprep.subr.mxu0 %v63
    %1467 = vmatpush1.msra.mxu0 %v62
    %1468 = vmatprep.subr.mxu0 %v67
    %1469 = vmatpush1.msra.mxu0 %v66
    %1470 = vmatprep.subr.mxu0 %v71
    %1471 = vmatpush1.msra.mxu0 %v70
    %1472 = vmatprep.subr.mxu0 %v75
    %1473 = vmatpush1.msra.mxu0 %v74
    %1474 = vmatprep.subr.mxu0 %v79
    %1475 = vmatpush1.msra.mxu0 %v78
    %1476 = vmatprep.subr.mxu0 %v83
    %1477 = vmatpush1.msra.mxu0 %v82
    %1478 = vmatprep.subr.mxu0 %v87
    %1479 = vmatpush1.msra.mxu0 %v86
    %1480 = vmatprep.subr.mxu0 %v91
    %1481 = vmatpush1.msra.mxu0 %v90
    %1482 = vmatprep.subr.mxu0 %v95
    %1483 = vmatpush1.msra.mxu0 %v94
    %1484 = vmatprep.subr.mxu0 %v99
    %1485 = vmatpush1.msra.mxu0 %v98
    %1486 = vmatprep.subr.mxu0 %v103
    %1487 = vmatpush1.msra.mxu0 %v102
    %1488 = vmatprep.subr.mxu0 %v107
    %1489 = vmatpush1.msra.mxu0 %v106
    %1490 = vmatprep.subr.mxu0 0.0
    %1491 = vmatpush1.msra.mxu0 0.0
    %1492 = vmatprep.subr.mxu0 0.0
    %1493 = vmatpush1.msra.mxu0 0.0
    %1494 = vmatprep.subr.mxu0 0.0
    %1495 = vmatpush1.msra.mxu0 0.0
    %1496 = vmatprep.subr.mxu0 0.0
    %1497 = vmatpush1.msra.mxu0 0.0
    %1498 = vmatprep.subr.mxu0 0.0
    %1499 = vmatpush1.msra.mxu0 0.0
    %1500 = vmatprep.subr.mxu0 0.0
    %1501 = vmatpush1.msra.mxu0 0.0
    %1502 = vmatprep.subr.mxu0 0.0
    %1503 = vmatpush1.msra.mxu0 0.0
    %1504 = vmatprep.subr.mxu0 0.0
    %1505 = vmatpush1.msra.mxu0 0.0
    %1506 = vmatprep.subr.mxu0 0.0
    %1507 = vmatpush1.msra.mxu0 0.0
    %1508 = vmatprep.subr.mxu0 0.0
    %1509 = vmatpush1.msra.mxu0 0.0
    %1510 = vmatprep.subr.mxu0 0.0
    %1511 = vmatpush1.msra.mxu0 0.0
    %1512 = vmatprep.subr.mxu0 0.0
    %1513 = vmatpush1.msra.mxu0 0.0
    %1514 = vmatprep.subr.mxu0 0.0
    %1515 = vmatpush1.msra.mxu0 0.0
    %1516 = vmatprep.subr.mxu0 0.0
    %1517 = vmatpush1.msra.mxu0 0.0
    %1518 = vmatprep.subr.mxu0 0.0
    %1519 = vmatpush1.msra.mxu0 0.0
    %1520 = vmatprep.subr.mxu0 0.0
    %1521 = vmatpush1.msra.mxu0 0.0
    %1522 = vmatprep.mubr.f32.mxu0 0.0
    %1523 = vmatmul.mubr.f32.gmra.mrb[0].mxu0 %v1450
    %v1524 = vpop.f32.mrb[0].mxu0
    %v1525 = vadd.f32 0.0, %v1524
    %v1526 = vpop.f32.mrb[0].mxu0
    %v1527 = vadd.f32 0.0, %v1526
    %1528 = vdwg.mxu0
    %1529 = vmatprep.subr.mxu0 %v49
    %1530 = vmatpush1.msra.mxu0 %v48
    %1531 = vmatprep.subr.mxu0 %v53
    %1532 = vmatpush1.msra.mxu0 %v52
    %1533 = vmatprep.subr.mxu0 %v57
    %1534 = vmatpush1.msra.mxu0 %v56
    %1535 = vmatprep.subr.mxu0 %v61
    %1536 = vmatpush1.msra.mxu0 %v60
    %1537 = vmatprep.subr.mxu0 %v65
    %1538 = vmatpush1.msra.mxu0 %v64
    %1539 = vmatprep.subr.mxu0 %v69
    %1540 = vmatpush1.msra.mxu0 %v68
    %1541 = vmatprep.subr.mxu0 %v73
    %1542 = vmatpush1.msra.mxu0 %v72
    %1543 = vmatprep.subr.mxu0 %v77
    %1544 = vmatpush1.msra.mxu0 %v76
    %1545 = vmatprep.subr.mxu0 %v81
    %1546 = vmatpush1.msra.mxu0 %v80
    %1547 = vmatprep.subr.mxu0 %v85
    %1548 = vmatpush1.msra.mxu0 %v84
    %1549 = vmatprep.subr.mxu0 %v89
    %1550 = vmatpush1.msra.mxu0 %v88
    %1551 = vmatprep.subr.mxu0 %v93
    %1552 = vmatpush1.msra.mxu0 %v92
    %1553 = vmatprep.subr.mxu0 %v97
    %1554 = vmatpush1.msra.mxu0 %v96
    %1555 = vmatprep.subr.mxu0 %v101
    %1556 = vmatpush1.msra.mxu0 %v100
    %1557 = vmatprep.subr.mxu0 %v105
    %1558 = vmatpush1.msra.mxu0 %v104
    %1559 = vmatprep.subr.mxu0 %v109
    %1560 = vmatpush1.msra.mxu0 %v108
    %1561 = vmatprep.subr.mxu0 0.0
    %1562 = vmatpush1.msra.mxu0 0.0
    %1563 = vmatprep.subr.mxu0 0.0
    %1564 = vmatpush1.msra.mxu0 0.0
    %1565 = vmatprep.subr.mxu0 0.0
    %1566 = vmatpush1.msra.mxu0 0.0
    %1567 = vmatprep.subr.mxu0 0.0
    %1568 = vmatpush1.msra.mxu0 0.0
    %1569 = vmatprep.subr.mxu0 0.0
    %1570 = vmatpush1.msra.mxu0 0.0
    %1571 = vmatprep.subr.mxu0 0.0
    %1572 = vmatpush1.msra.mxu0 0.0
    %1573 = vmatprep.subr.mxu0 0.0
    %1574 = vmatpush1.msra.mxu0 0.0
    %1575 = vmatprep.subr.mxu0 0.0
    %1576 = vmatpush1.msra.mxu0 0.0
    %1577 = vmatprep.subr.mxu0 0.0
    %1578 = vmatpush1.msra.mxu0 0.0
    %1579 = vmatprep.subr.mxu0 0.0
    %1580 = vmatpush1.msra.mxu0 0.0
    %1581 = vmatprep.subr.mxu0 0.0
    %1582 = vmatpush1.msra.mxu0 0.0
    %1583 = vmatprep.subr.mxu0 0.0
    %1584 = vmatpush1.msra.mxu0 0.0
    %1585 = vmatprep.subr.mxu0 0.0
    %1586 = vmatpush1.msra.mxu0 0.0
    %1587 = vmatprep.subr.mxu0 0.0
    %1588 = vmatpush1.msra.mxu0 0.0
    %1589 = vmatprep.subr.mxu0 0.0
    %1590 = vmatpush1.msra.mxu0 0.0
    %1591 = vmatprep.subr.mxu0 0.0
    %1592 = vmatpush1.msra.mxu0 0.0
    %1593 = vmatprep.mubr.f32.mxu0 0.0
    %1594 = vmatmul.mubr.f32.gmra.mrb[0].mxu0 %v1450
    %v1595 = vpop.f32.mrb[0].mxu0
    %v1596 = vadd.f32 0.0, %v1595
    %v1597 = vpop.f32.mrb[0].mxu0
    %v1598 = vadd.f32 0.0, %v1597
    %1599 = vdwg.mxu0
    %v1600 = vadd.f32 %v1454, %v1525
    %v1601 = vadd.f32 %v1455, %v1527
    %v1602 = vadd.f32 %v1456, %v1596
    %v1603 = vadd.f32 %v1457, %v1598
    %v1604 = vmul.f32 %v1600, 0.5
    %v1605 = vtanh.pop %v1604
    %v1606 = vmul.f32 %v1605, 0.5
    %v1607 = vadd.f32 %v1606, 0.5
    %v1608 = vmul.f32 %v1601, 0.5
    %v1609 = vtanh.pop %v1608
    %v1610 = vmul.f32 %v1609, 0.5
    %v1611 = vadd.f32 %v1610, 0.5
    %v1612 = vtanh.pop %v1602
    %v1613 = vmul.f32 %v1603, 0.5
    %v1614 = vtanh.pop %v1613
    %v1615 = vmul.f32 %v1614, 0.5
    %v1616 = vadd.f32 %v1615, 0.5
    %v1617 = vmul.f32 %v1611, %v1448
    %v1618 = vmul.f32 %v1607, %v1612
    %v1619 = vadd.f32 %v1617, %v1618
    %v1620 = vtanh.pop %v1619
    %v1621 = vmul.f32 %v1616, %v1620
    %s1622 = smul.u32 7, 4
    %s1623 = smul.addr %s1622, 8
    %s1624 = scalar_lea.vmem [#allocation2], %s1623
    %v1625 = vld [vmem:[%s1624] sm:$0xff]
    %v1626 = vld [vmem:[%s1624 + $0x8] sm:$0xff]
    %v1627 = vld [vmem:[%s1624 + $0x10] sm:$0xff]
    %v1628 = vld [vmem:[%s1624 + $0x18] sm:$0xff]
    %1629 = vmatprep.subr.mxu0 %v47
    %1630 = vmatpush1.msra.mxu0 %v46
    %1631 = vmatprep.subr.mxu0 %v51
    %1632 = vmatpush1.msra.mxu0 %v50
    %1633 = vmatprep.subr.mxu0 %v55
    %1634 = vmatpush1.msra.mxu0 %v54
    %1635 = vmatprep.subr.mxu0 %v59
    %1636 = vmatpush1.msra.mxu0 %v58
    %1637 = vmatprep.subr.mxu0 %v63
    %1638 = vmatpush1.msra.mxu0 %v62
    %1639 = vmatprep.subr.mxu0 %v67
    %1640 = vmatpush1.msra.mxu0 %v66
    %1641 = vmatprep.subr.mxu0 %v71
    %1642 = vmatpush1.msra.mxu0 %v70
    %1643 = vmatprep.subr.mxu0 %v75
    %1644 = vmatpush1.msra.mxu0 %v74
    %1645 = vmatprep.subr.mxu0 %v79
    %1646 = vmatpush1.msra.mxu0 %v78
    %1647 = vmatprep.subr.mxu0 %v83
    %1648 = vmatpush1.msra.mxu0 %v82
    %1649 = vmatprep.subr.mxu0 %v87
    %1650 = vmatpush1.msra.mxu0 %v86
    %1651 = vmatprep.subr.mxu0 %v91
    %1652 = vmatpush1.msra.mxu0 %v90
    %1653 = vmatprep.subr.mxu0 %v95
    %1654 = vmatpush1.msra.mxu0 %v94
    %1655 = vmatprep.subr.mxu0 %v99
    %1656 = vmatpush1.msra.mxu0 %v98
    %1657 = vmatprep.subr.mxu0 %v103
    %1658 = vmatpush1.msra.mxu0 %v102
    %1659 = vmatprep.subr.mxu0 %v107
    %1660 = vmatpush1.msra.mxu0 %v106
    %1661 = vmatprep.subr.mxu0 0.0
    %1662 = vmatpush1.msra.mxu0 0.0
    %1663 = vmatprep.subr.mxu0 0.0
    %1664 = vmatpush1.msra.mxu0 0.0
    %1665 = vmatprep.subr.mxu0 0.0
    %1666 = vmatpush1.msra.mxu0 0.0
    %1667 = vmatprep.subr.mxu0 0.0
    %1668 = vmatpush1.msra.mxu0 0.0
    %1669 = vmatprep.subr.mxu0 0.0
    %1670 = vmatpush1.msra.mxu0 0.0
    %1671 = vmatprep.subr.mxu0 0.0
    %1672 = vmatpush1.msra.mxu0 0.0
    %1673 = vmatprep.subr.mxu0 0.0
    %1674 = vmatpush1.msra.mxu0 0.0
    %1675 = vmatprep.subr.mxu0 0.0
    %1676 = vmatpush1.msra.mxu0 0.0
    %1677 = vmatprep.subr.mxu0 0.0
    %1678 = vmatpush1.msra.mxu0 0.0
    %1679 = vmatprep.subr.mxu0 0.0
    %1680 = vmatpush1.msra.mxu0 0.0
    %1681 = vmatprep.subr.mxu0 0.0
    %1682 = vmatpush1.msra.mxu0 0.0
    %1683 = vmatprep.subr.mxu0 0.0
    %1684 = vmatpush1.msra.mxu0 0.0
    %1685 = vmatprep.subr.mxu0 0.0
    %1686 = vmatpush1.msra.mxu0 0.0
    %1687 = vmatprep.subr.mxu0 0.0
    %1688 = vmatpush1.msra.mxu0 0.0
    %1689 = vmatprep.subr.mxu0 0.0
    %1690 = vmatpush1.msra.mxu0 0.0
    %1691 = vmatprep.subr.mxu0 0.0
    %1692 = vmatpush1.msra.mxu0 0.0
    %1693 = vmatprep.mubr.f32.mxu0 0.0
    %1694 = vmatmul.mubr.f32.gmra.mrb[0].mxu0 %v1621
    %v1695 = vpop.f32.mrb[0].mxu0
    %v1696 = vadd.f32 0.0, %v1695
    %v1697 = vpop.f32.mrb[0].mxu0
    %v1698 = vadd.f32 0.0, %v1697
    %1699 = vdwg.mxu0
    %1700 = vmatprep.subr.mxu0 %v49
    %1701 = vmatpush1.msra.mxu0 %v48
    %1702 = vmatprep.subr.mxu0 %v53
    %1703 = vmatpush1.msra.mxu0 %v52
    %1704 = vmatprep.subr.mxu0 %v57
    %1705 = vmatpush1.msra.mxu0 %v56
    %1706 = vmatprep.subr.mxu0 %v61
    %1707 = vmatpush1.msra.mxu0 %v60
    %1708 = vmatprep.subr.mxu0 %v65
    %1709 = vmatpush1.msra.mxu0 %v64
    %1710 = vmatprep.subr.mxu0 %v69
    %1711 = vmatpush1.msra.mxu0 %v68
    %1712 = vmatprep.subr.mxu0 %v73
    %1713 = vmatpush1.msra.mxu0 %v72
    %1714 = vmatprep.subr.mxu0 %v77
    %1715 = vmatpush1.msra.mxu0 %v76
    %1716 = vmatprep.subr.mxu0 %v81
    %1717 = vmatpush1.msra.mxu0 %v80
    %1718 = vmatprep.subr.mxu0 %v85
    %1719 = vmatpush1.msra.mxu0 %v84
    %1720 = vmatprep.subr.mxu0 %v89
    %1721 = vmatpush1.msra.mxu0 %v88
    %1722 = vmatprep.subr.mxu0 %v93
    %1723 = vmatpush1.msra.mxu0 %v92
    %1724 = vmatprep.subr.mxu0 %v97
    %1725 = vmatpush1.msra.mxu0 %v96
    %1726 = vmatprep.subr.mxu0 %v101
    %1727 = vmatpush1.msra.mxu0 %v100
    %1728 = vmatprep.subr.mxu0 %v105
    %1729 = vmatpush1.msra.mxu0 %v104
    %1730 = vmatprep.subr.mxu0 %v109
    %1731 = vmatpush1.msra.mxu0 %v108
    %1732 = vmatprep.subr.mxu0 0.0
    %1733 = vmatpush1.msra.mxu0 0.0
    %1734 = vmatprep.subr.mxu0 0.0
    %1735 = vmatpush1.msra.mxu0 0.0
    %1736 = vmatprep.subr.mxu0 0.0
    %1737 = vmatpush1.msra.mxu0 0.0
    %1738 = vmatprep.subr.mxu0 0.0
    %1739 = vmatpush1.msra.mxu0 0.0
    %1740 = vmatprep.subr.mxu0 0.0
    %1741 = vmatpush1.msra.mxu0 0.0
    %1742 = vmatprep.subr.mxu0 0.0
    %1743 = vmatpush1.msra.mxu0 0.0
    %1744 = vmatprep.subr.mxu0 0.0
    %1745 = vmatpush1.msra.mxu0 0.0
    %1746 = vmatprep.subr.mxu0 0.0
    %1747 = vmatpush1.msra.mxu0 0.0
    %1748 = vmatprep.subr.mxu0 0.0
    %1749 = vmatpush1.msra.mxu0 0.0
    %1750 = vmatprep.subr.mxu0 0.0
    %1751 = vmatpush1.msra.mxu0 0.0
    %1752 = vmatprep.subr.mxu0 0.0
    %1753 = vmatpush1.msra.mxu0 0.0
    %1754 = vmatprep.subr.mxu0 0.0
    %1755 = vmatpush1.msra.mxu0 0.0
    %1756 = vmatprep.subr.mxu0 0.0
    %1757 = vmatpush1.msra.mxu0 0.0
    %1758 = vmatprep.subr.mxu0 0.0
    %1759 = vmatpush1.msra.mxu0 0.0
    %1760 = vmatprep.subr.mxu0 0.0
    %1761 = vmatpush1.msra.mxu0 0.0
    %1762 = vmatprep.subr.mxu0 0.0
    %1763 = vmatpush1.msra.mxu0 0.0
    %1764 = vmatprep.mubr.f32.mxu0 0.0
    %1765 = vmatmul.mubr.f32.gmra.mrb[0].mxu0 %v1621
    %v1766 = vpop.f32.mrb[0].mxu0
    %v1767 = vadd.f32 0.0, %v1766
    %v1768 = vpop.f32.mrb[0].mxu0
    %v1769 = vadd.f32 0.0, %v1768
    %1770 = vdwg.mxu0
    %v1771 = vadd.f32 %v1625, %v1696
    %v1772 = vadd.f32 %v1626, %v1698
    %v1773 = vadd.f32 %v1627, %v1767
    %v1774 = vadd.f32 %v1628, %v1769
    %v1775 = vmul.f32 %v1771, 0.5
    %v1776 = vtanh.pop %v1775
    %v1777 = vmul.f32 %v1776, 0.5
    %v1778 = vadd.f32 %v1777, 0.5
    %v1779 = vmul.f32 %v1772, 0.5
    %v1780 = vtanh.pop %v1779
    %v1781 = vmul.f32 %v1780, 0.5
    %v1782 = vadd.f32 %v1781, 0.5
    %v1783 = vtanh.pop %v1773
    %v1784 = vmul.f32 %v1774, 0.5
    %v1785 = vtanh.pop %v1784
    %v1786 = vmul.f32 %v1785, 0.5
    %v1787 = vadd.f32 %v1786, 0.5
    %v1788 = vmul.f32 %v1782, %v1619
    %v1789 = vmul.f32 %v1778, %v1783
    %v1790 = vadd.f32 %v1788, %v1789
    %v1791 = vtanh.pop %v1790
    %v1792 = vmul.f32 %v1787, %v1791
    %1793 = vst [vmem:[#allocation3] sm:$0xff] %v1792
    %1794 = vst [vmem:[#allocation4] sm:$0xff] %v1790
    // Predicated region
    $region26: #{tpu_custom_call.1} parent=1 // pred_check
      %p1795 = pneg %p32
    $region27: #{tpu_custom_call.1} parent=1 // pred_check_branch
      %1797 = sbr.rel (%p1795) target = $region29
    $region28: #{tpu_custom_call.1} parent=1 // pred_region
      %1798 = vst [vmem:[#allocation8] sm:$0xff] %v1792
    $region29: #{tpu_custom_call.1} parent=1 // pred_fallthru
      _
    // Predicated region
    $region30: #{tpu_custom_call.1} parent=1 // pred_check
      _
    $region31: #{tpu_custom_call.1} parent=1 // pred_check_branch
      %1800 = sbr.rel (0) target = $region33
    $region32: #{tpu_custom_call.1} parent=1 // pred_region
      %s1802 = ssub.s32 128, 128
      %1803 = vsyncadd [#allocation7], %s1802
      %s1805 = sshll.u32 [#allocation8], 4
      %s1806 = int_to_ptr.vmem [resolvable:$true] %s1805
      %1808 = dma.vmem_to_hbm [thread:$0]  %s1806, 128, %s4, [#allocation7]
    $region33: #{tpu_custom_call.1} parent=1 // pred_fallthru
      _
    // Predicated region
    $region34: #{tpu_custom_call.1} parent=1 // pred_check
      _
    $region35: #{tpu_custom_call.1} parent=1 // pred_check_branch
      %1810 = sbr.rel (0) target = $region37
    $region36: #{tpu_custom_call.1} parent=1 // pred_region
      %1811 = dma.done [#allocation7], 128
    $region37: #{tpu_custom_call.1} parent=1 // pred_fallthru
      _
    %1812 = vsyncpa [#allocation6], 1
    %1813 = vsyncpa [#allocation7], 1

// kernel: tpu_custom_call.1
$region0: #{tpu_custom_call.1}
  #allocation0 [shape = 'u32[]', space=smem, size = 0x4, offset = 0x4, fixed_abs, tag = 'smem constant byte address 0x4 - core index']
  #allocation1 [shape = 'u32[144,128]{1,0:T(1,128)}', space=vmem, size = 0x12000, scoped, tag = 'internal scratch']
  #allocation2 [shape = 'f32[64,512]{1,0:T(8,128)}', space=vmem, size = 0x20000, scoped, tag = 'scratch operand']
  #allocation3 [shape = 'f32[8,128]{1,0:T(8,128)}', space=vmem, size = 0x1000, scoped, tag = 'scratch operand']
  #allocation4 [shape = 'f32[8,128]{1,0:T(8,128)}', space=vmem, size = 0x1000, scoped, tag = 'scratch operand']
  %s0 = inlined_call_operand.vmem [shape: f32[1,1,64,16], index: 0, kind: input, shape index: {}]
  %s1 = inlined_call_operand.vmem [shape: f32[16,512], index: 1, kind: input, shape index: {}]
  %s2 = inlined_call_operand.vmem [shape: f32[1,512], index: 2, kind: input, shape index: {}]
  %s3 = inlined_call_operand.hbm [shape: f32[128,512], index: 3, kind: input, shape index: {}]
  %s4 = inlined_call_operand.hbm [shape: f32[8,128], index: 4, kind: output, shape index: {}]
  %s5 = sld [smem:[#allocation0]]
  $region38: #{tpu_custom_call.1} parent=0
    _
  %s7 = ssub.s32 1, %s5
  %s8 = scalar_select 0, %s7, %s5
  $region1: #{tpu_custom_call.1} parent=0
    #allocation5 [shape = 'u8[262144]{0}', space=vmem, size = 0x40000, scoped, tag = 'input window, operand 3, single buffered']
    #allocation6 [shape = 's32[1]{0}', space=sflag, size = 0x4, scoped, tag = 'scoped memory for tpu_custom_call.1']
    #allocation7 [shape = 's32[1]{0}', space=sflag, size = 0x4, scoped, tag = 'scoped memory for tpu_custom_call.1']
    #allocation8 [shape = 'u8[4096]{0}', space=vmem, size = 0x1000, scoped, tag = 'output window, operand 0, single buffered']
    %9 = vsyncpa [#allocation6], 0
    %10 = vsyncpa [#allocation7], 0
    // Predicated region
    $region2: #{tpu_custom_call.1} parent=1 // pred_check
      _
    $region3: #{tpu_custom_call.1} parent=1 // pred_check_branch
      %12 = sbr.rel (0) target = $region5
    $region4: #{tpu_custom_call.1} parent=1 // pred_region
      _
    $region5: #{tpu_custom_call.1} parent=1 // pred_fallthru
      _
    // Predicated region
    $region6: #{tpu_custom_call.1} parent=1 // pred_check
      _
    $region7: #{tpu_custom_call.1} parent=1 // pred_check_branch
      %14 = sbr.rel (0) target = $region9
    $region8: #{tpu_custom_call.1} parent=1 // pred_region
      _
    $region9: #{tpu_custom_call.1} parent=1 // pred_fallthru
      _
    // Predicated region
    $region10: #{tpu_custom_call.1} parent=1 // pred_check
      _
    $region11: #{tpu_custom_call.1} parent=1 // pred_check_branch
      %16 = sbr.rel (0) target = $region13
    $region12: #{tpu_custom_call.1} parent=1 // pred_region
      _
    $region13: #{tpu_custom_call.1} parent=1 // pred_fallthru
      _
    // Predicated region
    $region14: #{tpu_custom_call.1} parent=1 // pred_check
      _
    $region15: #{tpu_custom_call.1} parent=1 // pred_check_branch
      %18 = sbr.rel (0) target = $region17
    $region16: #{tpu_custom_call.1} parent=1 // pred_region
      %s20 = ssub.s32 8192, 8192
      %21 = vsyncadd [#allocation6], %s20
      %s22 = sshll.u32 [#allocation5], 4
      %s23 = int_to_ptr.vmem [resolvable:$true] %s22
      %28 = dma.hbm_to_vmem [thread:$0]  %s3, 8192, %s23, [#allocation6], 512, 512, 32
    $region17: #{tpu_custom_call.1} parent=1 // pred_fallthru
      _
    // Predicated region
    $region18: #{tpu_custom_call.1} parent=1 // pred_check
      _
    $region19: #{tpu_custom_call.1} parent=1 // pred_check_branch
      %30 = sbr.rel (0) target = $region21
    $region20: #{tpu_custom_call.1} parent=1 // pred_region
      %31 = dma.done [#allocation6], 8192
    $region21: #{tpu_custom_call.1} parent=1 // pred_fallthru
      _
    %p32 = scmp.eq.s32.totalorder 0, 0
    // Predicated region
    $region22: #{tpu_custom_call.1} parent=1 // pred_check
      %p33 = pneg %p32
    $region23: #{tpu_custom_call.1} parent=1 // pred_check_branch
      %35 = sbr.rel (%p33) target = $region25
    $region24: #{tpu_custom_call.1} parent=1 // pred_region
      %36 = vst [vmem:[#allocation3] sm:$0xff] 0.0
      %37 = vst [vmem:[#allocation4] sm:$0xff] 0.0
    $region25: #{tpu_custom_call.1} parent=1 // pred_fallthru
      _
    %v38 = vld [vmem:[%s1] sm:$0xff]
    %v39 = vld [vmem:[%s1 + $0x8] sm:$0xff]
    %v40 = vld [vmem:[%s1 + $0x10] sm:$0xff]
    %v41 = vld [vmem:[%s1 + $0x18] sm:$0xff]
    %v42 = vld [vmem:[%s1 + $0x20] sm:$0xff]
    %v43 = vld [vmem:[%s1 + $0x28] sm:$0xff]
    %v44 = vld [vmem:[%s1 + $0x30] sm:$0xff]
    %v45 = vld [vmem:[%s1 + $0x38] sm:$0xff]
    %v46 = vld [vmem:[#allocation5] sm:$0xff]
    %v47 = vld [vmem:[#allocation5 + $0x8] sm:$0xff]
    %v48 = vld [vmem:[#allocation5 + $0x10] sm:$0xff]
    %v49 = vld [vmem:[#allocation5 + $0x18] sm:$0xff]
    %v50 = vld [vmem:[#allocation5 + $0x20] sm:$0xff]
    %v51 = vld [vmem:[#allocation5 + $0x28] sm:$0xff]
    %v52 = vld [vmem:[#allocation5 + $0x30] sm:$0xff]
    %v53 = vld [vmem:[#allocation5 + $0x38] sm:$0xff]
    %v54 = vld [vmem:[#allocation5 + $0x40] sm:$0xff]
    %v55 = vld [vmem:[#allocation5 + $0x48] sm:$0xff]
    %v56 = vld [vmem:[#allocation5 + $0x50] sm:$0xff]
    %v57 = vld [vmem:[#allocation5 + $0x58] sm:$0xff]
    %v58 = vld [vmem:[#allocation5 + $0x60] sm:$0xff]
    %v59 = vld [vmem:[#allocation5 + $0x68] sm:$0xff]
    %v60 = vld [vmem:[#allocation5 + $0x70] sm:$0xff]
    %v61 = vld [vmem:[#allocation5 + $0x78] sm:$0xff]
    %v62 = vld [vmem:[#allocation5 + $0x80] sm:$0xff]
    %v63 = vld [vmem:[#allocation5 + $0x88] sm:$0xff]
    %v64 = vld [vmem:[#allocation5 + $0x90] sm:$0xff]
    %v65 = vld [vmem:[#allocation5 + $0x98] sm:$0xff]
    %v66 = vld [vmem:[#allocation5 + $0xa0] sm:$0xff]
    %v67 = vld [vmem:[#allocation5 + $0xa8] sm:$0xff]
    %v68 = vld [vmem:[#allocation5 + $0xb0] sm:$0xff]
    %v69 = vld [vmem:[#allocation5 + $0xb8] sm:$0xff]
    %v70 = vld [vmem:[#allocation5 + $0xc0] sm:$0xff]
    %v71 = vld [vmem:[#allocation5 + $0xc8] sm:$0xff]
    %v72 = vld [vmem:[#allocation5 + $0xd0] sm:$0xff]
    %v73 = vld [vmem:[#allocation5 + $0xd8] sm:$0xff]
    %v74 = vld [vmem:[#allocation5 + $0xe0] sm:$0xff]
    %v75 = vld [vmem:[#allocation5 + $0xe8] sm:$0xff]
    %v76 = vld [vmem:[#allocation5 + $0xf0] sm:$0xff]
    %v77 = vld [vmem:[#allocation5 + $0xf8] sm:$0xff]
    %v78 = vld [vmem:[#allocation5 + $0x100] sm:$0xff]
    %v79 = vld [vmem:[#allocation5 + $0x108] sm:$0xff]
    %v80 = vld [vmem:[#allocation5 + $0x110] sm:$0xff]
    %v81 = vld [vmem:[#allocation5 + $0x118] sm:$0xff]
    %v82 = vld [vmem:[#allocation5 + $0x120] sm:$0xff]
    %v83 = vld [vmem:[#allocation5 + $0x128] sm:$0xff]
    %v84 = vld [vmem:[#allocation5 + $0x130] sm:$0xff]
    %v85 = vld [vmem:[#allocation5 + $0x138] sm:$0xff]
    %v86 = vld [vmem:[#allocation5 + $0x140] sm:$0xff]
    %v87 = vld [vmem:[#allocation5 + $0x148] sm:$0xff]
    %v88 = vld [vmem:[#allocation5 + $0x150] sm:$0xff]
    %v89 = vld [vmem:[#allocation5 + $0x158] sm:$0xff]
    %v90 = vld [vmem:[#allocation5 + $0x160] sm:$0xff]
    %v91 = vld [vmem:[#allocation5 + $0x168] sm:$0xff]
    %v92 = vld [vmem:[#allocation5 + $0x170] sm:$0xff]
    %v93 = vld [vmem:[#allocation5 + $0x178] sm:$0xff]
    %v94 = vld [vmem:[#allocation5 + $0x180] sm:$0xff]
    %v95 = vld [vmem:[#allocation5 + $0x188] sm:$0xff]
    %v96 = vld [vmem:[#allocation5 + $0x190] sm:$0xff]
    %v97 = vld [vmem:[#allocation5 + $0x198] sm:$0xff]
    %v98 = vld [vmem:[#allocation5 + $0x1a0] sm:$0xff]
    %v99 = vld [vmem:[#allocation5 + $0x1a8] sm:$0xff]
    %v100 = vld [vmem:[#allocation5 + $0x1b0] sm:$0xff]
    %v101 = vld [vmem:[#allocation5 + $0x1b8] sm:$0xff]
    %v102 = vld [vmem:[#allocation5 + $0x1c0] sm:$0xff]
    %v103 = vld [vmem:[#allocation5 + $0x1c8] sm:$0xff]
    %v104 = vld [vmem:[#allocation5 + $0x1d0] sm:$0xff]
    %v105 = vld [vmem:[#allocation5 + $0x1d8] sm:$0xff]
    %v106 = vld [vmem:[#allocation5 + $0x1e0] sm:$0xff]
    %v107 = vld [vmem:[#allocation5 + $0x1e8] sm:$0xff]
    %v108 = vld [vmem:[#allocation5 + $0x1f0] sm:$0xff]
    %v109 = vld [vmem:[#allocation5 + $0x1f8] sm:$0xff]
    %v110 = vld [vmem:[%s0] sm:$0xff]
    %v111 = vld [vmem:[%s0 + $0x8] sm:$0xff]
    %v112 = vld [vmem:[%s0 + $0x10] sm:$0xff]
    %v113 = vld [vmem:[%s0 + $0x18] sm:$0xff]
    %v114 = vld [vmem:[%s0 + $0x20] sm:$0xff]
    %v115 = vld [vmem:[%s0 + $0x28] sm:$0xff]
    %v116 = vld [vmem:[%s0 + $0x30] sm:$0xff]
    %v117 = vld [vmem:[%s0 + $0x38] sm:$0xff]
    %v118 = vld [vmem:[%s2] sm:$0xf]
    %v120 = vlaneseq
    %v121 = vshrl.u32 %v120, 7
    %v122 = vsub.s32 0, %v121
    %v123 = vrot.slane %v118, %v122
    %v124 = vlaneseq
    %v125 = vshrl.u32 %v124, 7
    %v126 = vsub.s32 1, %v125
    %v127 = vrot.slane %v118, %v126
    %v128 = vlaneseq
    %v129 = vshrl.u32 %v128, 7
    %v130 = vsub.s32 2, %v129
    %v131 = vrot.slane %v118, %v130
    %v132 = vlaneseq
    %v133 = vshrl.u32 %v132, 7
    %v134 = vsub.s32 3, %v133
    %v135 = vrot.slane %v118, %v134
    %vm140 = vcmask 130048
    %v142 = vsel %vm140, %v110, 0
    %v145 = vsel %vm140, %v111, 0
    %v148 = vsel %vm140, %v112, 0
    %v151 = vsel %vm140, %v113, 0
    %v154 = vsel %vm140, %v114, 0
    %v157 = vsel %vm140, %v115, 0
    %v160 = vsel %vm140, %v116, 0
    %v163 = vsel %vm140, %v117, 0
    %165 = vmatprep.subr.mxu0 %v39
    %166 = vmatpush1.msra.mxu0 %v38
    %167 = vmatprep.subr.mxu0 %v43
    %168 = vmatpush1.msra.mxu0 %v42
    %169 = vmatprep.subr.mxu0 0.0
    %170 = vmatpush1.msra.mxu0 0.0
    %171 = vmatprep.subr.mxu0 0.0
    %172 = vmatpush1.msra.mxu0 0.0
    %173 = vmatprep.subr.mxu0 0.0
    %174 = vmatpush1.msra.mxu0 0.0
    %175 = vmatprep.subr.mxu0 0.0
    %176 = vmatpush1.msra.mxu0 0.0
    %177 = vmatprep.subr.mxu0 0.0
    %178 = vmatpush1.msra.mxu0 0.0
    %179 = vmatprep.subr.mxu0 0.0
    %180 = vmatpush1.msra.mxu0 0.0
    %181 = vmatprep.subr.mxu0 0.0
    %182 = vmatpush1.msra.mxu0 0.0
    %183 = vmatprep.subr.mxu0 0.0
    %184 = vmatpush1.msra.mxu0 0.0
    %185 = vmatprep.subr.mxu0 0.0
    %186 = vmatpush1.msra.mxu0 0.0
    %187 = vmatprep.subr.mxu0 0.0
    %188 = vmatpush1.msra.mxu0 0.0
    %189 = vmatprep.subr.mxu0 0.0
    %190 = vmatpush1.msra.mxu0 0.0
    %191 = vmatprep.subr.mxu0 0.0
    %192 = vmatpush1.msra.mxu0 0.0
    %193 = vmatprep.subr.mxu0 0.0
    %194 = vmatpush1.msra.mxu0 0.0
    %195 = vmatprep.subr.mxu0 0.0
    %196 = vmatpush1.msra.mxu0 0.0
    %197 = vmatprep.subr.mxu0 0.0
    %198 = vmatpush1.msra.mxu0 0.0
    %199 = vmatprep.subr.mxu0 0.0
    %200 = vmatpush1.msra.mxu0 0.0
    %201 = vmatprep.subr.mxu0 0.0
    %202 = vmatpush1.msra.mxu0 0.0
    %203 = vmatprep.subr.mxu0 0.0
    %204 = vmatpush1.msra.mxu0 0.0
    %205 = vmatprep.subr.mxu0 0.0
    %206 = vmatpush1.msra.mxu0 0.0
    %207 = vmatprep.subr.mxu0 0.0
    %208 = vmatpush1.msra.mxu0 0.0
    %209 = vmatprep.subr.mxu0 0.0
    %210 = vmatpush1.msra.mxu0 0.0
    %211 = vmatprep.subr.mxu0 0.0
    %212 = vmatpush1.msra.mxu0 0.0
    %213 = vmatprep.subr.mxu0 0.0
    %214 = vmatpush1.msra.mxu0 0.0
    %215 = vmatprep.subr.mxu0 0.0
    %216 = vmatpush1.msra.mxu0 0.0
    %217 = vmatprep.subr.mxu0 0.0
    %218 = vmatpush1.msra.mxu0 0.0
    %219 = vmatprep.subr.mxu0 0.0
    %220 = vmatpush1.msra.mxu0 0.0
    %221 = vmatprep.subr.mxu0 0.0
    %222 = vmatpush1.msra.mxu0 0.0
    %223 = vmatprep.subr.mxu0 0.0
    %224 = vmatpush1.msra.mxu0 0.0
    %225 = vmatprep.subr.mxu0 0.0
    %226 = vmatpush1.msra.mxu0 0.0
    %227 = vmatprep.subr.mxu0 0.0
    %228 = vmatpush1.msra.mxu0 0.0
    %229 = vmatprep.mubr.f32.mxu0 0.0
    %230 = vmatmul.mubr.f32.gmra.mrb[0].mxu0 %v142
    %v231 = vpop.f32.mrb[0].mxu0
    %v232 = vadd.f32 %v123, %v231
    %v233 = vpop.f32.mrb[0].mxu0
    %v234 = vadd.f32 %v127, %v233
    %235 = vmatprep.mubr.f32.mxu0 0.0
    %236 = vmatmul.mubr.f32.gmra.mrb[0].mxu0 %v145
    %v237 = vpop.f32.mrb[0].mxu0
    %v238 = vadd.f32 %v123, %v237
    %v239 = vpop.f32.mrb[0].mxu0
    %v240 = vadd.f32 %v127, %v239
    %241 = vmatprep.mubr.f32.mxu0 0.0
    %242 = vmatmul.mubr.f32.gmra.mrb[0].mxu0 %v148
    %v243 = vpop.f32.mrb[0].mxu0
    %v244 = vadd.f32 %v123, %v243
    %v245 = vpop.f32.mrb[0].mxu0
    %v246 = vadd.f32 %v127, %v245
    %247 = vmatprep.mubr.f32.mxu0 0.0
    %248 = vmatmul.mubr.f32.gmra.mrb[0].mxu0 %v151
    %v249 = vpop.f32.mrb[0].mxu0
    %v250 = vadd.f32 %v123, %v249
    %v251 = vpop.f32.mrb[0].mxu0
    %v252 = vadd.f32 %v127, %v251
    %253 = vmatprep.mubr.f32.mxu0 0.0
    %254 = vmatmul.mubr.f32.gmra.mrb[0].mxu0 %v154
    %v255 = vpop.f32.mrb[0].mxu0
    %v256 = vadd.f32 %v123, %v255
    %v257 = vpop.f32.mrb[0].mxu0
    %v258 = vadd.f32 %v127, %v257
    %259 = vmatprep.mubr.f32.mxu0 0.0
    %260 = vmatmul.mubr.f32.gmra.mrb[0].mxu0 %v157
    %v261 = vpop.f32.mrb[0].mxu0
    %v262 = vadd.f32 %v123, %v261
    %v263 = vpop.f32.mrb[0].mxu0
    %v264 = vadd.f32 %v127, %v263
    %265 = vmatprep.mubr.f32.mxu0 0.0
    %266 = vmatmul.mubr.f32.gmra.mrb[0].mxu0 %v160
    %v267 = vpop.f32.mrb[0].mxu0
    %v268 = vadd.f32 %v123, %v267
    %v269 = vpop.f32.mrb[0].mxu0
    %v270 = vadd.f32 %v127, %v269
    %271 = vmatprep.mubr.f32.mxu0 0.0
    %272 = vmatmul.mubr.f32.gmra.mrb[0].mxu0 %v163
    %v273 = vpop.f32.mrb[0].mxu0
    %v274 = vadd.f32 %v123, %v273
    %v275 = vpop.f32.mrb[0].mxu0
    %v276 = vadd.f32 %v127, %v275
    %277 = vdwg.mxu0
    %278 = vmatprep.subr.mxu0 %v41
    %279 = vmatpush1.msra.mxu0 %v40
    %280 = vmatprep.subr.mxu0 %v45
    %281 = vmatpush1.msra.mxu0 %v44
    %282 = vmatprep.subr.mxu0 0.0
    %283 = vmatpush1.msra.mxu0 0.0
    %284 = vmatprep.subr.mxu0 0.0
    %285 = vmatpush1.msra.mxu0 0.0
    %286 = vmatprep.subr.mxu0 0.0
    %287 = vmatpush1.msra.mxu0 0.0
    %288 = vmatprep.subr.mxu0 0.0
    %289 = vmatpush1.msra.mxu0 0.0
    %290 = vmatprep.subr.mxu0 0.0
    %291 = vmatpush1.msra.mxu0 0.0
    %292 = vmatprep.subr.mxu0 0.0
    %293 = vmatpush1.msra.mxu0 0.0
    %294 = vmatprep.subr.mxu0 0.0
    %295 = vmatpush1.msra.mxu0 0.0
    %296 = vmatprep.subr.mxu0 0.0
    %297 = vmatpush1.msra.mxu0 0.0
    %298 = vmatprep.subr.mxu0 0.0
    %299 = vmatpush1.msra.mxu0 0.0
    %300 = vmatprep.subr.mxu0 0.0
    %301 = vmatpush1.msra.mxu0 0.0
    %302 = vmatprep.subr.mxu0 0.0
    %303 = vmatpush1.msra.mxu0 0.0
    %304 = vmatprep.subr.mxu0 0.0
    %305 = vmatpush1.msra.mxu0 0.0
    %306 = vmatprep.subr.mxu0 0.0
    %307 = vmatpush1.msra.mxu0 0.0
    %308 = vmatprep.subr.mxu0 0.0
    %309 = vmatpush1.msra.mxu0 0.0
    %310 = vmatprep.subr.mxu0 0.0
    %311 = vmatpush1.msra.mxu0 0.0
    %312 = vmatprep.subr.mxu0 0.0
    %313 = vmatpush1.msra.mxu0 0.0
    %314 = vmatprep.subr.mxu0 0.0
    %315 = vmatpush1.msra.mxu0 0.0
    %316 = vmatprep.subr.mxu0 0.0
    %317 = vmatpush1.msra.mxu0 0.0
    %318 = vmatprep.subr.mxu0 0.0
    %319 = vmatpush1.msra.mxu0 0.0
    %320 = vmatprep.subr.mxu0 0.0
    %321 = vmatpush1.msra.mxu0 0.0
    %322 = vmatprep.subr.mxu0 0.0
    %323 = vmatpush1.msra.mxu0 0.0
    %324 = vmatprep.subr.mxu0 0.0
    %325 = vmatpush1.msra.mxu0 0.0
    %326 = vmatprep.subr.mxu0 0.0
    %327 = vmatpush1.msra.mxu0 0.0
    %328 = vmatprep.subr.mxu0 0.0
    %329 = vmatpush1.msra.mxu0 0.0
    %330 = vmatprep.subr.mxu0 0.0
    %331 = vmatpush1.msra.mxu0 0.0
    %332 = vmatprep.subr.mxu0 0.0
    %333 = vmatpush1.msra.mxu0 0.0
    %334 = vmatprep.subr.mxu0 0.0
    %335 = vmatpush1.msra.mxu0 0.0
    %336 = vmatprep.subr.mxu0 0.0
    %337 = vmatpush1.msra.mxu0 0.0
    %338 = vmatprep.subr.mxu0 0.0
    %339 = vmatpush1.msra.mxu0 0.0
    %340 = vmatprep.subr.mxu0 0.0
    %341 = vmatpush1.msra.mxu0 0.0
    %342 = vmatprep.mubr.f32.mxu0 0.0
    %343 = vmatmul.mubr.f32.gmra.mrb[0].mxu0 %v142
    %v344 = vpop.f32.mrb[0].mxu0
    %v345 = vadd.f32 %v131, %v344
    %v346 = vpop.f32.mrb[0].mxu0
    %v347 = vadd.f32 %v135, %v346
    %348 = vmatprep.mubr.f32.mxu0 0.0
    %349 = vmatmul.mubr.f32.gmra.mrb[0].mxu0 %v145
    %v350 = vpop.f32.mrb[0].mxu0
    %v351 = vadd.f32 %v131, %v350
    %v352 = vpop.f32.mrb[0].mxu0
    %v353 = vadd.f32 %v135, %v352
    %354 = vmatprep.mubr.f32.mxu0 0.0
    %355 = vmatmul.mubr.f32.gmra.mrb[0].mxu0 %v148
    %v356 = vpop.f32.mrb[0].mxu0
    %v357 = vadd.f32 %v131, %v356
    %v358 = vpop.f32.mrb[0].mxu0
    %v359 = vadd.f32 %v135, %v358
    %360 = vmatprep.mubr.f32.mxu0 0.0
    %361 = vmatmul.mubr.f32.gmra.mrb[0].mxu0 %v151
    %v362 = vpop.f32.mrb[0].mxu0
    %v363 = vadd.f32 %v131, %v362
    %v364 = vpop.f32.mrb[0].mxu0
    %v365 = vadd.f32 %v135, %v364
    %366 = vmatprep.mubr.f32.mxu0 0.0
    %367 = vmatmul.mubr.f32.gmra.mrb[0].mxu0 %v154
    %v368 = vpop.f32.mrb[0].mxu0
    %v369 = vadd.f32 %v131, %v368
    %v370 = vpop.f32.mrb[0].mxu0
    %v371 = vadd.f32 %v135, %v370
    %372 = vmatprep.mubr.f32.mxu0 0.0
    %373 = vmatmul.mubr.f32.gmra.mrb[0].mxu0 %v157
    %v374 = vpop.f32.mrb[0].mxu0
    %v375 = vadd.f32 %v131, %v374
    %v376 = vpop.f32.mrb[0].mxu0
    %v377 = vadd.f32 %v135, %v376
    %378 = vmatprep.mubr.f32.mxu0 0.0
    %379 = vmatmul.mubr.f32.gmra.mrb[0].mxu0 %v160
    %v380 = vpop.f32.mrb[0].mxu0
    %v381 = vadd.f32 %v131, %v380
    %v382 = vpop.f32.mrb[0].mxu0
    %v383 = vadd.f32 %v135, %v382
    %384 = vmatprep.mubr.f32.mxu0 0.0
    %385 = vmatmul.mubr.f32.gmra.mrb[0].mxu0 %v163
    %v386 = vpop.f32.mrb[0].mxu0
    %v387 = vadd.f32 %v131, %v386
    %v388 = vpop.f32.mrb[0].mxu0
    %v389 = vadd.f32 %v135, %v388
    %390 = vdwg.mxu0
    %391 = vst [vmem:[#allocation2] sm:$0xff] %v232
    %392 = vst [vmem:[#allocation2 + $0x8] sm:$0xff] %v234
    %393 = vst [vmem:[#allocation2 + $0x10] sm:$0xff] %v345
    %394 = vst [vmem:[#allocation2 + $0x18] sm:$0xff] %v347
    %395 = vst [vmem:[#allocation2 + $0x20] sm:$0xff] %v238
    %396 = vst [vmem:[#allocation2 + $0x28] sm:$0xff] %v240
    %397 = vst [vmem:[#allocation2 + $0x30] sm:$0xff] %v351
    %398 = vst [vmem:[#allocation2 + $0x38] sm:$0xff] %v353
    %399 = vst [vmem:[#allocation2 + $0x40] sm:$0xff] %v244
    %400 = vst [vmem:[#allocation2 + $0x48] sm:$0xff] %v246
    %401 = vst [vmem:[#allocation2 + $0x50] sm:$0xff] %v357
    %402 = vst [vmem:[#allocation2 + $0x58] sm:$0xff] %v359
    %403 = vst [vmem:[#allocation2 + $0x60] sm:$0xff] %v250
    %404 = vst [vmem:[#allocation2 + $0x68] sm:$0xff] %v252
    %405 = vst [vmem:[#allocation2 + $0x70] sm:$0xff] %v363
    %406 = vst [vmem:[#allocation2 + $0x78] sm:$0xff] %v365
    %407 = vst [vmem:[#allocation2 + $0x80] sm:$0xff] %v256
    %408 = vst [vmem:[#allocation2 + $0x88] sm:$0xff] %v258
    %409 = vst [vmem:[#allocation2 + $0x90] sm:$0xff] %v369
    %410 = vst [vmem:[#allocation2 + $0x98] sm:$0xff] %v371
    %411 = vst [vmem:[#allocation2 + $0xa0] sm:$0xff] %v262
    %412 = vst [vmem:[#allocation2 + $0xa8] sm:$0xff] %v264
    %413 = vst [vmem:[#allocation2 + $0xb0] sm:$0xff] %v375
    %414 = vst [vmem:[#allocation2 + $0xb8] sm:$0xff] %v377
    %415 = vst [vmem:[#allocation2 + $0xc0] sm:$0xff] %v268
    %416 = vst [vmem:[#allocation2 + $0xc8] sm:$0xff] %v270
    %417 = vst [vmem:[#allocation2 + $0xd0] sm:$0xff] %v381
    %418 = vst [vmem:[#allocation2 + $0xd8] sm:$0xff] %v383
    %419 = vst [vmem:[#allocation2 + $0xe0] sm:$0xff] %v274
    %420 = vst [vmem:[#allocation2 + $0xe8] sm:$0xff] %v276
    %421 = vst [vmem:[#allocation2 + $0xf0] sm:$0xff] %v387
    %422 = vst [vmem:[#allocation2 + $0xf8] sm:$0xff] %v389
    %v423 = vld [vmem:[#allocation3] sm:$0xff]
    %v424 = vld [vmem:[#allocation4] sm:$0xff]
    %s425 = smul.u32 0, 4
    %s426 = smul.addr %s425, 8
    %s427 = scalar_lea.vmem [#allocation2], %s426
    %v428 = vld [vmem:[%s427] sm:$0xff]
    %v429 = vld [vmem:[%s427 + $0x8] sm:$0xff]
    %v430 = vld [vmem:[%s427 + $0x10] sm:$0xff]
    %v431 = vld [vmem:[%s427 + $0x18] sm:$0xff]
    %432 = vmatprep.subr.mxu0 %v47
    %433 = vmatpush1.msra.mxu0 %v46
    %434 = vmatprep.subr.mxu0 %v51
    %435 = vmatpush1.msra.mxu0 %v50
    %436 = vmatprep.subr.mxu0 %v55
    %437 = vmatpush1.msra.mxu0 %v54
    %438 = vmatprep.subr.mxu0 %v59
    %439 = vmatpush1.msra.mxu0 %v58
    %440 = vmatprep.subr.mxu0 %v63
    %441 = vmatpush1.msra.mxu0 %v62
    %442 = vmatprep.subr.mxu0 %v67
    %443 = vmatpush1.msra.mxu0 %v66
    %444 = vmatprep.subr.mxu0 %v71
    %445 = vmatpush1.msra.mxu0 %v70
    %446 = vmatprep.subr.mxu0 %v75
    %447 = vmatpush1.msra.mxu0 %v74
    %448 = vmatprep.subr.mxu0 %v79
    %449 = vmatpush1.msra.mxu0 %v78
    %450 = vmatprep.subr.mxu0 %v83
    %451 = vmatpush1.msra.mxu0 %v82
    %452 = vmatprep.subr.mxu0 %v87
    %453 = vmatpush1.msra.mxu0 %v86
    %454 = vmatprep.subr.mxu0 %v91
    %455 = vmatpush1.msra.mxu0 %v90
    %456 = vmatprep.subr.mxu0 %v95
    %457 = vmatpush1.msra.mxu0 %v94
    %458 = vmatprep.subr.mxu0 %v99
    %459 = vmatpush1.msra.mxu0 %v98
    %460 = vmatprep.subr.mxu0 %v103
    %461 = vmatpush1.msra.mxu0 %v102
    %462 = vmatprep.subr.mxu0 %v107
    %463 = vmatpush1.msra.mxu0 %v106
    %464 = vmatprep.subr.mxu0 0.0
    %465 = vmatpush1.msra.mxu0 0.0
    %466 = vmatprep.subr.mxu0 0.0
    %467 = vmatpush1.msra.mxu0 0.0
    %468 = vmatprep.subr.mxu0 0.0
    %469 = vmatpush1.msra.mxu0 0.0
    %470 = vmatprep.subr.mxu0 0.0
    %471 = vmatpush1.msra.mxu0 0.0
    %472 = vmatprep.subr.mxu0 0.0
    %473 = vmatpush1.msra.mxu0 0.0
    %474 = vmatprep.subr.mxu0 0.0
    %475 = vmatpush1.msra.mxu0 0.0
    %476 = vmatprep.subr.mxu0 0.0
    %477 = vmatpush1.msra.mxu0 0.0
    %478 = vmatprep.subr.mxu0 0.0
    %479 = vmatpush1.msra.mxu0 0.0
    %480 = vmatprep.subr.mxu0 0.0
    %481 = vmatpush1.msra.mxu0 0.0
    %482 = vmatprep.subr.mxu0 0.0
    %483 = vmatpush1.msra.mxu0 0.0
    %484 = vmatprep.subr.mxu0 0.0
    %485 = vmatpush1.msra.mxu0 0.0
    %486 = vmatprep.subr.mxu0 0.0
    %487 = vmatpush1.msra.mxu0 0.0
    %488 = vmatprep.subr.mxu0 0.0
    %489 = vmatpush1.msra.mxu0 0.0
    %490 = vmatprep.subr.mxu0 0.0
    %491 = vmatpush1.msra.mxu0 0.0
    %492 = vmatprep.subr.mxu0 0.0
    %493 = vmatpush1.msra.mxu0 0.0
    %494 = vmatprep.subr.mxu0 0.0
    %495 = vmatpush1.msra.mxu0 0.0
    %496 = vmatprep.mubr.f32.mxu0 0.0
    %497 = vmatmul.mubr.f32.gmra.mrb[0].mxu0 %v423
    %v498 = vpop.f32.mrb[0].mxu0
    %v499 = vadd.f32 0.0, %v498
    %v500 = vpop.f32.mrb[0].mxu0
    %v501 = vadd.f32 0.0, %v500
    %502 = vdwg.mxu0
    %503 = vmatprep.subr.mxu0 %v49
    %504 = vmatpush1.msra.mxu0 %v48
    %505 = vmatprep.subr.mxu0 %v53
    %506 = vmatpush1.msra.mxu0 %v52
    %507 = vmatprep.subr.mxu0 %v57
    %508 = vmatpush1.msra.mxu0 %v56
    %509 = vmatprep.subr.mxu0 %v61
    %510 = vmatpush1.msra.mxu0 %v60
    %511 = vmatprep.subr.mxu0 %v65
    %512 = vmatpush1.msra.mxu0 %v64
    %513 = vmatprep.subr.mxu0 %v69
    %514 = vmatpush1.msra.mxu0 %v68
    %515 = vmatprep.subr.mxu0 %v73
    %516 = vmatpush1.msra.mxu0 %v72
    %517 = vmatprep.subr.mxu0 %v77
    %518 = vmatpush1.msra.mxu0 %v76
    %519 = vmatprep.subr.mxu0 %v81
    %520 = vmatpush1.msra.mxu0 %v80
    %521 = vmatprep.subr.mxu0 %v85
    %522 = vmatpush1.msra.mxu0 %v84
    %523 = vmatprep.subr.mxu0 %v89
    %524 = vmatpush1.msra.mxu0 %v88
    %525 = vmatprep.subr.mxu0 %v93
    %526 = vmatpush1.msra.mxu0 %v92
    %527 = vmatprep.subr.mxu0 %v97
    %528 = vmatpush1.msra.mxu0 %v96
    %529 = vmatprep.subr.mxu0 %v101
    %530 = vmatpush1.msra.mxu0 %v100
    %531 = vmatprep.subr.mxu0 %v105
    %532 = vmatpush1.msra.mxu0 %v104
    %533 = vmatprep.subr.mxu0 %v109
    %534 = vmatpush1.msra.mxu0 %v108
    %535 = vmatprep.subr.mxu0 0.0
    %536 = vmatpush1.msra.mxu0 0.0
    %537 = vmatprep.subr.mxu0 0.0
    %538 = vmatpush1.msra.mxu0 0.0
    %539 = vmatprep.subr.mxu0 0.0
    %540 = vmatpush1.msra.mxu0 0.0
    %541 = vmatprep.subr.mxu0 0.0
    %542 = vmatpush1.msra.mxu0 0.0
    %543 = vmatprep.subr.mxu0 0.0
    %544 = vmatpush1.msra.mxu0 0.0
    %545 = vmatprep.subr.mxu0 0.0
    %546 = vmatpush1.msra.mxu0 0.0
    %547 = vmatprep.subr.mxu0 0.0
    %548 = vmatpush1.msra.mxu0 0.0
    %549 = vmatprep.subr.mxu0 0.0
    %550 = vmatpush1.msra.mxu0 0.0
    %551 = vmatprep.subr.mxu0 0.0
    %552 = vmatpush1.msra.mxu0 0.0
    %553 = vmatprep.subr.mxu0 0.0
    %554 = vmatpush1.msra.mxu0 0.0
    %555 = vmatprep.subr.mxu0 0.0
    %556 = vmatpush1.msra.mxu0 0.0
    %557 = vmatprep.subr.mxu0 0.0
    %558 = vmatpush1.msra.mxu0 0.0
    %559 = vmatprep.subr.mxu0 0.0
    %560 = vmatpush1.msra.mxu0 0.0
    %561 = vmatprep.subr.mxu0 0.0
    %562 = vmatpush1.msra.mxu0 0.0
    %563 = vmatprep.subr.mxu0 0.0
    %564 = vmatpush1.msra.mxu0 0.0
    %565 = vmatprep.subr.mxu0 0.0
    %566 = vmatpush1.msra.mxu0 0.0
    %567 = vmatprep.mubr.f32.mxu0 0.0
    %568 = vmatmul.mubr.f32.gmra.mrb[0].mxu0 %v423
    %v569 = vpop.f32.mrb[0].mxu0
    %v570 = vadd.f32 0.0, %v569
    %v571 = vpop.f32.mrb[0].mxu0
    %v572 = vadd.f32 0.0, %v571
    %573 = vdwg.mxu0
    %v574 = vadd.f32 %v428, %v499
    %v575 = vadd.f32 %v429, %v501
    %v576 = vadd.f32 %v430, %v570
    %v577 = vadd.f32 %v431, %v572
    %v578 = vmul.f32 %v574, 0.5
    %v579 = vtanh.pop %v578
    %v580 = vmul.f32 %v579, 0.5
    %v581 = vadd.f32 %v580, 0.5
    %v582 = vmul.f32 %v575, 0.5
    %v583 = vtanh.pop %v582
    %v584 = vmul.f32 %v583, 0.5
    %v585 = vadd.f32 %v584, 0.5
    %v586 = vtanh.pop %v576
    %v587 = vmul.f32 %v577, 0.5
    %v588 = vtanh.pop %v587
    %v589 = vmul.f32 %v588, 0.5
    %v590 = vadd.f32 %v589, 0.5
    %v591 = vmul.f32 %v585, %v424
    %v592 = vmul.f32 %v581, %v586
    %v593 = vadd.f32 %v591, %v592
    %v594 = vtanh.pop %v593
    %v595 = vmul.f32 %v590, %v594
    %s596 = smul.u32 1, 4
    %s597 = smul.addr %s596, 8
    %s598 = scalar_lea.vmem [#allocation2], %s597
    %v599 = vld [vmem:[%s598] sm:$0xff]
    %v600 = vld [vmem:[%s598 + $0x8] sm:$0xff]
    %v601 = vld [vmem:[%s598 + $0x10] sm:$0xff]
    %v602 = vld [vmem:[%s598 + $0x18] sm:$0xff]
    %603 = vmatprep.subr.mxu0 %v47
    %604 = vmatpush1.msra.mxu0 %v46
    %605 = vmatprep.subr.mxu0 %v51
    %606 = vmatpush1.msra.mxu0 %v50
    %607 = vmatprep.subr.mxu0 %v55
    %608 = vmatpush1.msra.mxu0 %v54
    %609 = vmatprep.subr.mxu0 %v59
    %610 = vmatpush1.msra.mxu0 %v58
    %611 = vmatprep.subr.mxu0 %v63
    %612 = vmatpush1.msra.mxu0 %v62
    %613 = vmatprep.subr.mxu0 %v67
    %614 = vmatpush1.msra.mxu0 %v66
    %615 = vmatprep.subr.mxu0 %v71
    %616 = vmatpush1.msra.mxu0 %v70
    %617 = vmatprep.subr.mxu0 %v75
    %618 = vmatpush1.msra.mxu0 %v74
    %619 = vmatprep.subr.mxu0 %v79
    %620 = vmatpush1.msra.mxu0 %v78
    %621 = vmatprep.subr.mxu0 %v83
    %622 = vmatpush1.msra.mxu0 %v82
    %623 = vmatprep.subr.mxu0 %v87
    %624 = vmatpush1.msra.mxu0 %v86
    %625 = vmatprep.subr.mxu0 %v91
    %626 = vmatpush1.msra.mxu0 %v90
    %627 = vmatprep.subr.mxu0 %v95
    %628 = vmatpush1.msra.mxu0 %v94
    %629 = vmatprep.subr.mxu0 %v99
    %630 = vmatpush1.msra.mxu0 %v98
    %631 = vmatprep.subr.mxu0 %v103
    %632 = vmatpush1.msra.mxu0 %v102
    %633 = vmatprep.subr.mxu0 %v107
    %634 = vmatpush1.msra.mxu0 %v106
    %635 = vmatprep.subr.mxu0 0.0
    %636 = vmatpush1.msra.mxu0 0.0
    %637 = vmatprep.subr.mxu0 0.0
    %638 = vmatpush1.msra.mxu0 0.0
    %639 = vmatprep.subr.mxu0 0.0
    %640 = vmatpush1.msra.mxu0 0.0
    %641 = vmatprep.subr.mxu0 0.0
    %642 = vmatpush1.msra.mxu0 0.0
    %643 = vmatprep.subr.mxu0 0.0
    %644 = vmatpush1.msra.mxu0 0.0
    %645 = vmatprep.subr.mxu0 0.0
    %646 = vmatpush1.msra.mxu0 0.0
    %647 = vmatprep.subr.mxu0 0.0
    %648 = vmatpush1.msra.mxu0 0.0
    %649 = vmatprep.subr.mxu0 0.0
    %650 = vmatpush1.msra.mxu0 0.0
    %651 = vmatprep.subr.mxu0 0.0
    %652 = vmatpush1.msra.mxu0 0.0
    %653 = vmatprep.subr.mxu0 0.0
    %654 = vmatpush1.msra.mxu0 0.0
    %655 = vmatprep.subr.mxu0 0.0
    %656 = vmatpush1.msra.mxu0 0.0
    %657 = vmatprep.subr.mxu0 0.0
    %658 = vmatpush1.msra.mxu0 0.0
    %659 = vmatprep.subr.mxu0 0.0
    %660 = vmatpush1.msra.mxu0 0.0
    %661 = vmatprep.subr.mxu0 0.0
    %662 = vmatpush1.msra.mxu0 0.0
    %663 = vmatprep.subr.mxu0 0.0
    %664 = vmatpush1.msra.mxu0 0.0
    %665 = vmatprep.subr.mxu0 0.0
    %666 = vmatpush1.msra.mxu0 0.0
    %667 = vmatprep.mubr.f32.mxu0 0.0
    %668 = vmatmul.mubr.f32.gmra.mrb[0].mxu0 %v595
    %v669 = vpop.f32.mrb[0].mxu0
    %v670 = vadd.f32 0.0, %v669
    %v671 = vpop.f32.mrb[0].mxu0
    %v672 = vadd.f32 0.0, %v671
    %673 = vdwg.mxu0
    %674 = vmatprep.subr.mxu0 %v49
    %675 = vmatpush1.msra.mxu0 %v48
    %676 = vmatprep.subr.mxu0 %v53
    %677 = vmatpush1.msra.mxu0 %v52
    %678 = vmatprep.subr.mxu0 %v57
    %679 = vmatpush1.msra.mxu0 %v56
    %680 = vmatprep.subr.mxu0 %v61
    %681 = vmatpush1.msra.mxu0 %v60
    %682 = vmatprep.subr.mxu0 %v65
    %683 = vmatpush1.msra.mxu0 %v64
    %684 = vmatprep.subr.mxu0 %v69
    %685 = vmatpush1.msra.mxu0 %v68
    %686 = vmatprep.subr.mxu0 %v73
    %687 = vmatpush1.msra.mxu0 %v72
    %688 = vmatprep.subr.mxu0 %v77
    %689 = vmatpush1.msra.mxu0 %v76
    %690 = vmatprep.subr.mxu0 %v81
    %691 = vmatpush1.msra.mxu0 %v80
    %692 = vmatprep.subr.mxu0 %v85
    %693 = vmatpush1.msra.mxu0 %v84
    %694 = vmatprep.subr.mxu0 %v89
    %695 = vmatpush1.msra.mxu0 %v88
    %696 = vmatprep.subr.mxu0 %v93
    %697 = vmatpush1.msra.mxu0 %v92
    %698 = vmatprep.subr.mxu0 %v97
    %699 = vmatpush1.msra.mxu0 %v96
    %700 = vmatprep.subr.mxu0 %v101
    %701 = vmatpush1.msra.mxu0 %v100
    %702 = vmatprep.subr.mxu0 %v105
    %703 = vmatpush1.msra.mxu0 %v104
    %704 = vmatprep.subr.mxu0 %v109
    %705 = vmatpush1.msra.mxu0 %v108
    %706 = vmatprep.subr.mxu0 0.0
    %707 = vmatpush1.msra.mxu0 0.0
    %708 = vmatprep.subr.mxu0 0.0
    %709 = vmatpush1.msra.mxu0 0.0
    %710 = vmatprep.subr.mxu0 0.0
    %711 = vmatpush1.msra.mxu0 0.0
    %712 = vmatprep.subr.mxu0 0.0
    %713 = vmatpush1.msra.mxu0 0.0
    %714 = vmatprep.subr.mxu0 0.0
    %715 = vmatpush1.msra.mxu0 0.0
    %716 = vmatprep.subr.mxu0 0.0
    %717 = vmatpush1.msra.mxu0 0.0
    %718 = vmatprep.subr.mxu0 0.0
    %719 = vmatpush1.msra.mxu0 0.0
    %720 = vmatprep.subr.mxu0 0.0
    %721 = vmatpush1.msra.mxu0 0.0
    %722 = vmatprep.subr.mxu0 0.0
    %723 = vmatpush1.msra.mxu0 0.0
    %724 = vmatprep.subr.mxu0 0.0
    %725 = vmatpush1.msra.mxu0 0.0
    %726 = vmatprep.subr.mxu0 0.0
    %727 = vmatpush1.msra.mxu0 0.0
    %728 = vmatprep.subr.mxu0 0.0
    %729 = vmatpush1.msra.mxu0 0.0
    %730 = vmatprep.subr.mxu0 0.0
    %731 = vmatpush1.msra.mxu0 0.0
    %732 = vmatprep.subr.mxu0 0.0
    %733 = vmatpush1.msra.mxu0 0.0
    %734 = vmatprep.subr.mxu0 0.0
    %735 = vmatpush1.msra.mxu0 0.0
    %736 = vmatprep.subr.mxu0 0.0
    %737 = vmatpush1.msra.mxu0 0.0
    %738 = vmatprep.mubr.f32.mxu0 0.0
    %739 = vmatmul.mubr.f32.gmra.mrb[0].mxu0 %v595
    %v740 = vpop.f32.mrb[0].mxu0
    %v741 = vadd.f32 0.0, %v740
    %v742 = vpop.f32.mrb[0].mxu0
    %v743 = vadd.f32 0.0, %v742
    %744 = vdwg.mxu0
    %v745 = vadd.f32 %v599, %v670
    %v746 = vadd.f32 %v600, %v672
    %v747 = vadd.f32 %v601, %v741
    %v748 = vadd.f32 %v602, %v743
    %v749 = vmul.f32 %v745, 0.5
    %v750 = vtanh.pop %v749
    %v751 = vmul.f32 %v750, 0.5
    %v752 = vadd.f32 %v751, 0.5
    %v753 = vmul.f32 %v746, 0.5
    %v754 = vtanh.pop %v753
    %v755 = vmul.f32 %v754, 0.5
    %v756 = vadd.f32 %v755, 0.5
    %v757 = vtanh.pop %v747
    %v758 = vmul.f32 %v748, 0.5
    %v759 = vtanh.pop %v758
    %v760 = vmul.f32 %v759, 0.5
    %v761 = vadd.f32 %v760, 0.5
    %v762 = vmul.f32 %v756, %v593
    %v763 = vmul.f32 %v752, %v757
    %v764 = vadd.f32 %v762, %v763
    %v765 = vtanh.pop %v764
    %v766 = vmul.f32 %v761, %v765
    %s767 = smul.u32 2, 4
    %s768 = smul.addr %s767, 8
    %s769 = scalar_lea.vmem [#allocation2], %s768
    %v770 = vld [vmem:[%s769] sm:$0xff]
    %v771 = vld [vmem:[%s769 + $0x8] sm:$0xff]
    %v772 = vld [vmem:[%s769 + $0x10] sm:$0xff]
    %v773 = vld [vmem:[%s769 + $0x18] sm:$0xff]
    %774 = vmatprep.subr.mxu0 %v47
    %775 = vmatpush1.msra.mxu0 %v46
    %776 = vmatprep.subr.mxu0 %v51
    %777 = vmatpush1.msra.mxu0 %v50
    %778 = vmatprep.subr.mxu0 %v55
    %779 = vmatpush1.msra.mxu0 %v54
    %780 = vmatprep.subr.mxu0 %v59
    %781 = vmatpush1.msra.mxu0 %v58
    %782 = vmatprep.subr.mxu0 %v63
    %783 = vmatpush1.msra.mxu0 %v62
    %784 = vmatprep.subr.mxu0 %v67
    %785 = vmatpush1.msra.mxu0 %v66
    %786 = vmatprep.subr.mxu0 %v71
    %787 = vmatpush1.msra.mxu0 %v70
    %788 = vmatprep.subr.mxu0 %v75
    %789 = vmatpush1.msra.mxu0 %v74
    %790 = vmatprep.subr.mxu0 %v79
    %791 = vmatpush1.msra.mxu0 %v78
    %792 = vmatprep.subr.mxu0 %v83
    %793 = vmatpush1.msra.mxu0 %v82
    %794 = vmatprep.subr.mxu0 %v87
    %795 = vmatpush1.msra.mxu0 %v86
    %796 = vmatprep.subr.mxu0 %v91
    %797 = vmatpush1.msra.mxu0 %v90
    %798 = vmatprep.subr.mxu0 %v95
    %799 = vmatpush1.msra.mxu0 %v94
    %800 = vmatprep.subr.mxu0 %v99
    %801 = vmatpush1.msra.mxu0 %v98
    %802 = vmatprep.subr.mxu0 %v103
    %803 = vmatpush1.msra.mxu0 %v102
    %804 = vmatprep.subr.mxu0 %v107
    %805 = vmatpush1.msra.mxu0 %v106
    %806 = vmatprep.subr.mxu0 0.0
    %807 = vmatpush1.msra.mxu0 0.0
    %808 = vmatprep.subr.mxu0 0.0
    %809 = vmatpush1.msra.mxu0 0.0
    %810 = vmatprep.subr.mxu0 0.0
    %811 = vmatpush1.msra.mxu0 0.0
    %812 = vmatprep.subr.mxu0 0.0
    %813 = vmatpush1.msra.mxu0 0.0
    %814 = vmatprep.subr.mxu0 0.0
    %815 = vmatpush1.msra.mxu0 0.0
    %816 = vmatprep.subr.mxu0 0.0
    %817 = vmatpush1.msra.mxu0 0.0
    %818 = vmatprep.subr.mxu0 0.0
    %819 = vmatpush1.msra.mxu0 0.0
    %820 = vmatprep.subr.mxu0 0.0
    %821 = vmatpush1.msra.mxu0 0.0
    %822 = vmatprep.subr.mxu0 0.0
    %823 = vmatpush1.msra.mxu0 0.0
    %824 = vmatprep.subr.mxu0 0.0
    %825 = vmatpush1.msra.mxu0 0.0
    %826 = vmatprep.subr.mxu0 0.0
    %827 = vmatpush1.msra.mxu0 0.0
    %828 = vmatprep.subr.mxu0 0.0
    %829 = vmatpush1.msra.mxu0 0.0
    %830 = vmatprep.subr.mxu0 0.0
    %831 = vmatpush1.msra.mxu0 0.0
    %832 = vmatprep.subr.mxu0 0.0
    %833 = vmatpush1.msra.mxu0 0.0
    %834 = vmatprep.subr.mxu0 0.0
    %835 = vmatpush1.msra.mxu0 0.0
    %836 = vmatprep.subr.mxu0 0.0
    %837 = vmatpush1.msra.mxu0 0.0
    %838 = vmatprep.mubr.f32.mxu0 0.0
    %839 = vmatmul.mubr.f32.gmra.mrb[0].mxu0 %v766
    %v840 = vpop.f32.mrb[0].mxu0
    %v841 = vadd.f32 0.0, %v840
    %v842 = vpop.f32.mrb[0].mxu0
    %v843 = vadd.f32 0.0, %v842
    %844 = vdwg.mxu0
    %845 = vmatprep.subr.mxu0 %v49
    %846 = vmatpush1.msra.mxu0 %v48
    %847 = vmatprep.subr.mxu0 %v53
    %848 = vmatpush1.msra.mxu0 %v52
    %849 = vmatprep.subr.mxu0 %v57
    %850 = vmatpush1.msra.mxu0 %v56
    %851 = vmatprep.subr.mxu0 %v61
    %852 = vmatpush1.msra.mxu0 %v60
    %853 = vmatprep.subr.mxu0 %v65
    %854 = vmatpush1.msra.mxu0 %v64
    %855 = vmatprep.subr.mxu0 %v69
    %856 = vmatpush1.msra.mxu0 %v68
    %857 = vmatprep.subr.mxu0 %v73
    %858 = vmatpush1.msra.mxu0 %v72
    %859 = vmatprep.subr.mxu0 %v77
    %860 = vmatpush1.msra.mxu0 %v76
    %861 = vmatprep.subr.mxu0 %v81
    %862 = vmatpush1.msra.mxu0 %v80
    %863 = vmatprep.subr.mxu0 %v85
    %864 = vmatpush1.msra.mxu0 %v84
    %865 = vmatprep.subr.mxu0 %v89
    %866 = vmatpush1.msra.mxu0 %v88
    %867 = vmatprep.subr.mxu0 %v93
    %868 = vmatpush1.msra.mxu0 %v92
    %869 = vmatprep.subr.mxu0 %v97
    %870 = vmatpush1.msra.mxu0 %v96
    %871 = vmatprep.subr.mxu0 %v101
    %872 = vmatpush1.msra.mxu0 %v100
    %873 = vmatprep.subr.mxu0 %v105
    %874 = vmatpush1.msra.mxu0 %v104
    %875 = vmatprep.subr.mxu0 %v109
    %876 = vmatpush1.msra.mxu0 %v108
    %877 = vmatprep.subr.mxu0 0.0
    %878 = vmatpush1.msra.mxu0 0.0
    %879 = vmatprep.subr.mxu0 0.0
    %880 = vmatpush1.msra.mxu0 0.0
    %881 = vmatprep.subr.mxu0 0.0
    %882 = vmatpush1.msra.mxu0 0.0
    %883 = vmatprep.subr.mxu0 0.0
    %884 = vmatpush1.msra.mxu0 0.0
    %885 = vmatprep.subr.mxu0 0.0
    %886 = vmatpush1.msra.mxu0 0.0
    %887 = vmatprep.subr.mxu0 0.0
    %888 = vmatpush1.msra.mxu0 0.0
    %889 = vmatprep.subr.mxu0 0.0
    %890 = vmatpush1.msra.mxu0 0.0
    %891 = vmatprep.subr.mxu0 0.0
    %892 = vmatpush1.msra.mxu0 0.0
    %893 = vmatprep.subr.mxu0 0.0
    %894 = vmatpush1.msra.mxu0 0.0
    %895 = vmatprep.subr.mxu0 0.0
    %896 = vmatpush1.msra.mxu0 0.0
    %897 = vmatprep.subr.mxu0 0.0
    %898 = vmatpush1.msra.mxu0 0.0
    %899 = vmatprep.subr.mxu0 0.0
    %900 = vmatpush1.msra.mxu0 0.0
    %901 = vmatprep.subr.mxu0 0.0
    %902 = vmatpush1.msra.mxu0 0.0
    %903 = vmatprep.subr.mxu0 0.0
    %904 = vmatpush1.msra.mxu0 0.0
    %905 = vmatprep.subr.mxu0 0.0
    %906 = vmatpush1.msra.mxu0 0.0
    %907 = vmatprep.subr.mxu0 0.0
    %908 = vmatpush1.msra.mxu0 0.0
    %909 = vmatprep.mubr.f32.mxu0 0.0
    %910 = vmatmul.mubr.f32.gmra.mrb[0].mxu0 %v766
    %v911 = vpop.f32.mrb[0].mxu0
    %v912 = vadd.f32 0.0, %v911
    %v913 = vpop.f32.mrb[0].mxu0
    %v914 = vadd.f32 0.0, %v913
    %915 = vdwg.mxu0
    %v916 = vadd.f32 %v770, %v841
    %v917 = vadd.f32 %v771, %v843
    %v918 = vadd.f32 %v772, %v912
    %v919 = vadd.f32 %v773, %v914
    %v920 = vmul.f32 %v916, 0.5
    %v921 = vtanh.pop %v920
    %v922 = vmul.f32 %v921, 0.5
    %v923 = vadd.f32 %v922, 0.5
    %v924 = vmul.f32 %v917, 0.5
    %v925 = vtanh.pop %v924
    %v926 = vmul.f32 %v925, 0.5
    %v927 = vadd.f32 %v926, 0.5
    %v928 = vtanh.pop %v918
    %v929 = vmul.f32 %v919, 0.5
    %v930 = vtanh.pop %v929
    %v931 = vmul.f32 %v930, 0.5
    %v932 = vadd.f32 %v931, 0.5
    %v933 = vmul.f32 %v927, %v764
    %v934 = vmul.f32 %v923, %v928
    %v935 = vadd.f32 %v933, %v934
    %v936 = vtanh.pop %v935
    %v937 = vmul.f32 %v932, %v936
    %s938 = smul.u32 3, 4
    %s939 = smul.addr %s938, 8
    %s940 = scalar_lea.vmem [#allocation2], %s939
    %v941 = vld [vmem:[%s940] sm:$0xff]
    %v942 = vld [vmem:[%s940 + $0x8] sm:$0xff]
    %v943 = vld [vmem:[%s940 + $0x10] sm:$0xff]
    %v944 = vld [vmem:[%s940 + $0x18] sm:$0xff]
    %945 = vmatprep.subr.mxu0 %v47
    %946 = vmatpush1.msra.mxu0 %v46
    %947 = vmatprep.subr.mxu0 %v51
    %948 = vmatpush1.msra.mxu0 %v50
    %949 = vmatprep.subr.mxu0 %v55
    %950 = vmatpush1.msra.mxu0 %v54
    %951 = vmatprep.subr.mxu0 %v59
    %952 = vmatpush1.msra.mxu0 %v58
    %953 = vmatprep.subr.mxu0 %v63
    %954 = vmatpush1.msra.mxu0 %v62
    %955 = vmatprep.subr.mxu0 %v67
    %956 = vmatpush1.msra.mxu0 %v66
    %957 = vmatprep.subr.mxu0 %v71
    %958 = vmatpush1.msra.mxu0 %v70
    %959 = vmatprep.subr.mxu0 %v75
    %960 = vmatpush1.msra.mxu0 %v74
    %961 = vmatprep.subr.mxu0 %v79
    %962 = vmatpush1.msra.mxu0 %v78
    %963 = vmatprep.subr.mxu0 %v83
    %964 = vmatpush1.msra.mxu0 %v82
    %965 = vmatprep.subr.mxu0 %v87
    %966 = vmatpush1.msra.mxu0 %v86
    %967 = vmatprep.subr.mxu0 %v91
    %968 = vmatpush1.msra.mxu0 %v90
    %969 = vmatprep.subr.mxu0 %v95
    %970 = vmatpush1.msra.mxu0 %v94
    %971 = vmatprep.subr.mxu0 %v99
    %972 = vmatpush1.msra.mxu0 %v98
    %973 = vmatprep.subr.mxu0 %v103
    %974 = vmatpush1.msra.mxu0 %v102
    %975 = vmatprep.subr.mxu0 %v107
    %976 = vmatpush1.msra.mxu0 %v106
    %977 = vmatprep.subr.mxu0 0.0
    %978 = vmatpush1.msra.mxu0 0.0
    %979 = vmatprep.subr.mxu0 0.0
    %980 = vmatpush1.msra.mxu0 0.0
    %981 = vmatprep.subr.mxu0 0.0
    %982 = vmatpush1.msra.mxu0 0.0
    %983 = vmatprep.subr.mxu0 0.0
    %984 = vmatpush1.msra.mxu0 0.0
    %985 = vmatprep.subr.mxu0 0.0
    %986 = vmatpush1.msra.mxu0 0.0
    %987 = vmatprep.subr.mxu0 0.0
    %988 = vmatpush1.msra.mxu0 0.0
    %989 = vmatprep.subr.mxu0 0.0
    %990 = vmatpush1.msra.mxu0 0.0
    %991 = vmatprep.subr.mxu0 0.0
    %992 = vmatpush1.msra.mxu0 0.0
    %993 = vmatprep.subr.mxu0 0.0
    %994 = vmatpush1.msra.mxu0 0.0
    %995 = vmatprep.subr.mxu0 0.0
    %996 = vmatpush1.msra.mxu0 0.0
    %997 = vmatprep.subr.mxu0 0.0
    %998 = vmatpush1.msra.mxu0 0.0
    %999 = vmatprep.subr.mxu0 0.0
    %1000 = vmatpush1.msra.mxu0 0.0
    %1001 = vmatprep.subr.mxu0 0.0
    %1002 = vmatpush1.msra.mxu0 0.0
    %1003 = vmatprep.subr.mxu0 0.0
    %1004 = vmatpush1.msra.mxu0 0.0
    %1005 = vmatprep.subr.mxu0 0.0
    %1006 = vmatpush1.msra.mxu0 0.0
    %1007 = vmatprep.subr.mxu0 0.0
    %1008 = vmatpush1.msra.mxu0 0.0
    %1009 = vmatprep.mubr.f32.mxu0 0.0
    %1010 = vmatmul.mubr.f32.gmra.mrb[0].mxu0 %v937
    %v1011 = vpop.f32.mrb[0].mxu0
    %v1012 = vadd.f32 0.0, %v1011
    %v1013 = vpop.f32.mrb[0].mxu0
    %v1014 = vadd.f32 0.0, %v1013
    %1015 = vdwg.mxu0
    %1016 = vmatprep.subr.mxu0 %v49
    %1017 = vmatpush1.msra.mxu0 %v48
    %1018 = vmatprep.subr.mxu0 %v53
    %1019 = vmatpush1.msra.mxu0 %v52
    %1020 = vmatprep.subr.mxu0 %v57
    %1021 = vmatpush1.msra.mxu0 %v56
    %1022 = vmatprep.subr.mxu0 %v61
    %1023 = vmatpush1.msra.mxu0 %v60
    %1024 = vmatprep.subr.mxu0 %v65
    %1025 = vmatpush1.msra.mxu0 %v64
    %1026 = vmatprep.subr.mxu0 %v69
    %1027 = vmatpush1.msra.mxu0 %v68
    %1028 = vmatprep.subr.mxu0 %v73
    %1029 = vmatpush1.msra.mxu0 %v72
    %1030 = vmatprep.subr.mxu0 %v77
    %1031 = vmatpush1.msra.mxu0 %v76
    %1032 = vmatprep.subr.mxu0 %v81
    %1033 = vmatpush1.msra.mxu0 %v80
    %1034 = vmatprep.subr.mxu0 %v85
    %1035 = vmatpush1.msra.mxu0 %v84
    %1036 = vmatprep.subr.mxu0 %v89
    %1037 = vmatpush1.msra.mxu0 %v88
    %1038 = vmatprep.subr.mxu0 %v93
    %1039 = vmatpush1.msra.mxu0 %v92
    %1040 = vmatprep.subr.mxu0 %v97
    %1041 = vmatpush1.msra.mxu0 %v96
    %1042 = vmatprep.subr.mxu0 %v101
    %1043 = vmatpush1.msra.mxu0 %v100
    %1044 = vmatprep.subr.mxu0 %v105
    %1045 = vmatpush1.msra.mxu0 %v104
    %1046 = vmatprep.subr.mxu0 %v109
    %1047 = vmatpush1.msra.mxu0 %v108
    %1048 = vmatprep.subr.mxu0 0.0
    %1049 = vmatpush1.msra.mxu0 0.0
    %1050 = vmatprep.subr.mxu0 0.0
    %1051 = vmatpush1.msra.mxu0 0.0
    %1052 = vmatprep.subr.mxu0 0.0
    %1053 = vmatpush1.msra.mxu0 0.0
    %1054 = vmatprep.subr.mxu0 0.0
    %1055 = vmatpush1.msra.mxu0 0.0
    %1056 = vmatprep.subr.mxu0 0.0
    %1057 = vmatpush1.msra.mxu0 0.0
    %1058 = vmatprep.subr.mxu0 0.0
    %1059 = vmatpush1.msra.mxu0 0.0
    %1060 = vmatprep.subr.mxu0 0.0
    %1061 = vmatpush1.msra.mxu0 0.0
    %1062 = vmatprep.subr.mxu0 0.0
    %1063 = vmatpush1.msra.mxu0 0.0
    %1064 = vmatprep.subr.mxu0 0.0
    %1065 = vmatpush1.msra.mxu0 0.0
    %1066 = vmatprep.subr.mxu0 0.0
    %1067 = vmatpush1.msra.mxu0 0.0
    %1068 = vmatprep.subr.mxu0 0.0
    %1069 = vmatpush1.msra.mxu0 0.0
    %1070 = vmatprep.subr.mxu0 0.0
    %1071 = vmatpush1.msra.mxu0 0.0
    %1072 = vmatprep.subr.mxu0 0.0
    %1073 = vmatpush1.msra.mxu0 0.0
    %1074 = vmatprep.subr.mxu0 0.0
    %1075 = vmatpush1.msra.mxu0 0.0
    %1076 = vmatprep.subr.mxu0 0.0
    %1077 = vmatpush1.msra.mxu0 0.0
    %1078 = vmatprep.subr.mxu0 0.0
    %1079 = vmatpush1.msra.mxu0 0.0
    %1080 = vmatprep.mubr.f32.mxu0 0.0
    %1081 = vmatmul.mubr.f32.gmra.mrb[0].mxu0 %v937
    %v1082 = vpop.f32.mrb[0].mxu0
    %v1083 = vadd.f32 0.0, %v1082
    %v1084 = vpop.f32.mrb[0].mxu0
    %v1085 = vadd.f32 0.0, %v1084
    %1086 = vdwg.mxu0
    %v1087 = vadd.f32 %v941, %v1012
    %v1088 = vadd.f32 %v942, %v1014
    %v1089 = vadd.f32 %v943, %v1083
    %v1090 = vadd.f32 %v944, %v1085
    %v1091 = vmul.f32 %v1087, 0.5
    %v1092 = vtanh.pop %v1091
    %v1093 = vmul.f32 %v1092, 0.5
    %v1094 = vadd.f32 %v1093, 0.5
    %v1095 = vmul.f32 %v1088, 0.5
    %v1096 = vtanh.pop %v1095
    %v1097 = vmul.f32 %v1096, 0.5
    %v1098 = vadd.f32 %v1097, 0.5
    %v1099 = vtanh.pop %v1089
    %v1100 = vmul.f32 %v1090, 0.5
    %v1101 = vtanh.pop %v1100
    %v1102 = vmul.f32 %v1101, 0.5
    %v1103 = vadd.f32 %v1102, 0.5
    %v1104 = vmul.f32 %v1098, %v935
    %v1105 = vmul.f32 %v1094, %v1099
    %v1106 = vadd.f32 %v1104, %v1105
    %v1107 = vtanh.pop %v1106
    %v1108 = vmul.f32 %v1103, %v1107
    %s1109 = smul.u32 4, 4
    %s1110 = smul.addr %s1109, 8
    %s1111 = scalar_lea.vmem [#allocation2], %s1110
    %v1112 = vld [vmem:[%s1111] sm:$0xff]
    %v1113 = vld [vmem:[%s1111 + $0x8] sm:$0xff]
    %v1114 = vld [vmem:[%s1111 + $0x10] sm:$0xff]
    %v1115 = vld [vmem:[%s1111 + $0x18] sm:$0xff]
    %1116 = vmatprep.subr.mxu0 %v47
    %1117 = vmatpush1.msra.mxu0 %v46
    %1118 = vmatprep.subr.mxu0 %v51
    %1119 = vmatpush1.msra.mxu0 %v50
    %1120 = vmatprep.subr.mxu0 %v55
    %1121 = vmatpush1.msra.mxu0 %v54
    %1122 = vmatprep.subr.mxu0 %v59
    %1123 = vmatpush1.msra.mxu0 %v58
    %1124 = vmatprep.subr.mxu0 %v63
    %1125 = vmatpush1.msra.mxu0 %v62
    %1126 = vmatprep.subr.mxu0 %v67
    %1127 = vmatpush1.msra.mxu0 %v66
    %1128 = vmatprep.subr.mxu0 %v71
    %1129 = vmatpush1.msra.mxu0 %v70
    %1130 = vmatprep.subr.mxu0 %v75
    %1131 = vmatpush1.msra.mxu0 %v74
    %1132 = vmatprep.subr.mxu0 %v79
    %1133 = vmatpush1.msra.mxu0 %v78
    %1134 = vmatprep.subr.mxu0 %v83
    %1135 = vmatpush1.msra.mxu0 %v82
    %1136 = vmatprep.subr.mxu0 %v87
    %1137 = vmatpush1.msra.mxu0 %v86
    %1138 = vmatprep.subr.mxu0 %v91
    %1139 = vmatpush1.msra.mxu0 %v90
    %1140 = vmatprep.subr.mxu0 %v95
    %1141 = vmatpush1.msra.mxu0 %v94
    %1142 = vmatprep.subr.mxu0 %v99
    %1143 = vmatpush1.msra.mxu0 %v98
    %1144 = vmatprep.subr.mxu0 %v103
    %1145 = vmatpush1.msra.mxu0 %v102
    %1146 = vmatprep.subr.mxu0 %v107
    %1147 = vmatpush1.msra.mxu0 %v106
    %1148 = vmatprep.subr.mxu0 0.0
    %1149 = vmatpush1.msra.mxu0 0.0
    %1150 = vmatprep.subr.mxu0 0.0
    %1151 = vmatpush1.msra.mxu0 0.0
    %1152 = vmatprep.subr.mxu0 0.0
    %1153 = vmatpush1.msra.mxu0 0.0
    %1154 = vmatprep.subr.mxu0 0.0
    %1155 = vmatpush1.msra.mxu0 0.0
    %1156 = vmatprep.subr.mxu0 0.0
    %1157 = vmatpush1.msra.mxu0 0.0
    %1158 = vmatprep.subr.mxu0 0.0
    %1159 = vmatpush1.msra.mxu0 0.0
    %1160 = vmatprep.subr.mxu0 0.0
    %1161 = vmatpush1.msra.mxu0 0.0
    %1162 = vmatprep.subr.mxu0 0.0
    %1163 = vmatpush1.msra.mxu0 0.0
    %1164 = vmatprep.subr.mxu0 0.0
    %1165 = vmatpush1.msra.mxu0 0.0
    %1166 = vmatprep.subr.mxu0 0.0
    %1167 = vmatpush1.msra.mxu0 0.0
    %1168 = vmatprep.subr.mxu0 0.0
    %1169 = vmatpush1.msra.mxu0 0.0
    %1170 = vmatprep.subr.mxu0 0.0
    %1171 = vmatpush1.msra.mxu0 0.0
    %1172 = vmatprep.subr.mxu0 0.0
    %1173 = vmatpush1.msra.mxu0 0.0
    %1174 = vmatprep.subr.mxu0 0.0
    %1175 = vmatpush1.msra.mxu0 0.0
    %1176 = vmatprep.subr.mxu0 0.0
    %1177 = vmatpush1.msra.mxu0 0.0
    %1178 = vmatprep.subr.mxu0 0.0
    %1179 = vmatpush1.msra.mxu0 0.0
    %1180 = vmatprep.mubr.f32.mxu0 0.0
    %1181 = vmatmul.mubr.f32.gmra.mrb[0].mxu0 %v1108
    %v1182 = vpop.f32.mrb[0].mxu0
    %v1183 = vadd.f32 0.0, %v1182
    %v1184 = vpop.f32.mrb[0].mxu0
    %v1185 = vadd.f32 0.0, %v1184
    %1186 = vdwg.mxu0
    %1187 = vmatprep.subr.mxu0 %v49
    %1188 = vmatpush1.msra.mxu0 %v48
    %1189 = vmatprep.subr.mxu0 %v53
    %1190 = vmatpush1.msra.mxu0 %v52
    %1191 = vmatprep.subr.mxu0 %v57
    %1192 = vmatpush1.msra.mxu0 %v56
    %1193 = vmatprep.subr.mxu0 %v61
    %1194 = vmatpush1.msra.mxu0 %v60
    %1195 = vmatprep.subr.mxu0 %v65
    %1196 = vmatpush1.msra.mxu0 %v64
    %1197 = vmatprep.subr.mxu0 %v69
    %1198 = vmatpush1.msra.mxu0 %v68
    %1199 = vmatprep.subr.mxu0 %v73
    %1200 = vmatpush1.msra.mxu0 %v72
    %1201 = vmatprep.subr.mxu0 %v77
    %1202 = vmatpush1.msra.mxu0 %v76
    %1203 = vmatprep.subr.mxu0 %v81
    %1204 = vmatpush1.msra.mxu0 %v80
    %1205 = vmatprep.subr.mxu0 %v85
    %1206 = vmatpush1.msra.mxu0 %v84
    %1207 = vmatprep.subr.mxu0 %v89
    %1208 = vmatpush1.msra.mxu0 %v88
    %1209 = vmatprep.subr.mxu0 %v93
    %1210 = vmatpush1.msra.mxu0 %v92
    %1211 = vmatprep.subr.mxu0 %v97
    %1212 = vmatpush1.msra.mxu0 %v96
    %1213 = vmatprep.subr.mxu0 %v101
    %1214 = vmatpush1.msra.mxu0 %v100
    %1215 = vmatprep.subr.mxu0 %v105
    %1216 = vmatpush1.msra.mxu0 %v104
    %1217 = vmatprep.subr.mxu0 %v109
    %1218 = vmatpush1.msra.mxu0 %v108
    %1219 = vmatprep.subr.mxu0 0.0
    %1220 = vmatpush1.msra.mxu0 0.0
    %1221 = vmatprep.subr.mxu0 0.0
    %1222 = vmatpush1.msra.mxu0 0.0
    %1223 = vmatprep.subr.mxu0 0.0
    %1224 = vmatpush1.msra.mxu0 0.0
    %1225 = vmatprep.subr.mxu0 0.0
    %1226 = vmatpush1.msra.mxu0 0.0
    %1227 = vmatprep.subr.mxu0 0.0
    %1228 = vmatpush1.msra.mxu0 0.0
    %1229 = vmatprep.subr.mxu0 0.0
    %1230 = vmatpush1.msra.mxu0 0.0
    %1231 = vmatprep.subr.mxu0 0.0
    %1232 = vmatpush1.msra.mxu0 0.0
    %1233 = vmatprep.subr.mxu0 0.0
    %1234 = vmatpush1.msra.mxu0 0.0
    %1235 = vmatprep.subr.mxu0 0.0
    %1236 = vmatpush1.msra.mxu0 0.0
    %1237 = vmatprep.subr.mxu0 0.0
    %1238 = vmatpush1.msra.mxu0 0.0
    %1239 = vmatprep.subr.mxu0 0.0
    %1240 = vmatpush1.msra.mxu0 0.0
    %1241 = vmatprep.subr.mxu0 0.0
    %1242 = vmatpush1.msra.mxu0 0.0
    %1243 = vmatprep.subr.mxu0 0.0
    %1244 = vmatpush1.msra.mxu0 0.0
    %1245 = vmatprep.subr.mxu0 0.0
    %1246 = vmatpush1.msra.mxu0 0.0
    %1247 = vmatprep.subr.mxu0 0.0
    %1248 = vmatpush1.msra.mxu0 0.0
    %1249 = vmatprep.subr.mxu0 0.0
    %1250 = vmatpush1.msra.mxu0 0.0
    %1251 = vmatprep.mubr.f32.mxu0 0.0
    %1252 = vmatmul.mubr.f32.gmra.mrb[0].mxu0 %v1108
    %v1253 = vpop.f32.mrb[0].mxu0
    %v1254 = vadd.f32 0.0, %v1253
    %v1255 = vpop.f32.mrb[0].mxu0
    %v1256 = vadd.f32 0.0, %v1255
    %1257 = vdwg.mxu0
    %v1258 = vadd.f32 %v1112, %v1183
    %v1259 = vadd.f32 %v1113, %v1185
    %v1260 = vadd.f32 %v1114, %v1254
    %v1261 = vadd.f32 %v1115, %v1256
    %v1262 = vmul.f32 %v1258, 0.5
    %v1263 = vtanh.pop %v1262
    %v1264 = vmul.f32 %v1263, 0.5
    %v1265 = vadd.f32 %v1264, 0.5
    %v1266 = vmul.f32 %v1259, 0.5
    %v1267 = vtanh.pop %v1266
    %v1268 = vmul.f32 %v1267, 0.5
    %v1269 = vadd.f32 %v1268, 0.5
    %v1270 = vtanh.pop %v1260
    %v1271 = vmul.f32 %v1261, 0.5
    %v1272 = vtanh.pop %v1271
    %v1273 = vmul.f32 %v1272, 0.5
    %v1274 = vadd.f32 %v1273, 0.5
    %v1275 = vmul.f32 %v1269, %v1106
    %v1276 = vmul.f32 %v1265, %v1270
    %v1277 = vadd.f32 %v1275, %v1276
    %v1278 = vtanh.pop %v1277
    %v1279 = vmul.f32 %v1274, %v1278
    %s1280 = smul.u32 5, 4
    %s1281 = smul.addr %s1280, 8
    %s1282 = scalar_lea.vmem [#allocation2], %s1281
    %v1283 = vld [vmem:[%s1282] sm:$0xff]
    %v1284 = vld [vmem:[%s1282 + $0x8] sm:$0xff]
    %v1285 = vld [vmem:[%s1282 + $0x10] sm:$0xff]
    %v1286 = vld [vmem:[%s1282 + $0x18] sm:$0xff]
    %1287 = vmatprep.subr.mxu0 %v47
    %1288 = vmatpush1.msra.mxu0 %v46
    %1289 = vmatprep.subr.mxu0 %v51
    %1290 = vmatpush1.msra.mxu0 %v50
    %1291 = vmatprep.subr.mxu0 %v55
    %1292 = vmatpush1.msra.mxu0 %v54
    %1293 = vmatprep.subr.mxu0 %v59
    %1294 = vmatpush1.msra.mxu0 %v58
    %1295 = vmatprep.subr.mxu0 %v63
    %1296 = vmatpush1.msra.mxu0 %v62
    %1297 = vmatprep.subr.mxu0 %v67
    %1298 = vmatpush1.msra.mxu0 %v66
    %1299 = vmatprep.subr.mxu0 %v71
    %1300 = vmatpush1.msra.mxu0 %v70
    %1301 = vmatprep.subr.mxu0 %v75
    %1302 = vmatpush1.msra.mxu0 %v74
    %1303 = vmatprep.subr.mxu0 %v79
    %1304 = vmatpush1.msra.mxu0 %v78
    %1305 = vmatprep.subr.mxu0 %v83
    %1306 = vmatpush1.msra.mxu0 %v82
    %1307 = vmatprep.subr.mxu0 %v87
    %1308 = vmatpush1.msra.mxu0 %v86
    %1309 = vmatprep.subr.mxu0 %v91
    %1310 = vmatpush1.msra.mxu0 %v90
    %1311 = vmatprep.subr.mxu0 %v95
    %1312 = vmatpush1.msra.mxu0 %v94
    %1313 = vmatprep.subr.mxu0 %v99
    %1314 = vmatpush1.msra.mxu0 %v98
    %1315 = vmatprep.subr.mxu0 %v103
    %1316 = vmatpush1.msra.mxu0 %v102
    %1317 = vmatprep.subr.mxu0 %v107
    %1318 = vmatpush1.msra.mxu0 %v106
    %1319 = vmatprep.subr.mxu0 0.0
    %1320 = vmatpush1.msra.mxu0 0.0
    %1321 = vmatprep.subr.mxu0 0.0
    %1322 = vmatpush1.msra.mxu0 0.0
    %1323 = vmatprep.subr.mxu0 0.0
    %1324 = vmatpush1.msra.mxu0 0.0
    %1325 = vmatprep.subr.mxu0 0.0
    %1326 = vmatpush1.msra.mxu0 0.0
    %1327 = vmatprep.subr.mxu0 0.0
    %1328 = vmatpush1.msra.mxu0 0.0
    %1329 = vmatprep.subr.mxu0 0.0
    %1330 = vmatpush1.msra.mxu0 0.0
    %1331 = vmatprep.subr.mxu0 0.0
    %1332 = vmatpush1.msra.mxu0 0.0
    %1333 = vmatprep.subr.mxu0 0.0
    %1334 = vmatpush1.msra.mxu0 0.0
    %1335 = vmatprep.subr.mxu0 0.0
    %1336 = vmatpush1.msra.mxu0 0.0
    %1337 = vmatprep.subr.mxu0 0.0
    %1338 = vmatpush1.msra.mxu0 0.0
    %1339 = vmatprep.subr.mxu0 0.0
    %1340 = vmatpush1.msra.mxu0 0.0
    %1341 = vmatprep.subr.mxu0 0.0
    %1342 = vmatpush1.msra.mxu0 0.0
    %1343 = vmatprep.subr.mxu0 0.0
    %1344 = vmatpush1.msra.mxu0 0.0
    %1345 = vmatprep.subr.mxu0 0.0
    %1346 = vmatpush1.msra.mxu0 0.0
    %1347 = vmatprep.subr.mxu0 0.0
    %1348 = vmatpush1.msra.mxu0 0.0
    %1349 = vmatprep.subr.mxu0 0.0
    %1350 = vmatpush1.msra.mxu0 0.0
    %1351 = vmatprep.mubr.f32.mxu0 0.0
    %1352 = vmatmul.mubr.f32.gmra.mrb[0].mxu0 %v1279
    %v1353 = vpop.f32.mrb[0].mxu0
    %v1354 = vadd.f32 0.0, %v1353
    %v1355 = vpop.f32.mrb[0].mxu0
    %v1356 = vadd.f32 0.0, %v1355
    %1357 = vdwg.mxu0
    %1358 = vmatprep.subr.mxu0 %v49
    %1359 = vmatpush1.msra.mxu0 %v48
    %1360 = vmatprep.subr.mxu0 %v53
    %1361 = vmatpush1.msra.mxu0 %v52
    %1362 = vmatprep.subr.mxu0 %v57
    %1363 = vmatpush1.msra.mxu0 %v56
    %1364 = vmatprep.subr.mxu0 %v61
    %1365 = vmatpush1.msra.mxu0 %v60
    %1366 = vmatprep.subr.mxu0 %v65
    %1367 = vmatpush1.msra.mxu0 %v64
    %1368 = vmatprep.subr.mxu0 %v69
    %1369 = vmatpush1.msra.mxu0 %v68
    %1370 = vmatprep.subr.mxu0 %v73
    %1371 = vmatpush1.msra.mxu0 %v72
    %1372 = vmatprep.subr.mxu0 %v77
    %1373 = vmatpush1.msra.mxu0 %v76
    %1374 = vmatprep.subr.mxu0 %v81
    %1375 = vmatpush1.msra.mxu0 %v80
    %1376 = vmatprep.subr.mxu0 %v85
    %1377 = vmatpush1.msra.mxu0 %v84
    %1378 = vmatprep.subr.mxu0 %v89
    %1379 = vmatpush1.msra.mxu0 %v88
    %1380 = vmatprep.subr.mxu0 %v93
    %1381 = vmatpush1.msra.mxu0 %v92
    %1382 = vmatprep.subr.mxu0 %v97
    %1383 = vmatpush1.msra.mxu0 %v96
    %1384 = vmatprep.subr.mxu0 %v101
    %1385 = vmatpush1.msra.mxu0 %v100
    %1386 = vmatprep.subr.mxu0 %v105
    %1387 = vmatpush1.msra.mxu0 %v104
    %1388 = vmatprep.subr.mxu0 %v109
    %1389 = vmatpush1.msra.mxu0 %v108
    %1390 = vmatprep.subr.mxu0 0.0
    %1391 = vmatpush1.msra.mxu0 0.0
    %1392 = vmatprep.subr.mxu0 0.0
    %1393 = vmatpush1.msra.mxu0 0.0
    %1394 = vmatprep.subr.mxu0 0.0
    %1395 = vmatpush1.msra.mxu0 0.0
    %1396 = vmatprep.subr.mxu0 0.0
    %1397 = vmatpush1.msra.mxu0 0.0
    %1398 = vmatprep.subr.mxu0 0.0
    %1399 = vmatpush1.msra.mxu0 0.0
    %1400 = vmatprep.subr.mxu0 0.0
    %1401 = vmatpush1.msra.mxu0 0.0
    %1402 = vmatprep.subr.mxu0 0.0
    %1403 = vmatpush1.msra.mxu0 0.0
    %1404 = vmatprep.subr.mxu0 0.0
    %1405 = vmatpush1.msra.mxu0 0.0
    %1406 = vmatprep.subr.mxu0 0.0
    %1407 = vmatpush1.msra.mxu0 0.0
    %1408 = vmatprep.subr.mxu0 0.0
    %1409 = vmatpush1.msra.mxu0 0.0
    %1410 = vmatprep.subr.mxu0 0.0
    %1411 = vmatpush1.msra.mxu0 0.0
    %1412 = vmatprep.subr.mxu0 0.0
    %1413 = vmatpush1.msra.mxu0 0.0
    %1414 = vmatprep.subr.mxu0 0.0
    %1415 = vmatpush1.msra.mxu0 0.0
    %1416 = vmatprep.subr.mxu0 0.0
    %1417 = vmatpush1.msra.mxu0 0.0
    %1418 = vmatprep.subr.mxu0 0.0
    %1419 = vmatpush1.msra.mxu0 0.0
    %1420 = vmatprep.subr.mxu0 0.0
    %1421 = vmatpush1.msra.mxu0 0.0
    %1422 = vmatprep.mubr.f32.mxu0 0.0
    %1423 = vmatmul.mubr.f32.gmra.mrb[0].mxu0 %v1279
    %v1424 = vpop.f32.mrb[0].mxu0
    %v1425 = vadd.f32 0.0, %v1424
    %v1426 = vpop.f32.mrb[0].mxu0
    %v1427 = vadd.f32 0.0, %v1426
    %1428 = vdwg.mxu0
    %v1429 = vadd.f32 %v1283, %v1354
    %v1430 = vadd.f32 %v1284, %v1356
    %v1431 = vadd.f32 %v1285, %v1425
    %v1432 = vadd.f32 %v1286, %v1427
    %v1433 = vmul.f32 %v1429, 0.5
    %v1434 = vtanh.pop %v1433
    %v1435 = vmul.f32 %v1434, 0.5
    %v1436 = vadd.f32 %v1435, 0.5
    %v1437 = vmul.f32 %v1430, 0.5
    %v1438 = vtanh.pop %v1437
    %v1439 = vmul.f32 %v1438, 0.5
    %v1440 = vadd.f32 %v1439, 0.5
    %v1441 = vtanh.pop %v1431
    %v1442 = vmul.f32 %v1432, 0.5
    %v1443 = vtanh.pop %v1442
    %v1444 = vmul.f32 %v1443, 0.5
    %v1445 = vadd.f32 %v1444, 0.5
    %v1446 = vmul.f32 %v1440, %v1277
    %v1447 = vmul.f32 %v1436, %v1441
    %v1448 = vadd.f32 %v1446, %v1447
    %v1449 = vtanh.pop %v1448
    %v1450 = vmul.f32 %v1445, %v1449
    %s1451 = smul.u32 6, 4
    %s1452 = smul.addr %s1451, 8
    %s1453 = scalar_lea.vmem [#allocation2], %s1452
    %v1454 = vld [vmem:[%s1453] sm:$0xff]
    %v1455 = vld [vmem:[%s1453 + $0x8] sm:$0xff]
    %v1456 = vld [vmem:[%s1453 + $0x10] sm:$0xff]
    %v1457 = vld [vmem:[%s1453 + $0x18] sm:$0xff]
    %1458 = vmatprep.subr.mxu0 %v47
    %1459 = vmatpush1.msra.mxu0 %v46
    %1460 = vmatprep.subr.mxu0 %v51
    %1461 = vmatpush1.msra.mxu0 %v50
    %1462 = vmatprep.subr.mxu0 %v55
    %1463 = vmatpush1.msra.mxu0 %v54
    %1464 = vmatprep.subr.mxu0 %v59
    %1465 = vmatpush1.msra.mxu0 %v58
    %1466 = vmatprep.subr.mxu0 %v63
    %1467 = vmatpush1.msra.mxu0 %v62
    %1468 = vmatprep.subr.mxu0 %v67
    %1469 = vmatpush1.msra.mxu0 %v66
    %1470 = vmatprep.subr.mxu0 %v71
    %1471 = vmatpush1.msra.mxu0 %v70
    %1472 = vmatprep.subr.mxu0 %v75
    %1473 = vmatpush1.msra.mxu0 %v74
    %1474 = vmatprep.subr.mxu0 %v79
    %1475 = vmatpush1.msra.mxu0 %v78
    %1476 = vmatprep.subr.mxu0 %v83
    %1477 = vmatpush1.msra.mxu0 %v82
    %1478 = vmatprep.subr.mxu0 %v87
    %1479 = vmatpush1.msra.mxu0 %v86
    %1480 = vmatprep.subr.mxu0 %v91
    %1481 = vmatpush1.msra.mxu0 %v90
    %1482 = vmatprep.subr.mxu0 %v95
    %1483 = vmatpush1.msra.mxu0 %v94
    %1484 = vmatprep.subr.mxu0 %v99
    %1485 = vmatpush1.msra.mxu0 %v98
    %1486 = vmatprep.subr.mxu0 %v103
    %1487 = vmatpush1.msra.mxu0 %v102
    %1488 = vmatprep.subr.mxu0 %v107
    %1489 = vmatpush1.msra.mxu0 %v106
    %1490 = vmatprep.subr.mxu0 0.0
    %1491 = vmatpush1.msra.mxu0 0.0
    %1492 = vmatprep.subr.mxu0 0.0
    %1493 = vmatpush1.msra.mxu0 0.0
    %1494 = vmatprep.subr.mxu0 0.0
    %1495 = vmatpush1.msra.mxu0 0.0
    %1496 = vmatprep.subr.mxu0 0.0
    %1497 = vmatpush1.msra.mxu0 0.0
    %1498 = vmatprep.subr.mxu0 0.0
    %1499 = vmatpush1.msra.mxu0 0.0
    %1500 = vmatprep.subr.mxu0 0.0
    %1501 = vmatpush1.msra.mxu0 0.0
    %1502 = vmatprep.subr.mxu0 0.0
    %1503 = vmatpush1.msra.mxu0 0.0
    %1504 = vmatprep.subr.mxu0 0.0
    %1505 = vmatpush1.msra.mxu0 0.0
    %1506 = vmatprep.subr.mxu0 0.0
    %1507 = vmatpush1.msra.mxu0 0.0
    %1508 = vmatprep.subr.mxu0 0.0
    %1509 = vmatpush1.msra.mxu0 0.0
    %1510 = vmatprep.subr.mxu0 0.0
    %1511 = vmatpush1.msra.mxu0 0.0
    %1512 = vmatprep.subr.mxu0 0.0
    %1513 = vmatpush1.msra.mxu0 0.0
    %1514 = vmatprep.subr.mxu0 0.0
    %1515 = vmatpush1.msra.mxu0 0.0
    %1516 = vmatprep.subr.mxu0 0.0
    %1517 = vmatpush1.msra.mxu0 0.0
    %1518 = vmatprep.subr.mxu0 0.0
    %1519 = vmatpush1.msra.mxu0 0.0
    %1520 = vmatprep.subr.mxu0 0.0
    %1521 = vmatpush1.msra.mxu0 0.0
    %1522 = vmatprep.mubr.f32.mxu0 0.0
    %1523 = vmatmul.mubr.f32.gmra.mrb[0].mxu0 %v1450
    %v1524 = vpop.f32.mrb[0].mxu0
    %v1525 = vadd.f32 0.0, %v1524
    %v1526 = vpop.f32.mrb[0].mxu0
    %v1527 = vadd.f32 0.0, %v1526
    %1528 = vdwg.mxu0
    %1529 = vmatprep.subr.mxu0 %v49
    %1530 = vmatpush1.msra.mxu0 %v48
    %1531 = vmatprep.subr.mxu0 %v53
    %1532 = vmatpush1.msra.mxu0 %v52
    %1533 = vmatprep.subr.mxu0 %v57
    %1534 = vmatpush1.msra.mxu0 %v56
    %1535 = vmatprep.subr.mxu0 %v61
    %1536 = vmatpush1.msra.mxu0 %v60
    %1537 = vmatprep.subr.mxu0 %v65
    %1538 = vmatpush1.msra.mxu0 %v64
    %1539 = vmatprep.subr.mxu0 %v69
    %1540 = vmatpush1.msra.mxu0 %v68
    %1541 = vmatprep.subr.mxu0 %v73
    %1542 = vmatpush1.msra.mxu0 %v72
    %1543 = vmatprep.subr.mxu0 %v77
    %1544 = vmatpush1.msra.mxu0 %v76
    %1545 = vmatprep.subr.mxu0 %v81
    %1546 = vmatpush1.msra.mxu0 %v80
    %1547 = vmatprep.subr.mxu0 %v85
    %1548 = vmatpush1.msra.mxu0 %v84
    %1549 = vmatprep.subr.mxu0 %v89
    %1550 = vmatpush1.msra.mxu0 %v88
    %1551 = vmatprep.subr.mxu0 %v93
    %1552 = vmatpush1.msra.mxu0 %v92
    %1553 = vmatprep.subr.mxu0 %v97
    %1554 = vmatpush1.msra.mxu0 %v96
    %1555 = vmatprep.subr.mxu0 %v101
    %1556 = vmatpush1.msra.mxu0 %v100
    %1557 = vmatprep.subr.mxu0 %v105
    %1558 = vmatpush1.msra.mxu0 %v104
    %1559 = vmatprep.subr.mxu0 %v109
    %1560 = vmatpush1.msra.mxu0 %v108
    %1561 = vmatprep.subr.mxu0 0.0
    %1562 = vmatpush1.msra.mxu0 0.0
    %1563 = vmatprep.subr.mxu0 0.0
    %1564 = vmatpush1.msra.mxu0 0.0
    %1565 = vmatprep.subr.mxu0 0.0
    %1566 = vmatpush1.msra.mxu0 0.0
    %1567 = vmatprep.subr.mxu0 0.0
    %1568 = vmatpush1.msra.mxu0 0.0
    %1569 = vmatprep.subr.mxu0 0.0
    %1570 = vmatpush1.msra.mxu0 0.0
    %1571 = vmatprep.subr.mxu0 0.0
    %1572 = vmatpush1.msra.mxu0 0.0
    %1573 = vmatprep.subr.mxu0 0.0
    %1574 = vmatpush1.msra.mxu0 0.0
    %1575 = vmatprep.subr.mxu0 0.0
    %1576 = vmatpush1.msra.mxu0 0.0
    %1577 = vmatprep.subr.mxu0 0.0
    %1578 = vmatpush1.msra.mxu0 0.0
    %1579 = vmatprep.subr.mxu0 0.0
    %1580 = vmatpush1.msra.mxu0 0.0
    %1581 = vmatprep.subr.mxu0 0.0
    %1582 = vmatpush1.msra.mxu0 0.0
    %1583 = vmatprep.subr.mxu0 0.0
    %1584 = vmatpush1.msra.mxu0 0.0
    %1585 = vmatprep.subr.mxu0 0.0
    %1586 = vmatpush1.msra.mxu0 0.0
    %1587 = vmatprep.subr.mxu0 0.0
    %1588 = vmatpush1.msra.mxu0 0.0
    %1589 = vmatprep.subr.mxu0 0.0
    %1590 = vmatpush1.msra.mxu0 0.0
    %1591 = vmatprep.subr.mxu0 0.0
    %1592 = vmatpush1.msra.mxu0 0.0
    %1593 = vmatprep.mubr.f32.mxu0 0.0
    %1594 = vmatmul.mubr.f32.gmra.mrb[0].mxu0 %v1450
    %v1595 = vpop.f32.mrb[0].mxu0
    %v1596 = vadd.f32 0.0, %v1595
    %v1597 = vpop.f32.mrb[0].mxu0
    %v1598 = vadd.f32 0.0, %v1597
    %1599 = vdwg.mxu0
    %v1600 = vadd.f32 %v1454, %v1525
    %v1601 = vadd.f32 %v1455, %v1527
    %v1602 = vadd.f32 %v1456, %v1596
    %v1603 = vadd.f32 %v1457, %v1598
    %v1604 = vmul.f32 %v1600, 0.5
    %v1605 = vtanh.pop %v1604
    %v1606 = vmul.f32 %v1605, 0.5
    %v1607 = vadd.f32 %v1606, 0.5
    %v1608 = vmul.f32 %v1601, 0.5
    %v1609 = vtanh.pop %v1608
    %v1610 = vmul.f32 %v1609, 0.5
    %v1611 = vadd.f32 %v1610, 0.5
    %v1612 = vtanh.pop %v1602
    %v1613 = vmul.f32 %v1603, 0.5
    %v1614 = vtanh.pop %v1613
    %v1615 = vmul.f32 %v1614, 0.5
    %v1616 = vadd.f32 %v1615, 0.5
    %v1617 = vmul.f32 %v1611, %v1448
    %v1618 = vmul.f32 %v1607, %v1612
    %v1619 = vadd.f32 %v1617, %v1618
    %v1620 = vtanh.pop %v1619
    %v1621 = vmul.f32 %v1616, %v1620
    %s1622 = smul.u32 7, 4
    %s1623 = smul.addr %s1622, 8
    %s1624 = scalar_lea.vmem [#allocation2], %s1623
    %v1625 = vld [vmem:[%s1624] sm:$0xff]
    %v1626 = vld [vmem:[%s1624 + $0x8] sm:$0xff]
    %v1627 = vld [vmem:[%s1624 + $0x10] sm:$0xff]
    %v1628 = vld [vmem:[%s1624 + $0x18] sm:$0xff]
    %1629 = vmatprep.subr.mxu0 %v47
    %1630 = vmatpush1.msra.mxu0 %v46
    %1631 = vmatprep.subr.mxu0 %v51
    %1632 = vmatpush1.msra.mxu0 %v50
    %1633 = vmatprep.subr.mxu0 %v55
    %1634 = vmatpush1.msra.mxu0 %v54
    %1635 = vmatprep.subr.mxu0 %v59
    %1636 = vmatpush1.msra.mxu0 %v58
    %1637 = vmatprep.subr.mxu0 %v63
    %1638 = vmatpush1.msra.mxu0 %v62
    %1639 = vmatprep.subr.mxu0 %v67
    %1640 = vmatpush1.msra.mxu0 %v66
    %1641 = vmatprep.subr.mxu0 %v71
    %1642 = vmatpush1.msra.mxu0 %v70
    %1643 = vmatprep.subr.mxu0 %v75
    %1644 = vmatpush1.msra.mxu0 %v74
    %1645 = vmatprep.subr.mxu0 %v79
    %1646 = vmatpush1.msra.mxu0 %v78
    %1647 = vmatprep.subr.mxu0 %v83
    %1648 = vmatpush1.msra.mxu0 %v82
    %1649 = vmatprep.subr.mxu0 %v87
    %1650 = vmatpush1.msra.mxu0 %v86
    %1651 = vmatprep.subr.mxu0 %v91
    %1652 = vmatpush1.msra.mxu0 %v90
    %1653 = vmatprep.subr.mxu0 %v95
    %1654 = vmatpush1.msra.mxu0 %v94
    %1655 = vmatprep.subr.mxu0 %v99
    %1656 = vmatpush1.msra.mxu0 %v98
    %1657 = vmatprep.subr.mxu0 %v103
    %1658 = vmatpush1.msra.mxu0 %v102
    %1659 = vmatprep.subr.mxu0 %v107
    %1660 = vmatpush1.msra.mxu0 %v106
    %1661 = vmatprep.subr.mxu0 0.0
    %1662 = vmatpush1.msra.mxu0 0.0
    %1663 = vmatprep.subr.mxu0 0.0
    %1664 = vmatpush1.msra.mxu0 0.0
    %1665 = vmatprep.subr.mxu0 0.0
    %1666 = vmatpush1.msra.mxu0 0.0
    %1667 = vmatprep.subr.mxu0 0.0
    %1668 = vmatpush1.msra.mxu0 0.0
    %1669 = vmatprep.subr.mxu0 0.0
    %1670 = vmatpush1.msra.mxu0 0.0
    %1671 = vmatprep.subr.mxu0 0.0
    %1672 = vmatpush1.msra.mxu0 0.0
    %1673 = vmatprep.subr.mxu0 0.0
    %1674 = vmatpush1.msra.mxu0 0.0
    %1675 = vmatprep.subr.mxu0 0.0
    %1676 = vmatpush1.msra.mxu0 0.0
    %1677 = vmatprep.subr.mxu0 0.0
    %1678 = vmatpush1.msra.mxu0 0.0
    %1679 = vmatprep.subr.mxu0 0.0
    %1680 = vmatpush1.msra.mxu0 0.0
    %1681 = vmatprep.subr.mxu0 0.0
    %1682 = vmatpush1.msra.mxu0 0.0
    %1683 = vmatprep.subr.mxu0 0.0
    %1684 = vmatpush1.msra.mxu0 0.0
    %1685 = vmatprep.subr.mxu0 0.0
    %1686 = vmatpush1.msra.mxu0 0.0
    %1687 = vmatprep.subr.mxu0 0.0
    %1688 = vmatpush1.msra.mxu0 0.0
    %1689 = vmatprep.subr.mxu0 0.0
    %1690 = vmatpush1.msra.mxu0 0.0
    %1691 = vmatprep.subr.mxu0 0.0
    %1692 = vmatpush1.msra.mxu0 0.0
    %1693 = vmatprep.mubr.f32.mxu0 0.0
    %1694 = vmatmul.mubr.f32.gmra.mrb[0].mxu0 %v1621
    %v1695 = vpop.f32.mrb[0].mxu0
    %v1696 = vadd.f32 0.0, %v1695
    %v1697 = vpop.f32.mrb[0].mxu0
    %v1698 = vadd.f32 0.0, %v1697
    %1699 = vdwg.mxu0
    %1700 = vmatprep.subr.mxu0 %v49
    %1701 = vmatpush1.msra.mxu0 %v48
    %1702 = vmatprep.subr.mxu0 %v53
    %1703 = vmatpush1.msra.mxu0 %v52
    %1704 = vmatprep.subr.mxu0 %v57
    %1705 = vmatpush1.msra.mxu0 %v56
    %1706 = vmatprep.subr.mxu0 %v61
    %1707 = vmatpush1.msra.mxu0 %v60
    %1708 = vmatprep.subr.mxu0 %v65
    %1709 = vmatpush1.msra.mxu0 %v64
    %1710 = vmatprep.subr.mxu0 %v69
    %1711 = vmatpush1.msra.mxu0 %v68
    %1712 = vmatprep.subr.mxu0 %v73
    %1713 = vmatpush1.msra.mxu0 %v72
    %1714 = vmatprep.subr.mxu0 %v77
    %1715 = vmatpush1.msra.mxu0 %v76
    %1716 = vmatprep.subr.mxu0 %v81
    %1717 = vmatpush1.msra.mxu0 %v80
    %1718 = vmatprep.subr.mxu0 %v85
    %1719 = vmatpush1.msra.mxu0 %v84
    %1720 = vmatprep.subr.mxu0 %v89
    %1721 = vmatpush1.msra.mxu0 %v88
    %1722 = vmatprep.subr.mxu0 %v93
    %1723 = vmatpush1.msra.mxu0 %v92
    %1724 = vmatprep.subr.mxu0 %v97
    %1725 = vmatpush1.msra.mxu0 %v96
    %1726 = vmatprep.subr.mxu0 %v101
    %1727 = vmatpush1.msra.mxu0 %v100
    %1728 = vmatprep.subr.mxu0 %v105
    %1729 = vmatpush1.msra.mxu0 %v104
    %1730 = vmatprep.subr.mxu0 %v109
    %1731 = vmatpush1.msra.mxu0 %v108
    %1732 = vmatprep.subr.mxu0 0.0
    %1733 = vmatpush1.msra.mxu0 0.0
    %1734 = vmatprep.subr.mxu0 0.0
    %1735 = vmatpush1.msra.mxu0 0.0
    %1736 = vmatprep.subr.mxu0 0.0
    %1737 = vmatpush1.msra.mxu0 0.0
    %1738 = vmatprep.subr.mxu0 0.0
    %1739 = vmatpush1.msra.mxu0 0.0
    %1740 = vmatprep.subr.mxu0 0.0
    %1741 = vmatpush1.msra.mxu0 0.0
    %1742 = vmatprep.subr.mxu0 0.0
    %1743 = vmatpush1.msra.mxu0 0.0
    %1744 = vmatprep.subr.mxu0 0.0
    %1745 = vmatpush1.msra.mxu0 0.0
    %1746 = vmatprep.subr.mxu0 0.0
    %1747 = vmatpush1.msra.mxu0 0.0
    %1748 = vmatprep.subr.mxu0 0.0
    %1749 = vmatpush1.msra.mxu0 0.0
    %1750 = vmatprep.subr.mxu0 0.0
    %1751 = vmatpush1.msra.mxu0 0.0
    %1752 = vmatprep.subr.mxu0 0.0
    %1753 = vmatpush1.msra.mxu0 0.0
    %1754 = vmatprep.subr.mxu0 0.0
    %1755 = vmatpush1.msra.mxu0 0.0
    %1756 = vmatprep.subr.mxu0 0.0
    %1757 = vmatpush1.msra.mxu0 0.0
    %1758 = vmatprep.subr.mxu0 0.0
    %1759 = vmatpush1.msra.mxu0 0.0
    %1760 = vmatprep.subr.mxu0 0.0
    %1761 = vmatpush1.msra.mxu0 0.0
    %1762 = vmatprep.subr.mxu0 0.0
    %1763 = vmatpush1.msra.mxu0 0.0
    %1764 = vmatprep.mubr.f32.mxu0 0.0
    %1765 = vmatmul.mubr.f32.gmra.mrb[0].mxu0 %v1621
    %v1766 = vpop.f32.mrb[0].mxu0
    %v1767 = vadd.f32 0.0, %v1766
    %v1768 = vpop.f32.mrb[0].mxu0
    %v1769 = vadd.f32 0.0, %v1768
    %1770 = vdwg.mxu0
    %v1771 = vadd.f32 %v1625, %v1696
    %v1772 = vadd.f32 %v1626, %v1698
    %v1773 = vadd.f32 %v1627, %v1767
    %v1774 = vadd.f32 %v1628, %v1769
    %v1775 = vmul.f32 %v1771, 0.5
    %v1776 = vtanh.pop %v1775
    %v1777 = vmul.f32 %v1776, 0.5
    %v1778 = vadd.f32 %v1777, 0.5
    %v1779 = vmul.f32 %v1772, 0.5
    %v1780 = vtanh.pop %v1779
    %v1781 = vmul.f32 %v1780, 0.5
    %v1782 = vadd.f32 %v1781, 0.5
    %v1783 = vtanh.pop %v1773
    %v1784 = vmul.f32 %v1774, 0.5
    %v1785 = vtanh.pop %v1784
    %v1786 = vmul.f32 %v1785, 0.5
    %v1787 = vadd.f32 %v1786, 0.5
    %v1788 = vmul.f32 %v1782, %v1619
    %v1789 = vmul.f32 %v1778, %v1783
    %v1790 = vadd.f32 %v1788, %v1789
    %v1791 = vtanh.pop %v1790
    %v1792 = vmul.f32 %v1787, %v1791
    %1793 = vst [vmem:[#allocation3] sm:$0xff] %v1792
    %1794 = vst [vmem:[#allocation4] sm:$0xff] %v1790
    // Predicated region
    $region26: #{tpu_custom_call.1} parent=1 // pred_check
      %p1795 = pneg %p32
    $region27: #{tpu_custom_call.1} parent=1 // pred_check_branch
      %1797 = sbr.rel (%p1795) target = $region29
    $region28: #{tpu_custom_call.1} parent=1 // pred_region
      %1798 = vst [vmem:[#allocation8] sm:$0xff] %v1792
    $region29: #{tpu_custom_call.1} parent=1 // pred_fallthru
      _
    // Predicated region
    $region30: #{tpu_custom_call.1} parent=1 // pred_check
      _
    $region31: #{tpu_custom_call.1} parent=1 // pred_check_branch
      %1800 = sbr.rel (0) target = $region33
    $region32: #{tpu_custom_call.1} parent=1 // pred_region
      %s1802 = ssub.s32 128, 128
      %1803 = vsyncadd [#allocation7], %s1802
      %s1805 = sshll.u32 [#allocation8], 4
      %s1806 = int_to_ptr.vmem [resolvable:$true] %s1805
      %1808 = dma.vmem_to_hbm [thread:$0]  %s1806, 128, %s4, [#allocation7]
    $region33: #{tpu_custom_call.1} parent=1 // pred_fallthru
      _
    // Predicated region
    $region34: #{tpu_custom_call.1} parent=1 // pred_check
      _
    $region35: #{tpu_custom_call.1} parent=1 // pred_check_branch
      %1810 = sbr.rel (0) target = $region37
    $region36: #{tpu_custom_call.1} parent=1 // pred_region
      %1811 = dma.done [#allocation7], 128
    $region37: #{tpu_custom_call.1} parent=1 // pred_fallthru
      _
    %1812 = vsyncpa [#allocation6], 1
    %1813 = vsyncpa [#allocation7], 1

</llo_original>
